<compile_context>
chip_gen: v7x
topology: tpu7x:2x2x1
jax: 0.10.0
libtpu: 0.0.40
codegen_flags: <defaults>
</compile_context>

<pallas_src>
import functools

import jax
import jax.numpy as jnp
from jax.experimental import pallas as pl
from jax.experimental.pallas import tpu as pltpu


# ----------------------------------------------------------------------------
# helpers
# ----------------------------------------------------------------------------
def _round_up(x, m):
    return (x + m - 1) // m * m


def _vmem_capacity():
    """Per-core VMEM capacity in bytes (64 MiB conservative fallback == v7x)."""
    cap = 64 * 1024 * 1024
    try:
        info = pltpu.get_tpu_info()
        c = getattr(info, "vmem_capacity_bytes", None)
        if c:
            cap = int(c)
    except Exception:
        pass
    return cap


def _pad_gate_blocks(w, nh, nh_p):
    """Pad each of the 4 (i,f,g,o) gate blocks along the last axis nh -> nh_p."""
    if nh_p == nh:
        return w
    pads = [(0, 0)] * (w.ndim - 1) + [(0, nh_p - nh)]
    return jnp.concatenate(
        [jnp.pad(w[..., k * nh:(k + 1) * nh], pads) for k in range(4)], axis=-1)


def _sigmoid(x):
    # sigmoid(x) = 0.5 * (tanh(x / 2) + 1): one EUP op instead of exp + divide.
    return 0.5 * jnp.tanh(0.5 * x) + 0.5


# ----------------------------------------------------------------------------
# generic tiled matmul (vocab projection)
# ----------------------------------------------------------------------------
def _select_mm_tiles(M, K, N, a_it, b_it, o_it, cap):
    """Pick (tm, tn) whose double-buffered blocks fit ~55% of VMEM, preferring the
    pair that minimizes total HBM re-stream traffic (incl. padding waste)."""
    budget = int(0.55 * cap)
    tms = [c for c in (1024, 512, 256, 128, 64, 32, 16, 8) if c <= _round_up(M, 8)]
    tns = [c for c in (2048, 1024, 512, 256, 128) if c <= _round_up(N, 128)]
    best, best_traffic = None, None
    for tm in tms:
        for tn in tns:
            need = 2 * (tm * K * a_it + K * tn * b_it + tm * tn * o_it)
            if need > budget:
                continue
            mp, np_ = _round_up(M, tm), _round_up(N, tn)
            traffic = (np_ // tn) * mp * K * a_it + (mp // tm) * K * np_ * b_it
            if best is None or traffic < best_traffic:
                best, best_traffic = (tm, tn), traffic
    return best if best is not None else (tms[-1], tns[-1])


def _matmul_kernel(a_ref, b_ref, o_ref):
    o_ref[...] = jnp.dot(a_ref[...], b_ref[...],
                         preferred_element_type=jnp.float32).astype(o_ref.dtype)


def _matmul(a, b, out_dtype):
    """(M,K)@(K,N) with a 2-D parallel grid; pads M/N internally to the tile."""
    M, K = a.shape
    K2, N = b.shape
    assert K == K2
    cap = _vmem_capacity()
    o_it = jnp.dtype(out_dtype).itemsize
    tm, tn = _select_mm_tiles(M, K, N, a.dtype.itemsize, b.dtype.itemsize, o_it, cap)
    M_pad, N_pad = _round_up(M, tm), _round_up(N, tn)
    a_p = a if M_pad == M else jnp.pad(a, ((0, M_pad - M), (0, 0)))
    b_p = b if N_pad == N else jnp.pad(b, ((0, 0), (0, N_pad - N)))
    cost = pl.CostEstimate(
        flops=2 * M_pad * N_pad * K, transcendentals=0,
        bytes_accessed=(M_pad * K * a.dtype.itemsize + K * N_pad * b.dtype.itemsize
                        + M_pad * N_pad * o_it))
    out = pl.pallas_call(
        _matmul_kernel,
        out_shape=jax.ShapeDtypeStruct((M_pad, N_pad), out_dtype),
        grid=(M_pad // tm, N_pad // tn),
        in_specs=[pl.BlockSpec((tm, K), lambda i, j: (i, 0)),
                  pl.BlockSpec((K, tn), lambda i, j: (0, j))],
        out_specs=pl.BlockSpec((tm, tn), lambda i, j: (i, j)),
        compiler_params=pltpu.CompilerParams(
            dimension_semantics=("parallel", "parallel"),
            vmem_limit_bytes=int(0.85 * cap)),
        cost_estimate=cost,
    )(a_p, b_p)
    if M_pad != M or N_pad != N:
        out = out[:M, :N]
    return out


# ----------------------------------------------------------------------------
# fused (input-projection + LSTM recurrence) kernel
# grid = (batch tiles [parallel], time tiles [arbitrary])
# ----------------------------------------------------------------------------
def _select_lstm_tiles(T_pad, b_pad, ni_p, nh_p, nz_p, s_bytes, cap):
    """Largest (tile_b, tile_t) whose full footprint (resident weights, double-
    buffered streamed blocks, scratch) fits ~60% of VMEM; keep >= 2 batch tiles
    when possible so the v7x megacore split is balanced."""
    g4 = 4 * nh_p
    budget = int(0.6 * cap)
    tbs = [c for c in (256, 128, 64, 32, 16, 8) if c <= b_pad and b_pad % c == 0]
    tts = [c for c in (16, 8) if c <= T_pad and T_pad % c == 0] or [T_pad]
    fixed = (2 * (ni_p + nh_p) * g4 * s_bytes               # resident W_ih_e, W_hh
             + 2 * (nz_p * g4 + nz_p * nh_p + g4) * 4)      # f32 z-weights + bias
    tile_b, tile_t = tbs[-1], tts[-1]
    done = False
    for tb in tbs:
        for tt in tts:
            per = (2 * tb * nz_p * 4                         # z block
                   + 2 * tt * tb * ni_p * s_bytes            # streamed we blocks
                   + 2 * tt * tb * nh_p * s_bytes            # streamed h_all blocks
                   + (2 * tb * nh_p + tb * g4) * 4           # h / c / bz scratch
                   + tt * tb * g4 * 4)                       # gx scratch (f32)
            if fixed + per <= budget:
                tile_b, tile_t, done = tb, tt, True
                break
        if done:
            break
    # megacore (v7x has 2 TensorCores): ensure >= 2 parallel batch tiles
    if b_pad // tile_b < 2 and b_pad % 16 == 0:
        tile_b = b_pad // 2
    return tile_b, tile_t


def _lstm_kernel(z_ref,       # (tile_b, nz_p)         f32
                 wz_ref,      # (nz_p, 4*nh_p)         f32   z rows of W_ih^T
                 wtrans_ref,  # (nz_p, nh_p)           f32   trans_linear.weight.T
                 b_ref,       # (1, 4*nh_p)            f32   b_ih + b_hh
                 we_ref,      # (tile_t, tile_b, ni_p) cdt   streamed embeddings
                 wih_ref,     # (ni_p, 4*nh_p)         cdt   embedding rows of W_ih^T
                 whh_ref,     # (nh_p, 4*nh_p)         cdt   W_hh^T
                 h_all_ref,   # (tile_t, tile_b, nh_p) cdt   hidden-state output
                 h_scr, c_scr, bz_scr, gx_scr):
    nh_p = h_scr.shape[-1]
    tile_t, tile_b, ni_p = we_ref.shape

    # Per batch-block init (c0 = trans_linear(z), h0 = tanh(c0)); fold the
    # time-invariant z contribution and the LSTM bias into bz once.
    @pl.when(pl.program_id(1) == 0)
    def _init():
        c0 = jnp.dot(z_ref[...], wtrans_ref[...],
                     preferred_element_type=jnp.float32)
        c_scr[...] = c0
        h_scr[...] = jnp.tanh(c0)
        bz_scr[...] = (jnp.dot(z_ref[...], wz_ref[...],
                               preferred_element_type=jnp.float32) + b_ref[...])

    # Fused input projection for the whole tile: one big parallel MXU matmul off
    # the per-timestep critical path; result stays on-chip in f32 scratch.
    gx = jnp.dot(we_ref[...].reshape(tile_t * tile_b, ni_p), wih_ref[...],
                 preferred_element_type=jnp.float32)
    gx_scr[...] = gx.reshape(tile_t, tile_b, 4 * nh_p) + bz_scr[...]

    whh = whh_ref[...]   # hoist loop-invariant load off the serial path

    @pl.loop(0, tile_t, unroll=(tile_t <= 8))
    def _step(t):
        h = h_scr[...]
        c = c_scr[...]
        gates = gx_scr[t] + jnp.dot(h.astype(whh.dtype), whh,
                                    preferred_element_type=jnp.float32)
        i_g = _sigmoid(gates[:, 0 * nh_p:1 * nh_p])
        f_g = _sigmoid(gates[:, 1 * nh_p:2 * nh_p])
        g_g = jnp.tanh(gates[:, 2 * nh_p:3 * nh_p])
        o_g = _sigmoid(gates[:, 3 * nh_p:4 * nh_p])
        c_new = f_g * c + i_g * g_g
        h_new = o_g * jnp.tanh(c_new)
        c_scr[...] = c_new
        h_scr[...] = h_new
        h_all_ref[t] = h_new.astype(h_all_ref.dtype)


def _run_lstm(z_p, wz, wtrans, b, we_tm, wih, whh, h_dtype):
    T_pad, b_pad, ni_p = we_tm.shape
    nh_p = whh.shape[0]
    g4 = whh.shape[1]
    nz_p = z_p.shape[1]
    cap = _vmem_capacity()
    s_bytes = jnp.dtype(h_dtype).itemsize
    tile_b, tile_t = _select_lstm_tiles(T_pad, b_pad, ni_p, nh_p, nz_p, s_bytes, cap)
    grid = (b_pad // tile_b, T_pad // tile_t)

    return pl.pallas_call(
        _lstm_kernel,
        out_shape=jax.ShapeDtypeStruct((T_pad, b_pad, nh_p), h_dtype),
        grid=grid,
        in_specs=[
            pl.BlockSpec((tile_b, nz_p), lambda bb, tt: (bb, 0)),
            pl.BlockSpec((nz_p, g4), lambda bb, tt: (0, 0)),
            pl.BlockSpec((nz_p, nh_p), lambda bb, tt: (0, 0)),
            pl.BlockSpec((1, g4), lambda bb, tt: (0, 0)),
            pl.BlockSpec((tile_t, tile_b, ni_p), lambda bb, tt: (tt, bb, 0)),
            pl.BlockSpec((ni_p, g4), lambda bb, tt: (0, 0)),
            pl.BlockSpec((nh_p, g4), lambda bb, tt: (0, 0)),
        ],
        out_specs=pl.BlockSpec((tile_t, tile_b, nh_p), lambda bb, tt: (tt, bb, 0)),
        scratch_shapes=[pltpu.VMEM((tile_b, nh_p), jnp.float32),       # h
                        pltpu.VMEM((tile_b, nh_p), jnp.float32),       # c
                        pltpu.VMEM((tile_b, g4), jnp.float32),         # z-folded bias
                        pltpu.VMEM((tile_t, tile_b, g4), jnp.float32)],  # gx staging
        compiler_params=pltpu.CompilerParams(
            dimension_semantics=("parallel", "arbitrary"),
            vmem_limit_bytes=int(0.85 * cap)),
    )(z_p, wz, wtrans, b, we_tm, wih, whh)


# ----------------------------------------------------------------------------
# Wrapper reproducing VAE_Decoder.forward
# ----------------------------------------------------------------------------
@functools.partial(jax.jit, static_argnames=("compute_dtype",))
def vae_decoder_forward(params, input_ids, z, compute_dtype=jnp.bfloat16):
    """input_ids: (B, T) int32 ; z: (B, n_sample, nz) -> logits (B*n_sample, T, V) f32."""
    B, n_sample, nz = z.shape
    T = input_ids.shape[1]
    embed = params["embed"]
    ni = embed.shape[1]
    nh = params["w_hh"].shape[0]
    V = params["w_pred"].shape[1]
    Beff = B * n_sample

    # ---- padded, TPU-friendly dims (lane = 128, sublane = 8) ----------------
    nh_p = _round_up(nh, 128)
    ni_p = _round_up(ni, 128)
    nz_p = _round_up(nz, 128)
    v_p = _round_up(V, 128)
    b_pad = _round_up(Beff, 8)
    T_pad = _round_up(T, 8)
    g4 = 4 * nh_p

    # ---- embedding gather, produced time-major directly (no HBM transpose) --
    # padding_idx=0 row of `embed` is zero; dropout_in is identity (eval).
    # TODO(synk): training-mode dropout_in / dropout_out masks not implemented.
    we_tm = jnp.take(embed, input_ids.T, axis=0)                     # (T, B, ni)
    if n_sample > 1:
        we_tm = jnp.broadcast_to(we_tm[:, :, None, :],
                                 (T, B, n_sample, ni)).reshape(T, Beff, ni)
    we_tm = jnp.pad(we_tm, ((0, T_pad - T), (0, b_pad - Beff),
                            (0, ni_p - ni))).astype(compute_dtype)

    z_flat = z.reshape(Beff, nz).astype(jnp.float32)
    z_p = jnp.pad(z_flat, ((0, b_pad - Beff), (0, nz_p - nz)))       # f32

    # ---- weights: pad gate blocks / rows, cast streamed ones to compute dtype
    w_ih = params["w_ih"]                                            # (ni+nz, 4*nh)
    w_ih_e = _pad_gate_blocks(jnp.pad(w_ih[:ni], ((0, ni_p - ni), (0, 0))),
                              nh, nh_p).astype(compute_dtype)
    w_ih_z = _pad_gate_blocks(jnp.pad(w_ih[ni:], ((0, nz_p - nz), (0, 0))),
                              nh, nh_p).astype(jnp.float32)
    w_hh = _pad_gate_blocks(jnp.pad(params["w_hh"], ((0, nh_p - nh), (0, 0))),
                            nh, nh_p).astype(compute_dtype)
    b_gates = _pad_gate_blocks(params["b_gates"], nh, nh_p).astype(jnp.float32)
    w_trans = jnp.pad(params["w_trans"],
                      ((0, nz_p - nz), (0, nh_p - nh))).astype(jnp.float32)
    w_pred = jnp.pad(params["w_pred"],
                     ((0, nh_p - nh), (0, v_p - V))).astype(compute_dtype)

    # ---- fused input-projection + LSTM recurrence ---------------------------
    h_all_tm = _run_lstm(z_p, w_ih_z, w_trans, b_gates, we_tm, w_ih_e, w_hh,
                         h_dtype=compute_dtype)                      # (T_pad, b_pad, nh_p)

    # ---- vocab projection (pred_linear, no bias) -----------------------------
    # Only the narrow compute-dtype h_all is transposed to batch-major; the f32
    # logits then come out (batch, time, vocab) with no post-hoc transpose.
    h_bm = jnp.transpose(h_all_tm, (1, 0, 2)).reshape(b_pad * T_pad, nh_p)
    logits = _matmul(h_bm, w_pred, out_dtype=jnp.float32)            # (b_pad*T_pad, v_p)
    logits = logits.reshape(b_pad, T_pad, v_p)

    # dropout_out is identity (eval); strip batch / time / vocab padding
    return logits[:Beff, :T, :V]


# ----------------------------------------------------------------------------
# Pure-JAX reference (same math, no Pallas) for correctness checks
# ----------------------------------------------------------------------------
def vae_decoder_reference(params, input_ids, z):
    B, n_sample, nz = z.shape
    T = input_ids.shape[1]
    ni = params["embed"].shape[1]
    nh = params["w_hh"].shape[0]

    word_embed = jnp.take(params["embed"], input_ids, axis=0)
    if n_sample == 1:
        we = word_embed
        z_ = jnp.broadcast_to(z, (B, T, nz))
    else:
        we = jnp.broadcast_to(word_embed[:, None], (B, n_sample, T, ni)
                              ).reshape(B * n_sample, T, ni)
        z_ = jnp.broadcast_to(z[:, :, None, :], (B, n_sample, T, nz)
                              ).reshape(B * n_sample, T, nz)
    x = jnp.concatenate([we, z_], -1)
    z_flat = z.reshape(B * n_sample, nz)

    c = z_flat @ params["w_trans"]
    h = jnp.tanh(c)

    def step(carry, xt):
        h, c = carry
        gates = xt @ params["w_ih"] + h @ params["w_hh"] + params["b_gates"][0]
        i_g = jax.nn.sigmoid(gates[:, 0 * nh:1 * nh])
        f_g = jax.nn.sigmoid(gates[:, 1 * nh:2 * nh])
        g_g = jnp.tanh(gates[:, 2 * nh:3 * nh])
        o_g = jax.nn.sigmoid(gates[:, 3 * nh:4 * nh])
        c = f_g * c + i_g * g_g
        h = o_g * jnp.tanh(c)
        return (h, c), h @ params["w_pred"]

    _, out = jax.lax.scan(step, (h, c), jnp.transpose(x, (1, 0, 2)))
    return jnp.transpose(out, (1, 0, 2))


# ----------------------------------------------------------------------------
# Deterministic parameter init (synthetic, mirrors nn.Module __init__ shapes)
# ----------------------------------------------------------------------------
def init_params(key, vocab_size, ni, nz, nh):
    ks = jax.random.split(key, 6)
    u = lambda k, shape, s=0.1: jax.random.uniform(k, shape, jnp.float32, -s, s)
    embed = u(ks[0], (vocab_size, ni))
    embed = embed.at[0].set(0.0)                       # padding_idx=0
    return {
        "embed": embed,                                # nn.Embedding(V, ni)
        "w_trans": u(ks[1], (nz, nh)),                 # trans_linear.weight.T
        "w_ih": u(ks[2], (ni + nz, 4 * nh)),           # lstm.weight_ih_l0.T (i,f,g,o)
        "w_hh": u(ks[3], (nh, 4 * nh)),                # lstm.weight_hh_l0.T
        "b_gates": u(ks[4], (1, 4 * nh)),              # b_ih + b_hh combined
        "w_pred": u(ks[5], (nh, vocab_size)),          # pred_linear.weight.T
    }


if __name__ == "__main__":
    V, ni, nz, nh = 32, 16, 8, 32
    B, T, n_sample = 2, 8, 1

    key = jax.random.PRNGKey(0)
    kp, ki, kz = jax.random.split(key, 3)

    params = init_params(kp, V, ni, nz, nh)
    input_ids = jax.random.randint(ki, (B, T), 0, V, dtype=jnp.int32)
    z = jax.random.normal(kz, (B, n_sample, nz), dtype=jnp.float32)

    ref = jax.block_until_ready(vae_decoder_reference(params, input_ids, z))

    # f32 path: tight check against the pure-JAX reference
    out_f32 = jax.block_until_ready(
        vae_decoder_forward(params, input_ids, z, compute_dtype=jnp.float32))
    assert out_f32.shape == (B * n_sample, T, V), out_f32.shape
    assert jnp.allclose(out_f32, ref, atol=1e-3, rtol=1e-3), "f32 mismatch vs reference"

    # bf16 streaming path (bf16 weights / activations, f32 accumulation)
    out_bf16 = jax.block_until_ready(
        vae_decoder_forward(params, input_ids, z, compute_dtype=jnp.bfloat16))
    assert out_bf16.shape == (B * n_sample, T, V)
    assert bool(jnp.all(jnp.isfinite(out_bf16)))
    assert jnp.allclose(out_bf16, ref, atol=2e-1, rtol=2e-1), "bf16 drifted too far"

    # multi-sample (n_sample > 1) path
    n_sample2 = 3
    z2 = jax.random.normal(kz, (B, n_sample2, nz), dtype=jnp.float32)
    out2 = jax.block_until_ready(
        vae_decoder_forward(params, input_ids, z2, compute_dtype=jnp.float32))
    ref2 = jax.block_until_ready(vae_decoder_reference(params, input_ids, z2))
    assert out2.shape == (B * n_sample2, T, V), out2.shape
    assert jnp.allclose(out2, ref2, atol=1e-3, rtol=1e-3), "n_sample>1 mismatch"

    print("KERNEL_OK")
</pallas_src>

<mosaic_0001>
module attributes {stable_mosaic.version = 11 : i64} {
  func.func @_lstm_kernel(%arg0: i32, %arg1: i32, %arg2: memref<8x128xf32, #tpu.memory_space<vmem>>, %arg3: memref<128x512xf32, #tpu.memory_space<vmem>>, %arg4: memref<128x128xf32, #tpu.memory_space<vmem>>, %arg5: memref<1x512xf32, #tpu.memory_space<vmem>>, %arg6: memref<8x8x128xf32, #tpu.memory_space<vmem>>, %arg7: memref<128x512xf32, #tpu.memory_space<vmem>>, %arg8: memref<128x512xf32, #tpu.memory_space<vmem>>, %arg9: memref<8x8x128xf32, #tpu.memory_space<vmem>>, %arg10: memref<8x128xf32, #tpu.memory_space<vmem>>, %arg11: memref<8x128xf32, #tpu.memory_space<vmem>>, %arg12: memref<8x512xf32, #tpu.memory_space<vmem>>, %arg13: memref<8x8x512xf32, #tpu.memory_space<vmem>>) attributes {dimension_semantics = [#tpu.dimension_semantics<parallel>, #tpu.dimension_semantics<arbitrary>], iteration_bounds = array<i64: 1, 1>, scalar_prefetch = 0 : i64, scratch_operands = 4 : i64, tpu.core_type = #tpu.core_type<tc>, window_params = [{transform_indices = @transform_0, window_bounds = array<i64: 8, 128>}, {pipeline_mode = #tpu.pipeline_mode<synchronous>, transform_indices = @transform_1, window_bounds = array<i64: 128, 512>}, {pipeline_mode = #tpu.pipeline_mode<synchronous>, transform_indices = @transform_2, window_bounds = array<i64: 128, 128>}, {pipeline_mode = #tpu.pipeline_mode<synchronous>, transform_indices = @transform_3, window_bounds = array<i64: 1, 512>}, {transform_indices = @transform_4, window_bounds = array<i64: 8, 8, 128>}, {pipeline_mode = #tpu.pipeline_mode<synchronous>, transform_indices = @transform_5, window_bounds = array<i64: 128, 512>}, {pipeline_mode = #tpu.pipeline_mode<synchronous>, transform_indices = @transform_6, window_bounds = array<i64: 128, 512>}, {transform_indices = @transform_7, window_bounds = array<i64: 8, 8, 128>}]} {
    %c0_i32 = arith.constant 0 : i32
    %0 = arith.cmpi eq, %arg1, %c0_i32 : i32
    %1 = arith.extui %0 : i1 to i32
    %c0_i32_0 = arith.constant 0 : i32
    %2 = arith.cmpi ne, %1, %c0_i32_0 : i32
    scf.if %2 {
      %c0_205 = arith.constant 0 : index
      %c0_206 = arith.constant 0 : index
      %382 = vector.load %arg2[%c0_205, %c0_206] : memref<8x128xf32, #tpu.memory_space<vmem>>, vector<8x128xf32>
      %c0_207 = arith.constant 0 : index
      %c0_208 = arith.constant 0 : index
      %383 = vector.load %arg4[%c0_207, %c0_208] : memref<128x128xf32, #tpu.memory_space<vmem>>, vector<128x128xf32>
      %cst_209 = arith.constant dense<0.000000e+00> : vector<8x128xf32>
      %384 = tpu.matmul %382, %383, %cst_209 {dimension_numbers = #tpu.dot_dimension_numbers<[1], [0], [0], [1], [0, 0, 1, 1], [], []>} : vector<8x128xf32>, vector<128x128xf32>, vector<8x128xf32> -> vector<8x128xf32>
      %c0_210 = arith.constant 0 : index
      %c0_211 = arith.constant 0 : index
      %385 = vector.load %arg11[%c0_210, %c0_211] : memref<8x128xf32, #tpu.memory_space<vmem>>, vector<8x128xf32>
      tpu.vector_store %arg11[%c0_210, %c0_211], %384 {strides = array<i32>} : memref<8x128xf32, #tpu.memory_space<vmem>>, vector<8x128xf32>,
      %386 = math.tanh %384 : vector<8x128xf32>
      %c0_212 = arith.constant 0 : index
      %c0_213 = arith.constant 0 : index
      %387 = vector.load %arg10[%c0_212, %c0_213] : memref<8x128xf32, #tpu.memory_space<vmem>>, vector<8x128xf32>
      tpu.vector_store %arg10[%c0_212, %c0_213], %386 {strides = array<i32>} : memref<8x128xf32, #tpu.memory_space<vmem>>, vector<8x128xf32>,
      %c0_214 = arith.constant 0 : index
      %c0_215 = arith.constant 0 : index
      %388 = vector.load %arg2[%c0_214, %c0_215] : memref<8x128xf32, #tpu.memory_space<vmem>>, vector<8x128xf32>
      %c0_216 = arith.constant 0 : index
      %c0_217 = arith.constant 0 : index
      %389 = vector.load %arg3[%c0_216, %c0_217] : memref<128x512xf32, #tpu.memory_space<vmem>>, vector<128x512xf32>
      %cst_218 = arith.constant dense<0.000000e+00> : vector<8x512xf32>
      %390 = tpu.matmul %388, %389, %cst_218 {dimension_numbers = #tpu.dot_dimension_numbers<[1], [0], [0], [1], [0, 0, 1, 1], [], []>} : vector<8x128xf32>, vector<128x512xf32>, vector<8x512xf32> -> vector<8x512xf32>
      %c0_219 = arith.constant 0 : index
      %c0_220 = arith.constant 0 : index
      %391 = vector.load %arg5[%c0_219, %c0_220] : memref<1x512xf32, #tpu.memory_space<vmem>>, vector<1x512xf32>
      %392 = vector.broadcast %391 : vector<1x512xf32> to vector<8x512xf32>
      %393 = arith.addf %390, %392 : vector<8x512xf32>
      %c0_221 = arith.constant 0 : index
      %c0_222 = arith.constant 0 : index
      %394 = vector.load %arg12[%c0_221, %c0_222] : memref<8x512xf32, #tpu.memory_space<vmem>>, vector<8x512xf32>
      tpu.vector_store %arg12[%c0_221, %c0_222], %393 {strides = array<i32>} : memref<8x512xf32, #tpu.memory_space<vmem>>, vector<8x512xf32>,
    } else {
    }
    %c0 = arith.constant 0 : index
    %c0_1 = arith.constant 0 : index
    %c0_2 = arith.constant 0 : index
    %3 = vector.load %arg6[%c0, %c0_1, %c0_2] : memref<8x8x128xf32, #tpu.memory_space<vmem>>, vector<8x8x128xf32>
    %4 = vector.shape_cast %3 : vector<8x8x128xf32> to vector<64x128xf32>
    %c0_3 = arith.constant 0 : index
    %c0_4 = arith.constant 0 : index
    %5 = vector.load %arg7[%c0_3, %c0_4] : memref<128x512xf32, #tpu.memory_space<vmem>>, vector<128x512xf32>
    %cst = arith.constant dense<0.000000e+00> : vector<64x512xf32>
    %6 = tpu.matmul %4, %5, %cst {dimension_numbers = #tpu.dot_dimension_numbers<[1], [0], [0], [1], [0, 0, 1, 1], [], []>} : vector<64x128xf32>, vector<128x512xf32>, vector<64x512xf32> -> vector<64x512xf32>
    %7 = vector.shape_cast %6 : vector<64x512xf32> to vector<8x8x512xf32>
    %c0_5 = arith.constant 0 : index
    %c0_6 = arith.constant 0 : index
    %8 = vector.load %arg12[%c0_5, %c0_6] : memref<8x512xf32, #tpu.memory_space<vmem>>, vector<8x512xf32>
    %9 = vector.shape_cast %8 : vector<8x512xf32> to vector<1x8x512xf32>
    %10 = vector.broadcast %9 : vector<1x8x512xf32> to vector<8x8x512xf32>
    %11 = arith.addf %7, %10 : vector<8x8x512xf32>
    %c0_7 = arith.constant 0 : index
    %c0_8 = arith.constant 0 : index
    %c0_9 = arith.constant 0 : index
    %12 = vector.load %arg13[%c0_7, %c0_8, %c0_9] : memref<8x8x512xf32, #tpu.memory_space<vmem>>, vector<8x8x512xf32>
    tpu.vector_store %arg13[%c0_7, %c0_8, %c0_9], %11 {strides = array<i32>} : memref<8x8x512xf32, #tpu.memory_space<vmem>>, vector<8x8x512xf32>,
    %c0_10 = arith.constant 0 : index
    %c0_11 = arith.constant 0 : index
    %13 = vector.load %arg8[%c0_10, %c0_11] : memref<128x512xf32, #tpu.memory_space<vmem>>, vector<128x512xf32>
    %c0_i32_12 = arith.constant 0 : i32
    %c1_i32 = arith.constant 1 : i32
    %14 = arith.muli %c0_i32_12, %c1_i32 : i32
    %c0_i32_13 = arith.constant 0 : i32
    %15 = arith.addi %c0_i32_13, %14 : i32
    %c0_14 = arith.constant 0 : index
    %c0_15 = arith.constant 0 : index
    %16 = vector.load %arg10[%c0_14, %c0_15] : memref<8x128xf32, #tpu.memory_space<vmem>>, vector<8x128xf32>
    %c0_16 = arith.constant 0 : index
    %c0_17 = arith.constant 0 : index
    %17 = vector.load %arg11[%c0_16, %c0_17] : memref<8x128xf32, #tpu.memory_space<vmem>>, vector<8x128xf32>
    %18 = arith.index_cast %15 : i32 to index
    %c0_18 = arith.constant 0 : index
    %c0_19 = arith.constant 0 : index
    %19 = vector.load %arg13[%18, %c0_18, %c0_19] : memref<8x8x512xf32, #tpu.memory_space<vmem>>, vector<1x8x512xf32>
    %20 = vector.shape_cast %19 : vector<1x8x512xf32> to vector<8x512xf32>
    %cst_20 = arith.constant dense<0.000000e+00> : vector<8x512xf32>
    %21 = tpu.matmul %16, %13, %cst_20 {dimension_numbers = #tpu.dot_dimension_numbers<[1], [0], [0], [1], [0, 0, 1, 1], [], []>} : vector<8x128xf32>, vector<128x512xf32>, vector<8x512xf32> -> vector<8x512xf32>
    %22 = arith.addf %20, %21 : vector<8x512xf32>
    %23 = vector.extract_strided_slice %22 {offsets = [0, 0], sizes = [8, 128], strides = [1, 1]} : vector<8x512xf32> to vector<8x128xf32>
    %cst_21 = arith.constant 5.000000e-01 : f32
    %24 = vector.broadcast %cst_21 : f32 to vector<8x128xf32>
    %25 = arith.mulf %24, %23 : vector<8x128xf32>
    %26 = math.tanh %25 : vector<8x128xf32>
    %cst_22 = arith.constant 5.000000e-01 : f32
    %27 = vector.broadcast %cst_22 : f32 to vector<8x128xf32>
    %28 = arith.mulf %27, %26 : vector<8x128xf32>
    %cst_23 = arith.constant 5.000000e-01 : f32
    %29 = vector.broadcast %cst_23 : f32 to vector<8x128xf32>
    %30 = arith.addf %28, %29 : vector<8x128xf32>
    %31 = vector.extract_strided_slice %22 {offsets = [0, 128], sizes = [8, 128], strides = [1, 1]} : vector<8x512xf32> to vector<8x128xf32>
    %cst_24 = arith.constant 5.000000e-01 : f32
    %32 = vector.broadcast %cst_24 : f32 to vector<8x128xf32>
    %33 = arith.mulf %32, %31 : vector<8x128xf32>
    %34 = math.tanh %33 : vector<8x128xf32>
    %cst_25 = arith.constant 5.000000e-01 : f32
    %35 = vector.broadcast %cst_25 : f32 to vector<8x128xf32>
    %36 = arith.mulf %35, %34 : vector<8x128xf32>
    %cst_26 = arith.constant 5.000000e-01 : f32
    %37 = vector.broadcast %cst_26 : f32 to vector<8x128xf32>
    %38 = arith.addf %36, %37 : vector<8x128xf32>
    %39 = vector.extract_strided_slice %22 {offsets = [0, 256], sizes = [8, 128], strides = [1, 1]} : vector<8x512xf32> to vector<8x128xf32>
    %40 = math.tanh %39 : vector<8x128xf32>
    %41 = vector.extract_strided_slice %22 {offsets = [0, 384], sizes = [8, 128], strides = [1, 1]} : vector<8x512xf32> to vector<8x128xf32>
    %cst_27 = arith.constant 5.000000e-01 : f32
    %42 = vector.broadcast %cst_27 : f32 to vector<8x128xf32>
    %43 = arith.mulf %42, %41 : vector<8x128xf32>
    %44 = math.tanh %43 : vector<8x128xf32>
    %cst_28 = arith.constant 5.000000e-01 : f32
    %45 = vector.broadcast %cst_28 : f32 to vector<8x128xf32>
    %46 = arith.mulf %45, %44 : vector<8x128xf32>
    %cst_29 = arith.constant 5.000000e-01 : f32
    %47 = vector.broadcast %cst_29 : f32 to vector<8x128xf32>
    %48 = arith.addf %46, %47 : vector<8x128xf32>
    %49 = arith.mulf %38, %17 : vector<8x128xf32>
    %50 = arith.mulf %30, %40 : vector<8x128xf32>
    %51 = arith.addf %49, %50 : vector<8x128xf32>
    %52 = math.tanh %51 : vector<8x128xf32>
    %53 = arith.mulf %48, %52 : vector<8x128xf32>
    %c0_30 = arith.constant 0 : index
    %c0_31 = arith.constant 0 : index
    %54 = vector.load %arg11[%c0_30, %c0_31] : memref<8x128xf32, #tpu.memory_space<vmem>>, vector<8x128xf32>
    tpu.vector_store %arg11[%c0_30, %c0_31], %51 {strides = array<i32>} : memref<8x128xf32, #tpu.memory_space<vmem>>, vector<8x128xf32>,
    %c0_32 = arith.constant 0 : index
    %c0_33 = arith.constant 0 : index
    %55 = vector.load %arg10[%c0_32, %c0_33] : memref<8x128xf32, #tpu.memory_space<vmem>>, vector<8x128xf32>
    tpu.vector_store %arg10[%c0_32, %c0_33], %53 {strides = array<i32>} : memref<8x128xf32, #tpu.memory_space<vmem>>, vector<8x128xf32>,
    %56 = arith.index_cast %15 : i32 to index
    %c0_34 = arith.constant 0 : index
    %c0_35 = arith.constant 0 : index
    %57 = vector.load %arg9[%56, %c0_34, %c0_35] : memref<8x8x128xf32, #tpu.memory_space<vmem>>, vector<1x8x128xf32>
    %58 = vector.shape_cast %57 : vector<1x8x128xf32> to vector<8x128xf32>
    %59 = vector.shape_cast %53 : vector<8x128xf32> to vector<1x8x128xf32>
    tpu.vector_store %arg9[%56, %c0_34, %c0_35], %59 {strides = array<i32>} : memref<8x8x128xf32, #tpu.memory_space<vmem>>, vector<1x8x128xf32>,
    %c1_i32_36 = arith.constant 1 : i32
    %c1_i32_37 = arith.constant 1 : i32
    %60 = arith.muli %c1_i32_36, %c1_i32_37 : i32
    %c0_i32_38 = arith.constant 0 : i32
    %61 = arith.addi %c0_i32_38, %60 : i32
    %c0_39 = arith.constant 0 : index
    %c0_40 = arith.constant 0 : index
    %62 = vector.load %arg10[%c0_39, %c0_40] : memref<8x128xf32, #tpu.memory_space<vmem>>, vector<8x128xf32>
    %c0_41 = arith.constant 0 : index
    %c0_42 = arith.constant 0 : index
    %63 = vector.load %arg11[%c0_41, %c0_42] : memref<8x128xf32, #tpu.memory_space<vmem>>, vector<8x128xf32>
    %64 = arith.index_cast %61 : i32 to index
    %c0_43 = arith.constant 0 : index
    %c0_44 = arith.constant 0 : index
    %65 = vector.load %arg13[%64, %c0_43, %c0_44] : memref<8x8x512xf32, #tpu.memory_space<vmem>>, vector<1x8x512xf32>
    %66 = vector.shape_cast %65 : vector<1x8x512xf32> to vector<8x512xf32>
    %cst_45 = arith.constant dense<0.000000e+00> : vector<8x512xf32>
    %67 = tpu.matmul %62, %13, %cst_45 {dimension_numbers = #tpu.dot_dimension_numbers<[1], [0], [0], [1], [0, 0, 1, 1], [], []>} : vector<8x128xf32>, vector<128x512xf32>, vector<8x512xf32> -> vector<8x512xf32>
    %68 = arith.addf %66, %67 : vector<8x512xf32>
    %69 = vector.extract_strided_slice %68 {offsets = [0, 0], sizes = [8, 128], strides = [1, 1]} : vector<8x512xf32> to vector<8x128xf32>
    %cst_46 = arith.constant 5.000000e-01 : f32
    %70 = vector.broadcast %cst_46 : f32 to vector<8x128xf32>
    %71 = arith.mulf %70, %69 : vector<8x128xf32>
    %72 = math.tanh %71 : vector<8x128xf32>
    %cst_47 = arith.constant 5.000000e-01 : f32
    %73 = vector.broadcast %cst_47 : f32 to vector<8x128xf32>
    %74 = arith.mulf %73, %72 : vector<8x128xf32>
    %cst_48 = arith.constant 5.000000e-01 : f32
    %75 = vector.broadcast %cst_48 : f32 to vector<8x128xf32>
    %76 = arith.addf %74, %75 : vector<8x128xf32>
    %77 = vector.extract_strided_slice %68 {offsets = [0, 128], sizes = [8, 128], strides = [1, 1]} : vector<8x512xf32> to vector<8x128xf32>
    %cst_49 = arith.constant 5.000000e-01 : f32
    %78 = vector.broadcast %cst_49 : f32 to vector<8x128xf32>
    %79 = arith.mulf %78, %77 : vector<8x128xf32>
    %80 = math.tanh %79 : vector<8x128xf32>
    %cst_50 = arith.constant 5.000000e-01 : f32
    %81 = vector.broadcast %cst_50 : f32 to vector<8x128xf32>
    %82 = arith.mulf %81, %80 : vector<8x128xf32>
    %cst_51 = arith.constant 5.000000e-01 : f32
    %83 = vector.broadcast %cst_51 : f32 to vector<8x128xf32>
    %84 = arith.addf %82, %83 : vector<8x128xf32>
    %85 = vector.extract_strided_slice %68 {offsets = [0, 256], sizes = [8, 128], strides = [1, 1]} : vector<8x512xf32> to vector<8x128xf32>
    %86 = math.tanh %85 : vector<8x128xf32>
    %87 = vector.extract_strided_slice %68 {offsets = [0, 384], sizes = [8, 128], strides = [1, 1]} : vector<8x512xf32> to vector<8x128xf32>
    %cst_52 = arith.constant 5.000000e-01 : f32
    %88 = vector.broadcast %cst_52 : f32 to vector<8x128xf32>
    %89 = arith.mulf %88, %87 : vector<8x128xf32>
    %90 = math.tanh %89 : vector<8x128xf32>
    %cst_53 = arith.constant 5.000000e-01 : f32
    %91 = vector.broadcast %cst_53 : f32 to vector<8x128xf32>
    %92 = arith.mulf %91, %90 : vector<8x128xf32>
    %cst_54 = arith.constant 5.000000e-01 : f32
    %93 = vector.broadcast %cst_54 : f32 to vector<8x128xf32>
    %94 = arith.addf %92, %93 : vector<8x128xf32>
    %95 = arith.mulf %84, %63 : vector<8x128xf32>
    %96 = arith.mulf %76, %86 : vector<8x128xf32>
    %97 = arith.addf %95, %96 : vector<8x128xf32>
    %98 = math.tanh %97 : vector<8x128xf32>
    %99 = arith.mulf %94, %98 : vector<8x128xf32>
    %c0_55 = arith.constant 0 : index
    %c0_56 = arith.constant 0 : index
    %100 = vector.load %arg11[%c0_55, %c0_56] : memref<8x128xf32, #tpu.memory_space<vmem>>, vector<8x128xf32>
    tpu.vector_store %arg11[%c0_55, %c0_56], %97 {strides = array<i32>} : memref<8x128xf32, #tpu.memory_space<vmem>>, vector<8x128xf32>,
    %c0_57 = arith.constant 0 : index
    %c0_58 = arith.constant 0 : index
    %101 = vector.load %arg10[%c0_57, %c0_58] : memref<8x128xf32, #tpu.memory_space<vmem>>, vector<8x128xf32>
    tpu.vector_store %arg10[%c0_57, %c0_58], %99 {strides = array<i32>} : memref<8x128xf32, #tpu.memory_space<vmem>>, vector<8x128xf32>,
    %102 = arith.index_cast %61 : i32 to index
    %c0_59 = arith.constant 0 : index
    %c0_60 = arith.constant 0 : index
    %103 = vector.load %arg9[%102, %c0_59, %c0_60] : memref<8x8x128xf32, #tpu.memory_space<vmem>>, vector<1x8x128xf32>
    %104 = vector.shape_cast %103 : vector<1x8x128xf32> to vector<8x128xf32>
    %105 = vector.shape_cast %99 : vector<8x128xf32> to vector<1x8x128xf32>
    tpu.vector_store %arg9[%102, %c0_59, %c0_60], %105 {strides = array<i32>} : memref<8x8x128xf32, #tpu.memory_space<vmem>>, vector<1x8x128xf32>,
    %c2_i32 = arith.constant 2 : i32
    %c1_i32_61 = arith.constant 1 : i32
    %106 = arith.muli %c2_i32, %c1_i32_61 : i32
    %c0_i32_62 = arith.constant 0 : i32
    %107 = arith.addi %c0_i32_62, %106 : i32
    %c0_63 = arith.constant 0 : index
    %c0_64 = arith.constant 0 : index
    %108 = vector.load %arg10[%c0_63, %c0_64] : memref<8x128xf32, #tpu.memory_space<vmem>>, vector<8x128xf32>
    %c0_65 = arith.constant 0 : index
    %c0_66 = arith.constant 0 : index
    %109 = vector.load %arg11[%c0_65, %c0_66] : memref<8x128xf32, #tpu.memory_space<vmem>>, vector<8x128xf32>
    %110 = arith.index_cast %107 : i32 to index
    %c0_67 = arith.constant 0 : index
    %c0_68 = arith.constant 0 : index
    %111 = vector.load %arg13[%110, %c0_67, %c0_68] : memref<8x8x512xf32, #tpu.memory_space<vmem>>, vector<1x8x512xf32>
    %112 = vector.shape_cast %111 : vector<1x8x512xf32> to vector<8x512xf32>
    %cst_69 = arith.constant dense<0.000000e+00> : vector<8x512xf32>
    %113 = tpu.matmul %108, %13, %cst_69 {dimension_numbers = #tpu.dot_dimension_numbers<[1], [0], [0], [1], [0, 0, 1, 1], [], []>} : vector<8x128xf32>, vector<128x512xf32>, vector<8x512xf32> -> vector<8x512xf32>
    %114 = arith.addf %112, %113 : vector<8x512xf32>
    %115 = vector.extract_strided_slice %114 {offsets = [0, 0], sizes = [8, 128], strides = [1, 1]} : vector<8x512xf32> to vector<8x128xf32>
    %cst_70 = arith.constant 5.000000e-01 : f32
    %116 = vector.broadcast %cst_70 : f32 to vector<8x128xf32>
    %117 = arith.mulf %116, %115 : vector<8x128xf32>
    %118 = math.tanh %117 : vector<8x128xf32>
    %cst_71 = arith.constant 5.000000e-01 : f32
    %119 = vector.broadcast %cst_71 : f32 to vector<8x128xf32>
    %120 = arith.mulf %119, %118 : vector<8x128xf32>
    %cst_72 = arith.constant 5.000000e-01 : f32
    %121 = vector.broadcast %cst_72 : f32 to vector<8x128xf32>
    %122 = arith.addf %120, %121 : vector<8x128xf32>
    %123 = vector.extract_strided_slice %114 {offsets = [0, 128], sizes = [8, 128], strides = [1, 1]} : vector<8x512xf32> to vector<8x128xf32>
    %cst_73 = arith.constant 5.000000e-01 : f32
    %124 = vector.broadcast %cst_73 : f32 to vector<8x128xf32>
    %125 = arith.mulf %124, %123 : vector<8x128xf32>
    %126 = math.tanh %125 : vector<8x128xf32>
    %cst_74 = arith.constant 5.000000e-01 : f32
    %127 = vector.broadcast %cst_74 : f32 to vector<8x128xf32>
    %128 = arith.mulf %127, %126 : vector<8x128xf32>
    %cst_75 = arith.constant 5.000000e-01 : f32
    %129 = vector.broadcast %cst_75 : f32 to vector<8x128xf32>
    %130 = arith.addf %128, %129 : vector<8x128xf32>
    %131 = vector.extract_strided_slice %114 {offsets = [0, 256], sizes = [8, 128], strides = [1, 1]} : vector<8x512xf32> to vector<8x128xf32>
    %132 = math.tanh %131 : vector<8x128xf32>
    %133 = vector.extract_strided_slice %114 {offsets = [0, 384], sizes = [8, 128], strides = [1, 1]} : vector<8x512xf32> to vector<8x128xf32>
    %cst_76 = arith.constant 5.000000e-01 : f32
    %134 = vector.broadcast %cst_76 : f32 to vector<8x128xf32>
    %135 = arith.mulf %134, %133 : vector<8x128xf32>
    %136 = math.tanh %135 : vector<8x128xf32>
    %cst_77 = arith.constant 5.000000e-01 : f32
    %137 = vector.broadcast %cst_77 : f32 to vector<8x128xf32>
    %138 = arith.mulf %137, %136 : vector<8x128xf32>
    %cst_78 = arith.constant 5.000000e-01 : f32
    %139 = vector.broadcast %cst_78 : f32 to vector<8x128xf32>
    %140 = arith.addf %138, %139 : vector<8x128xf32>
    %141 = arith.mulf %130, %109 : vector<8x128xf32>
    %142 = arith.mulf %122, %132 : vector<8x128xf32>
    %143 = arith.addf %141, %142 : vector<8x128xf32>
    %144 = math.tanh %143 : vector<8x128xf32>
    %145 = arith.mulf %140, %144 : vector<8x128xf32>
    %c0_79 = arith.constant 0 : index
    %c0_80 = arith.constant 0 : index
    %146 = vector.load %arg11[%c0_79, %c0_80] : memref<8x128xf32, #tpu.memory_space<vmem>>, vector<8x128xf32>
    tpu.vector_store %arg11[%c0_79, %c0_80], %143 {strides = array<i32>} : memref<8x128xf32, #tpu.memory_space<vmem>>, vector<8x128xf32>,
    %c0_81 = arith.constant 0 : index
    %c0_82 = arith.constant 0 : index
    %147 = vector.load %arg10[%c0_81, %c0_82] : memref<8x128xf32, #tpu.memory_space<vmem>>, vector<8x128xf32>
    tpu.vector_store %arg10[%c0_81, %c0_82], %145 {strides = array<i32>} : memref<8x128xf32, #tpu.memory_space<vmem>>, vector<8x128xf32>,
    %148 = arith.index_cast %107 : i32 to index
    %c0_83 = arith.constant 0 : index
    %c0_84 = arith.constant 0 : index
    %149 = vector.load %arg9[%148, %c0_83, %c0_84] : memref<8x8x128xf32, #tpu.memory_space<vmem>>, vector<1x8x128xf32>
    %150 = vector.shape_cast %149 : vector<1x8x128xf32> to vector<8x128xf32>
    %151 = vector.shape_cast %145 : vector<8x128xf32> to vector<1x8x128xf32>
    tpu.vector_store %arg9[%148, %c0_83, %c0_84], %151 {strides = array<i32>} : memref<8x8x128xf32, #tpu.memory_space<vmem>>, vector<1x8x128xf32>,
    %c3_i32 = arith.constant 3 : i32
    %c1_i32_85 = arith.constant 1 : i32
    %152 = arith.muli %c3_i32, %c1_i32_85 : i32
    %c0_i32_86 = arith.constant 0 : i32
    %153 = arith.addi %c0_i32_86, %152 : i32
    %c0_87 = arith.constant 0 : index
    %c0_88 = arith.constant 0 : index
    %154 = vector.load %arg10[%c0_87, %c0_88] : memref<8x128xf32, #tpu.memory_space<vmem>>, vector<8x128xf32>
    %c0_89 = arith.constant 0 : index
    %c0_90 = arith.constant 0 : index
    %155 = vector.load %arg11[%c0_89, %c0_90] : memref<8x128xf32, #tpu.memory_space<vmem>>, vector<8x128xf32>
    %156 = arith.index_cast %153 : i32 to index
    %c0_91 = arith.constant 0 : index
    %c0_92 = arith.constant 0 : index
    %157 = vector.load %arg13[%156, %c0_91, %c0_92] : memref<8x8x512xf32, #tpu.memory_space<vmem>>, vector<1x8x512xf32>
    %158 = vector.shape_cast %157 : vector<1x8x512xf32> to vector<8x512xf32>
    %cst_93 = arith.constant dense<0.000000e+00> : vector<8x512xf32>
    %159 = tpu.matmul %154, %13, %cst_93 {dimension_numbers = #tpu.dot_dimension_numbers<[1], [0], [0], [1], [0, 0, 1, 1], [], []>} : vector<8x128xf32>, vector<128x512xf32>, vector<8x512xf32> -> vector<8x512xf32>
    %160 = arith.addf %158, %159 : vector<8x512xf32>
    %161 = vector.extract_strided_slice %160 {offsets = [0, 0], sizes = [8, 128], strides = [1, 1]} : vector<8x512xf32> to vector<8x128xf32>
    %cst_94 = arith.constant 5.000000e-01 : f32
    %162 = vector.broadcast %cst_94 : f32 to vector<8x128xf32>
    %163 = arith.mulf %162, %161 : vector<8x128xf32>
    %164 = math.tanh %163 : vector<8x128xf32>
    %cst_95 = arith.constant 5.000000e-01 : f32
    %165 = vector.broadcast %cst_95 : f32 to vector<8x128xf32>
    %166 = arith.mulf %165, %164 : vector<8x128xf32>
    %cst_96 = arith.constant 5.000000e-01 : f32
    %167 = vector.broadcast %cst_96 : f32 to vector<8x128xf32>
    %168 = arith.addf %166, %167 : vector<8x128xf32>
    %169 = vector.extract_strided_slice %160 {offsets = [0, 128], sizes = [8, 128], strides = [1, 1]} : vector<8x512xf32> to vector<8x128xf32>
    %cst_97 = arith.constant 5.000000e-01 : f32
    %170 = vector.broadcast %cst_97 : f32 to vector<8x128xf32>
    %171 = arith.mulf %170, %169 : vector<8x128xf32>
    %172 = math.tanh %171 : vector<8x128xf32>
    %cst_98 = arith.constant 5.000000e-01 : f32
    %173 = vector.broadcast %cst_98 : f32 to vector<8x128xf32>
    %174 = arith.mulf %173, %172 : vector<8x128xf32>
    %cst_99 = arith.constant 5.000000e-01 : f32
    %175 = vector.broadcast %cst_99 : f32 to vector<8x128xf32>
    %176 = arith.addf %174, %175 : vector<8x128xf32>
    %177 = vector.extract_strided_slice %160 {offsets = [0, 256], sizes = [8, 128], strides = [1, 1]} : vector<8x512xf32> to vector<8x128xf32>
    %178 = math.tanh %177 : vector<8x128xf32>
    %179 = vector.extract_strided_slice %160 {offsets = [0, 384], sizes = [8, 128], strides = [1, 1]} : vector<8x512xf32> to vector<8x128xf32>
    %cst_100 = arith.constant 5.000000e-01 : f32
    %180 = vector.broadcast %cst_100 : f32 to vector<8x128xf32>
    %181 = arith.mulf %180, %179 : vector<8x128xf32>
    %182 = math.tanh %181 : vector<8x128xf32>
    %cst_101 = arith.constant 5.000000e-01 : f32
    %183 = vector.broadcast %cst_101 : f32 to vector<8x128xf32>
    %184 = arith.mulf %183, %182 : vector<8x128xf32>
    %cst_102 = arith.constant 5.000000e-01 : f32
    %185 = vector.broadcast %cst_102 : f32 to vector<8x128xf32>
    %186 = arith.addf %184, %185 : vector<8x128xf32>
    %187 = arith.mulf %176, %155 : vector<8x128xf32>
    %188 = arith.mulf %168, %178 : vector<8x128xf32>
    %189 = arith.addf %187, %188 : vector<8x128xf32>
    %190 = math.tanh %189 : vector<8x128xf32>
    %191 = arith.mulf %186, %190 : vector<8x128xf32>
    %c0_103 = arith.constant 0 : index
    %c0_104 = arith.constant 0 : index
    %192 = vector.load %arg11[%c0_103, %c0_104] : memref<8x128xf32, #tpu.memory_space<vmem>>, vector<8x128xf32>
    tpu.vector_store %arg11[%c0_103, %c0_104], %189 {strides = array<i32>} : memref<8x128xf32, #tpu.memory_space<vmem>>, vector<8x128xf32>,
    %c0_105 = arith.constant 0 : index
    %c0_106 = arith.constant 0 : index
    %193 = vector.load %arg10[%c0_105, %c0_106] : memref<8x128xf32, #tpu.memory_space<vmem>>, vector<8x128xf32>
    tpu.vector_store %arg10[%c0_105, %c0_106], %191 {strides = array<i32>} : memref<8x128xf32, #tpu.memory_space<vmem>>, vector<8x128xf32>,
    %194 = arith.index_cast %153 : i32 to index
    %c0_107 = arith.constant 0 : index
    %c0_108 = arith.constant 0 : index
    %195 = vector.load %arg9[%194, %c0_107, %c0_108] : memref<8x8x128xf32, #tpu.memory_space<vmem>>, vector<1x8x128xf32>
    %196 = vector.shape_cast %195 : vector<1x8x128xf32> to vector<8x128xf32>
    %197 = vector.shape_cast %191 : vector<8x128xf32> to vector<1x8x128xf32>
    tpu.vector_store %arg9[%194, %c0_107, %c0_108], %197 {strides = array<i32>} : memref<8x8x128xf32, #tpu.memory_space<vmem>>, vector<1x8x128xf32>,
    %c4_i32 = arith.constant 4 : i32
    %c1_i32_109 = arith.constant 1 : i32
    %198 = arith.muli %c4_i32, %c1_i32_109 : i32
    %c0_i32_110 = arith.constant 0 : i32
    %199 = arith.addi %c0_i32_110, %198 : i32
    %c0_111 = arith.constant 0 : index
    %c0_112 = arith.constant 0 : index
    %200 = vector.load %arg10[%c0_111, %c0_112] : memref<8x128xf32, #tpu.memory_space<vmem>>, vector<8x128xf32>
    %c0_113 = arith.constant 0 : index
    %c0_114 = arith.constant 0 : index
    %201 = vector.load %arg11[%c0_113, %c0_114] : memref<8x128xf32, #tpu.memory_space<vmem>>, vector<8x128xf32>
    %202 = arith.index_cast %199 : i32 to index
    %c0_115 = arith.constant 0 : index
    %c0_116 = arith.constant 0 : index
    %203 = vector.load %arg13[%202, %c0_115, %c0_116] : memref<8x8x512xf32, #tpu.memory_space<vmem>>, vector<1x8x512xf32>
    %204 = vector.shape_cast %203 : vector<1x8x512xf32> to vector<8x512xf32>
    %cst_117 = arith.constant dense<0.000000e+00> : vector<8x512xf32>
    %205 = tpu.matmul %200, %13, %cst_117 {dimension_numbers = #tpu.dot_dimension_numbers<[1], [0], [0], [1], [0, 0, 1, 1], [], []>} : vector<8x128xf32>, vector<128x512xf32>, vector<8x512xf32> -> vector<8x512xf32>
    %206 = arith.addf %204, %205 : vector<8x512xf32>
    %207 = vector.extract_strided_slice %206 {offsets = [0, 0], sizes = [8, 128], strides = [1, 1]} : vector<8x512xf32> to vector<8x128xf32>
    %cst_118 = arith.constant 5.000000e-01 : f32
    %208 = vector.broadcast %cst_118 : f32 to vector<8x128xf32>
    %209 = arith.mulf %208, %207 : vector<8x128xf32>
    %210 = math.tanh %209 : vector<8x128xf32>
    %cst_119 = arith.constant 5.000000e-01 : f32
    %211 = vector.broadcast %cst_119 : f32 to vector<8x128xf32>
    %212 = arith.mulf %211, %210 : vector<8x128xf32>
    %cst_120 = arith.constant 5.000000e-01 : f32
    %213 = vector.broadcast %cst_120 : f32 to vector<8x128xf32>
    %214 = arith.addf %212, %213 : vector<8x128xf32>
    %215 = vector.extract_strided_slice %206 {offsets = [0, 128], sizes = [8, 128], strides = [1, 1]} : vector<8x512xf32> to vector<8x128xf32>
    %cst_121 = arith.constant 5.000000e-01 : f32
    %216 = vector.broadcast %cst_121 : f32 to vector<8x128xf32>
    %217 = arith.mulf %216, %215 : vector<8x128xf32>
    %218 = math.tanh %217 : vector<8x128xf32>
    %cst_122 = arith.constant 5.000000e-01 : f32
    %219 = vector.broadcast %cst_122 : f32 to vector<8x128xf32>
    %220 = arith.mulf %219, %218 : vector<8x128xf32>
    %cst_123 = arith.constant 5.000000e-01 : f32
    %221 = vector.broadcast %cst_123 : f32 to vector<8x128xf32>
    %222 = arith.addf %220, %221 : vector<8x128xf32>
    %223 = vector.extract_strided_slice %206 {offsets = [0, 256], sizes = [8, 128], strides = [1, 1]} : vector<8x512xf32> to vector<8x128xf32>
    %224 = math.tanh %223 : vector<8x128xf32>
    %225 = vector.extract_strided_slice %206 {offsets = [0, 384], sizes = [8, 128], strides = [1, 1]} : vector<8x512xf32> to vector<8x128xf32>
    %cst_124 = arith.constant 5.000000e-01 : f32
    %226 = vector.broadcast %cst_124 : f32 to vector<8x128xf32>
    %227 = arith.mulf %226, %225 : vector<8x128xf32>
    %228 = math.tanh %227 : vector<8x128xf32>
    %cst_125 = arith.constant 5.000000e-01 : f32
    %229 = vector.broadcast %cst_125 : f32 to vector<8x128xf32>
    %230 = arith.mulf %229, %228 : vector<8x128xf32>
    %cst_126 = arith.constant 5.000000e-01 : f32
    %231 = vector.broadcast %cst_126 : f32 to vector<8x128xf32>
    %232 = arith.addf %230, %231 : vector<8x128xf32>
    %233 = arith.mulf %222, %201 : vector<8x128xf32>
    %234 = arith.mulf %214, %224 : vector<8x128xf32>
    %235 = arith.addf %233, %234 : vector<8x128xf32>
    %236 = math.tanh %235 : vector<8x128xf32>
    %237 = arith.mulf %232, %236 : vector<8x128xf32>
    %c0_127 = arith.constant 0 : index
    %c0_128 = arith.constant 0 : index
    %238 = vector.load %arg11[%c0_127, %c0_128] : memref<8x128xf32, #tpu.memory_space<vmem>>, vector<8x128xf32>
    tpu.vector_store %arg11[%c0_127, %c0_128], %235 {strides = array<i32>} : memref<8x128xf32, #tpu.memory_space<vmem>>, vector<8x128xf32>,
    %c0_129 = arith.constant 0 : index
    %c0_130 = arith.constant 0 : index
    %239 = vector.load %arg10[%c0_129, %c0_130] : memref<8x128xf32, #tpu.memory_space<vmem>>, vector<8x128xf32>
    tpu.vector_store %arg10[%c0_129, %c0_130], %237 {strides = array<i32>} : memref<8x128xf32, #tpu.memory_space<vmem>>, vector<8x128xf32>,
    %240 = arith.index_cast %199 : i32 to index
    %c0_131 = arith.constant 0 : index
    %c0_132 = arith.constant 0 : index
    %241 = vector.load %arg9[%240, %c0_131, %c0_132] : memref<8x8x128xf32, #tpu.memory_space<vmem>>, vector<1x8x128xf32>
    %242 = vector.shape_cast %241 : vector<1x8x128xf32> to vector<8x128xf32>
    %243 = vector.shape_cast %237 : vector<8x128xf32> to vector<1x8x128xf32>
    tpu.vector_store %arg9[%240, %c0_131, %c0_132], %243 {strides = array<i32>} : memref<8x8x128xf32, #tpu.memory_space<vmem>>, vector<1x8x128xf32>,
    %c5_i32 = arith.constant 5 : i32
    %c1_i32_133 = arith.constant 1 : i32
    %244 = arith.muli %c5_i32, %c1_i32_133 : i32
    %c0_i32_134 = arith.constant 0 : i32
    %245 = arith.addi %c0_i32_134, %244 : i32
    %c0_135 = arith.constant 0 : index
    %c0_136 = arith.constant 0 : index
    %246 = vector.load %arg10[%c0_135, %c0_136] : memref<8x128xf32, #tpu.memory_space<vmem>>, vector<8x128xf32>
    %c0_137 = arith.constant 0 : index
    %c0_138 = arith.constant 0 : index
    %247 = vector.load %arg11[%c0_137, %c0_138] : memref<8x128xf32, #tpu.memory_space<vmem>>, vector<8x128xf32>
    %248 = arith.index_cast %245 : i32 to index
    %c0_139 = arith.constant 0 : index
    %c0_140 = arith.constant 0 : index
    %249 = vector.load %arg13[%248, %c0_139, %c0_140] : memref<8x8x512xf32, #tpu.memory_space<vmem>>, vector<1x8x512xf32>
    %250 = vector.shape_cast %249 : vector<1x8x512xf32> to vector<8x512xf32>
    %cst_141 = arith.constant dense<0.000000e+00> : vector<8x512xf32>
    %251 = tpu.matmul %246, %13, %cst_141 {dimension_numbers = #tpu.dot_dimension_numbers<[1], [0], [0], [1], [0, 0, 1, 1], [], []>} : vector<8x128xf32>, vector<128x512xf32>, vector<8x512xf32> -> vector<8x512xf32>
    %252 = arith.addf %250, %251 : vector<8x512xf32>
    %253 = vector.extract_strided_slice %252 {offsets = [0, 0], sizes = [8, 128], strides = [1, 1]} : vector<8x512xf32> to vector<8x128xf32>
    %cst_142 = arith.constant 5.000000e-01 : f32
    %254 = vector.broadcast %cst_142 : f32 to vector<8x128xf32>
    %255 = arith.mulf %254, %253 : vector<8x128xf32>
    %256 = math.tanh %255 : vector<8x128xf32>
    %cst_143 = arith.constant 5.000000e-01 : f32
    %257 = vector.broadcast %cst_143 : f32 to vector<8x128xf32>
    %258 = arith.mulf %257, %256 : vector<8x128xf32>
    %cst_144 = arith.constant 5.000000e-01 : f32
    %259 = vector.broadcast %cst_144 : f32 to vector<8x128xf32>
    %260 = arith.addf %258, %259 : vector<8x128xf32>
    %261 = vector.extract_strided_slice %252 {offsets = [0, 128], sizes = [8, 128], strides = [1, 1]} : vector<8x512xf32> to vector<8x128xf32>
    %cst_145 = arith.constant 5.000000e-01 : f32
    %262 = vector.broadcast %cst_145 : f32 to vector<8x128xf32>
    %263 = arith.mulf %262, %261 : vector<8x128xf32>
    %264 = math.tanh %263 : vector<8x128xf32>
    %cst_146 = arith.constant 5.000000e-01 : f32
    %265 = vector.broadcast %cst_146 : f32 to vector<8x128xf32>
    %266 = arith.mulf %265, %264 : vector<8x128xf32>
    %cst_147 = arith.constant 5.000000e-01 : f32
    %267 = vector.broadcast %cst_147 : f32 to vector<8x128xf32>
    %268 = arith.addf %266, %267 : vector<8x128xf32>
    %269 = vector.extract_strided_slice %252 {offsets = [0, 256], sizes = [8, 128], strides = [1, 1]} : vector<8x512xf32> to vector<8x128xf32>
    %270 = math.tanh %269 : vector<8x128xf32>
    %271 = vector.extract_strided_slice %252 {offsets = [0, 384], sizes = [8, 128], strides = [1, 1]} : vector<8x512xf32> to vector<8x128xf32>
    %cst_148 = arith.constant 5.000000e-01 : f32
    %272 = vector.broadcast %cst_148 : f32 to vector<8x128xf32>
    %273 = arith.mulf %272, %271 : vector<8x128xf32>
    %274 = math.tanh %273 : vector<8x128xf32>
    %cst_149 = arith.constant 5.000000e-01 : f32
    %275 = vector.broadcast %cst_149 : f32 to vector<8x128xf32>
    %276 = arith.mulf %275, %274 : vector<8x128xf32>
    %cst_150 = arith.constant 5.000000e-01 : f32
    %277 = vector.broadcast %cst_150 : f32 to vector<8x128xf32>
    %278 = arith.addf %276, %277 : vector<8x128xf32>
    %279 = arith.mulf %268, %247 : vector<8x128xf32>
    %280 = arith.mulf %260, %270 : vector<8x128xf32>
    %281 = arith.addf %279, %280 : vector<8x128xf32>
    %282 = math.tanh %281 : vector<8x128xf32>
    %283 = arith.mulf %278, %282 : vector<8x128xf32>
    %c0_151 = arith.constant 0 : index
    %c0_152 = arith.constant 0 : index
    %284 = vector.load %arg11[%c0_151, %c0_152] : memref<8x128xf32, #tpu.memory_space<vmem>>, vector<8x128xf32>
    tpu.vector_store %arg11[%c0_151, %c0_152], %281 {strides = array<i32>} : memref<8x128xf32, #tpu.memory_space<vmem>>, vector<8x128xf32>,
    %c0_153 = arith.constant 0 : index
    %c0_154 = arith.constant 0 : index
    %285 = vector.load %arg10[%c0_153, %c0_154] : memref<8x128xf32, #tpu.memory_space<vmem>>, vector<8x128xf32>
    tpu.vector_store %arg10[%c0_153, %c0_154], %283 {strides = array<i32>} : memref<8x128xf32, #tpu.memory_space<vmem>>, vector<8x128xf32>,
    %286 = arith.index_cast %245 : i32 to index
    %c0_155 = arith.constant 0 : index
    %c0_156 = arith.constant 0 : index
    %287 = vector.load %arg9[%286, %c0_155, %c0_156] : memref<8x8x128xf32, #tpu.memory_space<vmem>>, vector<1x8x128xf32>
    %288 = vector.shape_cast %287 : vector<1x8x128xf32> to vector<8x128xf32>
    %289 = vector.shape_cast %283 : vector<8x128xf32> to vector<1x8x128xf32>
    tpu.vector_store %arg9[%286, %c0_155, %c0_156], %289 {strides = array<i32>} : memref<8x8x128xf32, #tpu.memory_space<vmem>>, vector<1x8x128xf32>,
    %c6_i32 = arith.constant 6 : i32
    %c1_i32_157 = arith.constant 1 : i32
    %290 = arith.muli %c6_i32, %c1_i32_157 : i32
    %c0_i32_158 = arith.constant 0 : i32
    %291 = arith.addi %c0_i32_158, %290 : i32
    %c0_159 = arith.constant 0 : index
    %c0_160 = arith.constant 0 : index
    %292 = vector.load %arg10[%c0_159, %c0_160] : memref<8x128xf32, #tpu.memory_space<vmem>>, vector<8x128xf32>
    %c0_161 = arith.constant 0 : index
    %c0_162 = arith.constant 0 : index
    %293 = vector.load %arg11[%c0_161, %c0_162] : memref<8x128xf32, #tpu.memory_space<vmem>>, vector<8x128xf32>
    %294 = arith.index_cast %291 : i32 to index
    %c0_163 = arith.constant 0 : index
    %c0_164 = arith.constant 0 : index
    %295 = vector.load %arg13[%294, %c0_163, %c0_164] : memref<8x8x512xf32, #tpu.memory_space<vmem>>, vector<1x8x512xf32>
    %296 = vector.shape_cast %295 : vector<1x8x512xf32> to vector<8x512xf32>
    %cst_165 = arith.constant dense<0.000000e+00> : vector<8x512xf32>
    %297 = tpu.matmul %292, %13, %cst_165 {dimension_numbers = #tpu.dot_dimension_numbers<[1], [0], [0], [1], [0, 0, 1, 1], [], []>} : vector<8x128xf32>, vector<128x512xf32>, vector<8x512xf32> -> vector<8x512xf32>
    %298 = arith.addf %296, %297 : vector<8x512xf32>
    %299 = vector.extract_strided_slice %298 {offsets = [0, 0], sizes = [8, 128], strides = [1, 1]} : vector<8x512xf32> to vector<8x128xf32>
    %cst_166 = arith.constant 5.000000e-01 : f32
    %300 = vector.broadcast %cst_166 : f32 to vector<8x128xf32>
    %301 = arith.mulf %300, %299 : vector<8x128xf32>
    %302 = math.tanh %301 : vector<8x128xf32>
    %cst_167 = arith.constant 5.000000e-01 : f32
    %303 = vector.broadcast %cst_167 : f32 to vector<8x128xf32>
    %304 = arith.mulf %303, %302 : vector<8x128xf32>
    %cst_168 = arith.constant 5.000000e-01 : f32
    %305 = vector.broadcast %cst_168 : f32 to vector<8x128xf32>
    %306 = arith.addf %304, %305 : vector<8x128xf32>
    %307 = vector.extract_strided_slice %298 {offsets = [0, 128], sizes = [8, 128], strides = [1, 1]} : vector<8x512xf32> to vector<8x128xf32>
    %cst_169 = arith.constant 5.000000e-01 : f32
    %308 = vector.broadcast %cst_169 : f32 to vector<8x128xf32>
    %309 = arith.mulf %308, %307 : vector<8x128xf32>
    %310 = math.tanh %309 : vector<8x128xf32>
    %cst_170 = arith.constant 5.000000e-01 : f32
    %311 = vector.broadcast %cst_170 : f32 to vector<8x128xf32>
    %312 = arith.mulf %311, %310 : vector<8x128xf32>
    %cst_171 = arith.constant 5.000000e-01 : f32
    %313 = vector.broadcast %cst_171 : f32 to vector<8x128xf32>
    %314 = arith.addf %312, %313 : vector<8x128xf32>
    %315 = vector.extract_strided_slice %298 {offsets = [0, 256], sizes = [8, 128], strides = [1, 1]} : vector<8x512xf32> to vector<8x128xf32>
    %316 = math.tanh %315 : vector<8x128xf32>
    %317 = vector.extract_strided_slice %298 {offsets = [0, 384], sizes = [8, 128], strides = [1, 1]} : vector<8x512xf32> to vector<8x128xf32>
    %cst_172 = arith.constant 5.000000e-01 : f32
    %318 = vector.broadcast %cst_172 : f32 to vector<8x128xf32>
    %319 = arith.mulf %318, %317 : vector<8x128xf32>
    %320 = math.tanh %319 : vector<8x128xf32>
    %cst_173 = arith.constant 5.000000e-01 : f32
    %321 = vector.broadcast %cst_173 : f32 to vector<8x128xf32>
    %322 = arith.mulf %321, %320 : vector<8x128xf32>
    %cst_174 = arith.constant 5.000000e-01 : f32
    %323 = vector.broadcast %cst_174 : f32 to vector<8x128xf32>
    %324 = arith.addf %322, %323 : vector<8x128xf32>
    %325 = arith.mulf %314, %293 : vector<8x128xf32>
    %326 = arith.mulf %306, %316 : vector<8x128xf32>
    %327 = arith.addf %325, %326 : vector<8x128xf32>
    %328 = math.tanh %327 : vector<8x128xf32>
    %329 = arith.mulf %324, %328 : vector<8x128xf32>
    %c0_175 = arith.constant 0 : index
    %c0_176 = arith.constant 0 : index
    %330 = vector.load %arg11[%c0_175, %c0_176] : memref<8x128xf32, #tpu.memory_space<vmem>>, vector<8x128xf32>
    tpu.vector_store %arg11[%c0_175, %c0_176], %327 {strides = array<i32>} : memref<8x128xf32, #tpu.memory_space<vmem>>, vector<8x128xf32>,
    %c0_177 = arith.constant 0 : index
    %c0_178 = arith.constant 0 : index
    %331 = vector.load %arg10[%c0_177, %c0_178] : memref<8x128xf32, #tpu.memory_space<vmem>>, vector<8x128xf32>
    tpu.vector_store %arg10[%c0_177, %c0_178], %329 {strides = array<i32>} : memref<8x128xf32, #tpu.memory_space<vmem>>, vector<8x128xf32>,
    %332 = arith.index_cast %291 : i32 to index
    %c0_179 = arith.constant 0 : index
    %c0_180 = arith.constant 0 : index
    %333 = vector.load %arg9[%332, %c0_179, %c0_180] : memref<8x8x128xf32, #tpu.memory_space<vmem>>, vector<1x8x128xf32>
    %334 = vector.shape_cast %333 : vector<1x8x128xf32> to vector<8x128xf32>
    %335 = vector.shape_cast %329 : vector<8x128xf32> to vector<1x8x128xf32>
    tpu.vector_store %arg9[%332, %c0_179, %c0_180], %335 {strides = array<i32>} : memref<8x8x128xf32, #tpu.memory_space<vmem>>, vector<1x8x128xf32>,
    %c7_i32 = arith.constant 7 : i32
    %c1_i32_181 = arith.constant 1 : i32
    %336 = arith.muli %c7_i32, %c1_i32_181 : i32
    %c0_i32_182 = arith.constant 0 : i32
    %337 = arith.addi %c0_i32_182, %336 : i32
    %c0_183 = arith.constant 0 : index
    %c0_184 = arith.constant 0 : index
    %338 = vector.load %arg10[%c0_183, %c0_184] : memref<8x128xf32, #tpu.memory_space<vmem>>, vector<8x128xf32>
    %c0_185 = arith.constant 0 : index
    %c0_186 = arith.constant 0 : index
    %339 = vector.load %arg11[%c0_185, %c0_186] : memref<8x128xf32, #tpu.memory_space<vmem>>, vector<8x128xf32>
    %340 = arith.index_cast %337 : i32 to index
    %c0_187 = arith.constant 0 : index
    %c0_188 = arith.constant 0 : index
    %341 = vector.load %arg13[%340, %c0_187, %c0_188] : memref<8x8x512xf32, #tpu.memory_space<vmem>>, vector<1x8x512xf32>
    %342 = vector.shape_cast %341 : vector<1x8x512xf32> to vector<8x512xf32>
    %cst_189 = arith.constant dense<0.000000e+00> : vector<8x512xf32>
    %343 = tpu.matmul %338, %13, %cst_189 {dimension_numbers = #tpu.dot_dimension_numbers<[1], [0], [0], [1], [0, 0, 1, 1], [], []>} : vector<8x128xf32>, vector<128x512xf32>, vector<8x512xf32> -> vector<8x512xf32>
    %344 = arith.addf %342, %343 : vector<8x512xf32>
    %345 = vector.extract_strided_slice %344 {offsets = [0, 0], sizes = [8, 128], strides = [1, 1]} : vector<8x512xf32> to vector<8x128xf32>
    %cst_190 = arith.constant 5.000000e-01 : f32
    %346 = vector.broadcast %cst_190 : f32 to vector<8x128xf32>
    %347 = arith.mulf %346, %345 : vector<8x128xf32>
    %348 = math.tanh %347 : vector<8x128xf32>
    %cst_191 = arith.constant 5.000000e-01 : f32
    %349 = vector.broadcast %cst_191 : f32 to vector<8x128xf32>
    %350 = arith.mulf %349, %348 : vector<8x128xf32>
    %cst_192 = arith.constant 5.000000e-01 : f32
    %351 = vector.broadcast %cst_192 : f32 to vector<8x128xf32>
    %352 = arith.addf %350, %351 : vector<8x128xf32>
    %353 = vector.extract_strided_slice %344 {offsets = [0, 128], sizes = [8, 128], strides = [1, 1]} : vector<8x512xf32> to vector<8x128xf32>
    %cst_193 = arith.constant 5.000000e-01 : f32
    %354 = vector.broadcast %cst_193 : f32 to vector<8x128xf32>
    %355 = arith.mulf %354, %353 : vector<8x128xf32>
    %356 = math.tanh %355 : vector<8x128xf32>
    %cst_194 = arith.constant 5.000000e-01 : f32
    %357 = vector.broadcast %cst_194 : f32 to vector<8x128xf32>
    %358 = arith.mulf %357, %356 : vector<8x128xf32>
    %cst_195 = arith.constant 5.000000e-01 : f32
    %359 = vector.broadcast %cst_195 : f32 to vector<8x128xf32>
    %360 = arith.addf %358, %359 : vector<8x128xf32>
    %361 = vector.extract_strided_slice %344 {offsets = [0, 256], sizes = [8, 128], strides = [1, 1]} : vector<8x512xf32> to vector<8x128xf32>
    %362 = math.tanh %361 : vector<8x128xf32>
    %363 = vector.extract_strided_slice %344 {offsets = [0, 384], sizes = [8, 128], strides = [1, 1]} : vector<8x512xf32> to vector<8x128xf32>
    %cst_196 = arith.constant 5.000000e-01 : f32
    %364 = vector.broadcast %cst_196 : f32 to vector<8x128xf32>
    %365 = arith.mulf %364, %363 : vector<8x128xf32>
    %366 = math.tanh %365 : vector<8x128xf32>
    %cst_197 = arith.constant 5.000000e-01 : f32
    %367 = vector.broadcast %cst_197 : f32 to vector<8x128xf32>
    %368 = arith.mulf %367, %366 : vector<8x128xf32>
    %cst_198 = arith.constant 5.000000e-01 : f32
    %369 = vector.broadcast %cst_198 : f32 to vector<8x128xf32>
    %370 = arith.addf %368, %369 : vector<8x128xf32>
    %371 = arith.mulf %360, %339 : vector<8x128xf32>
    %372 = arith.mulf %352, %362 : vector<8x128xf32>
    %373 = arith.addf %371, %372 : vector<8x128xf32>
    %374 = math.tanh %373 : vector<8x128xf32>
    %375 = arith.mulf %370, %374 : vector<8x128xf32>
    %c0_199 = arith.constant 0 : index
    %c0_200 = arith.constant 0 : index
    %376 = vector.load %arg11[%c0_199, %c0_200] : memref<8x128xf32, #tpu.memory_space<vmem>>, vector<8x128xf32>
    tpu.vector_store %arg11[%c0_199, %c0_200], %373 {strides = array<i32>} : memref<8x128xf32, #tpu.memory_space<vmem>>, vector<8x128xf32>,
    %c0_201 = arith.constant 0 : index
    %c0_202 = arith.constant 0 : index
    %377 = vector.load %arg10[%c0_201, %c0_202] : memref<8x128xf32, #tpu.memory_space<vmem>>, vector<8x128xf32>
    tpu.vector_store %arg10[%c0_201, %c0_202], %375 {strides = array<i32>} : memref<8x128xf32, #tpu.memory_space<vmem>>, vector<8x128xf32>,
    %378 = arith.index_cast %337 : i32 to index
    %c0_203 = arith.constant 0 : index
    %c0_204 = arith.constant 0 : index
    %379 = vector.load %arg9[%378, %c0_203, %c0_204] : memref<8x8x128xf32, #tpu.memory_space<vmem>>, vector<1x8x128xf32>
    %380 = vector.shape_cast %379 : vector<1x8x128xf32> to vector<8x128xf32>
    %381 = vector.shape_cast %375 : vector<8x128xf32> to vector<1x8x128xf32>
    tpu.vector_store %arg9[%378, %c0_203, %c0_204], %381 {strides = array<i32>} : memref<8x8x128xf32, #tpu.memory_space<vmem>>, vector<1x8x128xf32>,
    %c8_i32 = arith.constant 8 : i32
    return
  }
  func.func @transform_0(%arg0: i32, %arg1: i32) -> (i32, i32) {
    %c0_i32 = arith.constant 0 : i32
    %c0_i32_0 = arith.constant 0 : i32
    return %arg0, %c0_i32 : i32, i32
  }
  func.func @transform_1(%arg0: i32, %arg1: i32) -> (i32, i32) {
    %c0_i32 = arith.constant 0 : i32
    %c0_i32_0 = arith.constant 0 : i32
    %c0_i32_1 = arith.constant 0 : i32
    return %c0_i32, %c0_i32_0 : i32, i32
  }
  func.func @transform_2(%arg0: i32, %arg1: i32) -> (i32, i32) {
    %c0_i32 = arith.constant 0 : i32
    %c0_i32_0 = arith.constant 0 : i32
    %c0_i32_1 = arith.constant 0 : i32
    return %c0_i32, %c0_i32_0 : i32, i32
  }
  func.func @transform_3(%arg0: i32, %arg1: i32) -> (i32, i32) {
    %c0_i32 = arith.constant 0 : i32
    %c0_i32_0 = arith.constant 0 : i32
    %c0_i32_1 = arith.constant 0 : i32
    return %c0_i32, %c0_i32_0 : i32, i32
  }
  func.func @transform_4(%arg0: i32, %arg1: i32) -> (i32, i32, i32) {
    %c0_i32 = arith.constant 0 : i32
    %c0_i32_0 = arith.constant 0 : i32
    return %arg1, %arg0, %c0_i32 : i32, i32, i32
  }
  func.func @transform_5(%arg0: i32, %arg1: i32) -> (i32, i32) {
    %c0_i32 = arith.constant 0 : i32
    %c0_i32_0 = arith.constant 0 : i32
    %c0_i32_1 = arith.constant 0 : i32
    return %c0_i32, %c0_i32_0 : i32, i32
  }
  func.func @transform_6(%arg0: i32, %arg1: i32) -> (i32, i32) {
    %c0_i32 = arith.constant 0 : i32
    %c0_i32_0 = arith.constant 0 : i32
    %c0_i32_1 = arith.constant 0 : i32
    return %c0_i32, %c0_i32_0 : i32, i32
  }
  func.func @transform_7(%arg0: i32, %arg1: i32) -> (i32, i32, i32) {
    %c0_i32 = arith.constant 0 : i32
    %c0_i32_0 = arith.constant 0 : i32
    return %arg1, %arg0, %c0_i32 : i32, i32, i32
  }
}

module attributes {stable_mosaic.version = 11 : i64} {
  func.func @_matmul_kernel(%arg0: i32, %arg1: i32, %arg2: memref<64x128xf32, #tpu.memory_space<vmem>>, %arg3: memref<128x128xf32, #tpu.memory_space<vmem>>, %arg4: memref<64x128xf32, #tpu.memory_space<vmem>>) attributes {dimension_semantics = [#tpu.dimension_semantics<parallel>, #tpu.dimension_semantics<parallel>], iteration_bounds = array<i64: 1, 1>, scalar_prefetch = 0 : i64, scratch_operands = 0 : i64, tpu.core_type = #tpu.core_type<tc>, window_params = [{transform_indices = @transform_0, window_bounds = array<i64: 64, 128>}, {transform_indices = @transform_1, window_bounds = array<i64: 128, 128>}, {transform_indices = @transform_2, window_bounds = array<i64: 64, 128>}]} {
    %c0 = arith.constant 0 : index
    %c0_0 = arith.constant 0 : index
    %0 = vector.load %arg2[%c0, %c0_0] : memref<64x128xf32, #tpu.memory_space<vmem>>, vector<64x128xf32>
    %c0_1 = arith.constant 0 : index
    %c0_2 = arith.constant 0 : index
    %1 = vector.load %arg3[%c0_1, %c0_2] : memref<128x128xf32, #tpu.memory_space<vmem>>, vector<128x128xf32>
    %cst = arith.constant dense<0.000000e+00> : vector<64x128xf32>
    %2 = tpu.matmul %0, %1, %cst {dimension_numbers = #tpu.dot_dimension_numbers<[1], [0], [0], [1], [0, 0, 1, 1], [], []>} : vector<64x128xf32>, vector<128x128xf32>, vector<64x128xf32> -> vector<64x128xf32>
    %c0_3 = arith.constant 0 : index
    %c0_4 = arith.constant 0 : index
    %3 = vector.load %arg4[%c0_3, %c0_4] : memref<64x128xf32, #tpu.memory_space<vmem>>, vector<64x128xf32>
    tpu.vector_store %arg4[%c0_3, %c0_4], %2 {strides = array<i32>} : memref<64x128xf32, #tpu.memory_space<vmem>>, vector<64x128xf32>,
    return
  }
  func.func @transform_0(%arg0: i32, %arg1: i32) -> (i32, i32) {
    %c0_i32 = arith.constant 0 : i32
    %c0_i32_0 = arith.constant 0 : i32
    return %arg0, %c0_i32 : i32, i32
  }
  func.func @transform_1(%arg0: i32, %arg1: i32) -> (i32, i32) {
    %c0_i32 = arith.constant 0 : i32
    %c0_i32_0 = arith.constant 0 : i32
    return %c0_i32, %arg1 : i32, i32
  }
  func.func @transform_2(%arg0: i32, %arg1: i32) -> (i32, i32) {
    %c0_i32 = arith.constant 0 : i32
    return %arg0, %arg1 : i32, i32
  }
}

</mosaic_0001>

<llo_original>
// kernel: vae_decoder_forward.3
$region0: #{vae_decoder_forward.3}
  #allocation0 [shape = 'u32[]', space=smem, size = 0x4, offset = 0x4, fixed_abs, tag = 'smem constant byte address 0x4 - core index']
  #allocation1 [shape = 'u32[144,128]{1,0:T(1,128)}', space=vmem, size = 0x12000, scoped, tag = 'internal scratch']
  %s0 = inlined_call_operand.vmem [shape: f32[64,128], index: 0, kind: input, shape index: {}]
  %s1 = inlined_call_operand.vmem [shape: f32[128,128], index: 1, kind: input, shape index: {}]
  %s2 = inlined_call_operand.vmem [shape: f32[64,128], index: 2, kind: output, shape index: {}]
  %s3 = sld [smem:[#allocation0]]
  $region18: #{vae_decoder_forward.3} parent=0
    _
  %s5 = ssub.s32 1, %s3
  %s6 = scalar_select 0, %s5, %s3
  // Predicated region
  $region2: #{vae_decoder_forward.3} parent=0 // pred_check
    _
  $region3: #{vae_decoder_forward.3} parent=0 // pred_check_branch
    %8 = sbr.rel (0) target = $region5
  $region4: #{vae_decoder_forward.3} parent=0 // pred_region
    _
  $region5: #{vae_decoder_forward.3} parent=0 // pred_fallthru
    _
  // Predicated region
  $region6: #{vae_decoder_forward.3} parent=0 // pred_check
    _
  $region7: #{vae_decoder_forward.3} parent=0 // pred_check_branch
    %10 = sbr.rel (0) target = $region9
  $region8: #{vae_decoder_forward.3} parent=0 // pred_region
    _
  $region9: #{vae_decoder_forward.3} parent=0 // pred_fallthru
    _
  %v11 = vld [vmem:[%s0] sm:$0xff]
  %v12 = vld [vmem:[%s0 + $0x8] sm:$0xff]
  %v13 = vld [vmem:[%s0 + $0x10] sm:$0xff]
  %v14 = vld [vmem:[%s0 + $0x18] sm:$0xff]
  %v15 = vld [vmem:[%s0 + $0x20] sm:$0xff]
  %v16 = vld [vmem:[%s0 + $0x28] sm:$0xff]
  %v17 = vld [vmem:[%s0 + $0x30] sm:$0xff]
  %v18 = vld [vmem:[%s0 + $0x38] sm:$0xff]
  %v19 = vld [vmem:[%s1] sm:$0xff]
  %v20 = vld [vmem:[%s1 + $0x8] sm:$0xff]
  %v21 = vld [vmem:[%s1 + $0x10] sm:$0xff]
  %v22 = vld [vmem:[%s1 + $0x18] sm:$0xff]
  %v23 = vld [vmem:[%s1 + $0x20] sm:$0xff]
  %v24 = vld [vmem:[%s1 + $0x28] sm:$0xff]
  %v25 = vld [vmem:[%s1 + $0x30] sm:$0xff]
  %v26 = vld [vmem:[%s1 + $0x38] sm:$0xff]
  %v27 = vld [vmem:[%s1 + $0x40] sm:$0xff]
  %v28 = vld [vmem:[%s1 + $0x48] sm:$0xff]
  %v29 = vld [vmem:[%s1 + $0x50] sm:$0xff]
  %v30 = vld [vmem:[%s1 + $0x58] sm:$0xff]
  %v31 = vld [vmem:[%s1 + $0x60] sm:$0xff]
  %v32 = vld [vmem:[%s1 + $0x68] sm:$0xff]
  %v33 = vld [vmem:[%s1 + $0x70] sm:$0xff]
  %v34 = vld [vmem:[%s1 + $0x78] sm:$0xff]
  %35 = vmatprep.subr.mxu0 0.0
  %36 = vmatpush1.msra.mxu0 %v19
  %37 = vmatprep.subr.mxu0 0.0
  %38 = vmatpush1.msra.mxu0 %v20
  %39 = vmatprep.subr.mxu0 0.0
  %40 = vmatpush1.msra.mxu0 %v21
  %41 = vmatprep.subr.mxu0 0.0
  %42 = vmatpush1.msra.mxu0 %v22
  %43 = vmatprep.subr.mxu0 0.0
  %44 = vmatpush1.msra.mxu0 %v23
  %45 = vmatprep.subr.mxu0 0.0
  %46 = vmatpush1.msra.mxu0 %v24
  %47 = vmatprep.subr.mxu0 0.0
  %48 = vmatpush1.msra.mxu0 %v25
  %49 = vmatprep.subr.mxu0 0.0
  %50 = vmatpush1.msra.mxu0 %v26
  %51 = vmatprep.subr.mxu0 0.0
  %52 = vmatpush1.msra.mxu0 %v27
  %53 = vmatprep.subr.mxu0 0.0
  %54 = vmatpush1.msra.mxu0 %v28
  %55 = vmatprep.subr.mxu0 0.0
  %56 = vmatpush1.msra.mxu0 %v29
  %57 = vmatprep.subr.mxu0 0.0
  %58 = vmatpush1.msra.mxu0 %v30
  %59 = vmatprep.subr.mxu0 0.0
  %60 = vmatpush1.msra.mxu0 %v31
  %61 = vmatprep.subr.mxu0 0.0
  %62 = vmatpush1.msra.mxu0 %v32
  %63 = vmatprep.subr.mxu0 0.0
  %64 = vmatpush1.msra.mxu0 %v33
  %65 = vmatprep.subr.mxu0 0.0
  %66 = vmatpush1.msra.mxu0 %v34
  %67 = vmatprep.subr.mxu0 0.0
  %68 = vmatpush1.msra.mxu0 0.0
  %69 = vmatprep.subr.mxu0 0.0
  %70 = vmatpush1.msra.mxu0 0.0
  %71 = vmatprep.subr.mxu0 0.0
  %72 = vmatpush1.msra.mxu0 0.0
  %73 = vmatprep.subr.mxu0 0.0
  %74 = vmatpush1.msra.mxu0 0.0
  %75 = vmatprep.subr.mxu0 0.0
  %76 = vmatpush1.msra.mxu0 0.0
  %77 = vmatprep.subr.mxu0 0.0
  %78 = vmatpush1.msra.mxu0 0.0
  %79 = vmatprep.subr.mxu0 0.0
  %80 = vmatpush1.msra.mxu0 0.0
  %81 = vmatprep.subr.mxu0 0.0
  %82 = vmatpush1.msra.mxu0 0.0
  %83 = vmatprep.subr.mxu0 0.0
  %84 = vmatpush1.msra.mxu0 0.0
  %85 = vmatprep.subr.mxu0 0.0
  %86 = vmatpush1.msra.mxu0 0.0
  %87 = vmatprep.subr.mxu0 0.0
  %88 = vmatpush1.msra.mxu0 0.0
  %89 = vmatprep.subr.mxu0 0.0
  %90 = vmatpush1.msra.mxu0 0.0
  %91 = vmatprep.subr.mxu0 0.0
  %92 = vmatpush1.msra.mxu0 0.0
  %93 = vmatprep.subr.mxu0 0.0
  %94 = vmatpush1.msra.mxu0 0.0
  %95 = vmatprep.subr.mxu0 0.0
  %96 = vmatpush1.msra.mxu0 0.0
  %97 = vmatprep.subr.mxu0 0.0
  %98 = vmatpush1.msra.mxu0 0.0
  %99 = vmatprep.mubr.f32.mxu0 0.0
  %100 = vmatmul.mubr.f32.gmra.mrb[0].mxu0 %v11
  %v101 = vpop.f32.mrb[0].mxu0
  %v102 = vadd.f32 0.0, %v101
  %v103 = vpop.f32.mrb[0].mxu0
  %104 = vmatprep.mubr.f32.mxu0 0.0
  %105 = vmatmul.mubr.f32.gmra.mrb[0].mxu0 %v12
  %v106 = vpop.f32.mrb[0].mxu0
  %v107 = vadd.f32 0.0, %v106
  %v108 = vpop.f32.mrb[0].mxu0
  %109 = vmatprep.mubr.f32.mxu0 0.0
  %110 = vmatmul.mubr.f32.gmra.mrb[0].mxu0 %v13
  %v111 = vpop.f32.mrb[0].mxu0
  %v112 = vadd.f32 0.0, %v111
  %v113 = vpop.f32.mrb[0].mxu0
  %114 = vmatprep.mubr.f32.mxu0 0.0
  %115 = vmatmul.mubr.f32.gmra.mrb[0].mxu0 %v14
  %v116 = vpop.f32.mrb[0].mxu0
  %v117 = vadd.f32 0.0, %v116
  %v118 = vpop.f32.mrb[0].mxu0
  %119 = vmatprep.mubr.f32.mxu0 0.0
  %120 = vmatmul.mubr.f32.gmra.mrb[0].mxu0 %v15
  %v121 = vpop.f32.mrb[0].mxu0
  %v122 = vadd.f32 0.0, %v121
  %v123 = vpop.f32.mrb[0].mxu0
  %124 = vmatprep.mubr.f32.mxu0 0.0
  %125 = vmatmul.mubr.f32.gmra.mrb[0].mxu0 %v16
  %v126 = vpop.f32.mrb[0].mxu0
  %v127 = vadd.f32 0.0, %v126
  %v128 = vpop.f32.mrb[0].mxu0
  %129 = vmatprep.mubr.f32.mxu0 0.0
  %130 = vmatmul.mubr.f32.gmra.mrb[0].mxu0 %v17
  %v131 = vpop.f32.mrb[0].mxu0
  %v132 = vadd.f32 0.0, %v131
  %v133 = vpop.f32.mrb[0].mxu0
  %134 = vmatprep.mubr.f32.mxu0 0.0
  %135 = vmatmul.mubr.f32.gmra.mrb[0].mxu0 %v18
  %v136 = vpop.f32.mrb[0].mxu0
  %v137 = vadd.f32 0.0, %v136
  %v138 = vpop.f32.mrb[0].mxu0
  %139 = vdwg.mxu0
  %140 = vst [vmem:[%s2] sm:$0xff] %v102
  %141 = vst [vmem:[%s2 + $0x8] sm:$0xff] %v107
  %142 = vst [vmem:[%s2 + $0x10] sm:$0xff] %v112
  %143 = vst [vmem:[%s2 + $0x18] sm:$0xff] %v117
  %144 = vst [vmem:[%s2 + $0x20] sm:$0xff] %v122
  %145 = vst [vmem:[%s2 + $0x28] sm:$0xff] %v127
  %146 = vst [vmem:[%s2 + $0x30] sm:$0xff] %v132
  %147 = vst [vmem:[%s2 + $0x38] sm:$0xff] %v137
  // Predicated region
  $region10: #{vae_decoder_forward.3} parent=0 // pred_check
    _
  $region11: #{vae_decoder_forward.3} parent=0 // pred_check_branch
    %149 = sbr.rel (0) target = $region13
  $region12: #{vae_decoder_forward.3} parent=0 // pred_region
    _
  $region13: #{vae_decoder_forward.3} parent=0 // pred_fallthru
    _
  // Predicated region
  $region14: #{vae_decoder_forward.3} parent=0 // pred_check
    _
  $region15: #{vae_decoder_forward.3} parent=0 // pred_check_branch
    %151 = sbr.rel (0) target = $region17
  $region16: #{vae_decoder_forward.3} parent=0 // pred_region
    _
  $region17: #{vae_decoder_forward.3} parent=0 // pred_fallthru
    _

// kernel: vae_decoder_forward.2
$region0: #{vae_decoder_forward.2}
  #allocation0 [shape = 'u32[]', space=smem, size = 0x4, offset = 0x4, fixed_abs, tag = 'smem constant byte address 0x4 - core index']
  #allocation1 [shape = 'u32[144,128]{1,0:T(1,128)}', space=vmem, size = 0x12000, scoped, tag = 'internal scratch']
  #allocation2 [shape = 'f32[8,128]{1,0:T(8,128)}', space=vmem, size = 0x1000, scoped, tag = 'scratch operand']
  #allocation3 [shape = 'f32[8,128]{1,0:T(8,128)}', space=vmem, size = 0x1000, scoped, tag = 'scratch operand']
  #allocation4 [shape = 'f32[8,512]{1,0:T(8,128)}', space=vmem, size = 0x4000, scoped, tag = 'scratch operand']
  #allocation5 [shape = 'f32[8,8,512]{2,1,0:T(8,128)}', space=vmem, size = 0x20000, scoped, tag = 'scratch operand']
  %s0 = inlined_call_operand.vmem [shape: f32[8,128], index: 0, kind: input, shape index: {}]
  %s1 = inlined_call_operand.vmem [shape: f32[128,512], index: 1, kind: input, shape index: {}]
  %s2 = inlined_call_operand.vmem [shape: f32[128,128], index: 2, kind: input, shape index: {}]
  %s3 = inlined_call_operand.vmem [shape: f32[1,512], index: 3, kind: input, shape index: {}]
  %s4 = inlined_call_operand.vmem [shape: f32[8,8,128], index: 4, kind: input, shape index: {}]
  %s5 = inlined_call_operand.vmem [shape: f32[128,512], index: 5, kind: input, shape index: {}]
  %s6 = inlined_call_operand.vmem [shape: f32[128,512], index: 6, kind: input, shape index: {}]
  %s7 = inlined_call_operand.vmem [shape: f32[8,8,128], index: 7, kind: output, shape index: {}]
  %s8 = sld [smem:[#allocation0]]
  $region42: #{vae_decoder_forward.2} parent=0
    _
  %s10 = ssub.s32 1, %s8
  %s11 = scalar_select 0, %s10, %s8
  // Predicated region
  $region2: #{vae_decoder_forward.2} parent=0 // pred_check
    _
  $region3: #{vae_decoder_forward.2} parent=0 // pred_check_branch
    %13 = sbr.rel (0) target = $region5
  $region4: #{vae_decoder_forward.2} parent=0 // pred_region
    _
  $region5: #{vae_decoder_forward.2} parent=0 // pred_fallthru
    _
  // Predicated region
  $region6: #{vae_decoder_forward.2} parent=0 // pred_check
    _
  $region7: #{vae_decoder_forward.2} parent=0 // pred_check_branch
    %15 = sbr.rel (0) target = $region9
  $region8: #{vae_decoder_forward.2} parent=0 // pred_region
    _
  $region9: #{vae_decoder_forward.2} parent=0 // pred_fallthru
    _
  // Predicated region
  $region10: #{vae_decoder_forward.2} parent=0 // pred_check
    _
  $region11: #{vae_decoder_forward.2} parent=0 // pred_check_branch
    %17 = sbr.rel (0) target = $region13
  $region12: #{vae_decoder_forward.2} parent=0 // pred_region
    _
  $region13: #{vae_decoder_forward.2} parent=0 // pred_fallthru
    _
  // Predicated region
  $region14: #{vae_decoder_forward.2} parent=0 // pred_check
    _
  $region15: #{vae_decoder_forward.2} parent=0 // pred_check_branch
    %19 = sbr.rel (0) target = $region17
  $region16: #{vae_decoder_forward.2} parent=0 // pred_region
    _
  $region17: #{vae_decoder_forward.2} parent=0 // pred_fallthru
    _
  // Predicated region
  $region18: #{vae_decoder_forward.2} parent=0 // pred_check
    _
  $region19: #{vae_decoder_forward.2} parent=0 // pred_check_branch
    %21 = sbr.rel (0) target = $region21
  $region20: #{vae_decoder_forward.2} parent=0 // pred_region
    _
  $region21: #{vae_decoder_forward.2} parent=0 // pred_fallthru
    _
  // Predicated region
  $region22: #{vae_decoder_forward.2} parent=0 // pred_check
    _
  $region23: #{vae_decoder_forward.2} parent=0 // pred_check_branch
    %23 = sbr.rel (0) target = $region25
  $region24: #{vae_decoder_forward.2} parent=0 // pred_region
    _
  $region25: #{vae_decoder_forward.2} parent=0 // pred_fallthru
    _
  // Predicated region
  $region26: #{vae_decoder_forward.2} parent=0 // pred_check
    _
  $region27: #{vae_decoder_forward.2} parent=0 // pred_check_branch
    %25 = sbr.rel (0) target = $region29
  $region28: #{vae_decoder_forward.2} parent=0 // pred_region
    _
  $region29: #{vae_decoder_forward.2} parent=0 // pred_fallthru
    _
  %p26 = scmp.eq.s32.totalorder 0, 0
  // Predicated region
  $region30: #{vae_decoder_forward.2} parent=0 // pred_check
    %p27 = pneg %p26
  $region31: #{vae_decoder_forward.2} parent=0 // pred_check_branch
    %29 = sbr.rel (%p27) target = $region33
  $region32: #{vae_decoder_forward.2} parent=0 // pred_region
    %v30 = vld [vmem:[%s0] sm:$0xff]
    %v31 = vld [vmem:[%s2] sm:$0xff]
    %v32 = vld [vmem:[%s2 + $0x8] sm:$0xff]
    %v33 = vld [vmem:[%s2 + $0x10] sm:$0xff]
    %v34 = vld [vmem:[%s2 + $0x18] sm:$0xff]
    %v35 = vld [vmem:[%s2 + $0x20] sm:$0xff]
    %v36 = vld [vmem:[%s2 + $0x28] sm:$0xff]
    %v37 = vld [vmem:[%s2 + $0x30] sm:$0xff]
    %v38 = vld [vmem:[%s2 + $0x38] sm:$0xff]
    %v39 = vld [vmem:[%s2 + $0x40] sm:$0xff]
    %v40 = vld [vmem:[%s2 + $0x48] sm:$0xff]
    %v41 = vld [vmem:[%s2 + $0x50] sm:$0xff]
    %v42 = vld [vmem:[%s2 + $0x58] sm:$0xff]
    %v43 = vld [vmem:[%s2 + $0x60] sm:$0xff]
    %v44 = vld [vmem:[%s2 + $0x68] sm:$0xff]
    %v45 = vld [vmem:[%s2 + $0x70] sm:$0xff]
    %v46 = vld [vmem:[%s2 + $0x78] sm:$0xff]
    %47 = vmatprep.subr.mxu0 0.0
    %48 = vmatpush1.msra.mxu0 %v31
    %49 = vmatprep.subr.mxu0 0.0
    %50 = vmatpush1.msra.mxu0 %v32
    %51 = vmatprep.subr.mxu0 0.0
    %52 = vmatpush1.msra.mxu0 %v33
    %53 = vmatprep.subr.mxu0 0.0
    %54 = vmatpush1.msra.mxu0 %v34
    %55 = vmatprep.subr.mxu0 0.0
    %56 = vmatpush1.msra.mxu0 %v35
    %57 = vmatprep.subr.mxu0 0.0
    %58 = vmatpush1.msra.mxu0 %v36
    %59 = vmatprep.subr.mxu0 0.0
    %60 = vmatpush1.msra.mxu0 %v37
    %61 = vmatprep.subr.mxu0 0.0
    %62 = vmatpush1.msra.mxu0 %v38
    %63 = vmatprep.subr.mxu0 0.0
    %64 = vmatpush1.msra.mxu0 %v39
    %65 = vmatprep.subr.mxu0 0.0
    %66 = vmatpush1.msra.mxu0 %v40
    %67 = vmatprep.subr.mxu0 0.0
    %68 = vmatpush1.msra.mxu0 %v41
    %69 = vmatprep.subr.mxu0 0.0
    %70 = vmatpush1.msra.mxu0 %v42
    %71 = vmatprep.subr.mxu0 0.0
    %72 = vmatpush1.msra.mxu0 %v43
    %73 = vmatprep.subr.mxu0 0.0
    %74 = vmatpush1.msra.mxu0 %v44
    %75 = vmatprep.subr.mxu0 0.0
    %76 = vmatpush1.msra.mxu0 %v45
    %77 = vmatprep.subr.mxu0 0.0
    %78 = vmatpush1.msra.mxu0 %v46
    %79 = vmatprep.subr.mxu0 0.0
    %80 = vmatpush1.msra.mxu0 0.0
    %81 = vmatprep.subr.mxu0 0.0
    %82 = vmatpush1.msra.mxu0 0.0
    %83 = vmatprep.subr.mxu0 0.0
    %84 = vmatpush1.msra.mxu0 0.0
    %85 = vmatprep.subr.mxu0 0.0
    %86 = vmatpush1.msra.mxu0 0.0
    %87 = vmatprep.subr.mxu0 0.0
    %88 = vmatpush1.msra.mxu0 0.0
    %89 = vmatprep.subr.mxu0 0.0
    %90 = vmatpush1.msra.mxu0 0.0
    %91 = vmatprep.subr.mxu0 0.0
    %92 = vmatpush1.msra.mxu0 0.0
    %93 = vmatprep.subr.mxu0 0.0
    %94 = vmatpush1.msra.mxu0 0.0
    %95 = vmatprep.subr.mxu0 0.0
    %96 = vmatpush1.msra.mxu0 0.0
    %97 = vmatprep.subr.mxu0 0.0
    %98 = vmatpush1.msra.mxu0 0.0
    %99 = vmatprep.subr.mxu0 0.0
    %100 = vmatpush1.msra.mxu0 0.0
    %101 = vmatprep.subr.mxu0 0.0
    %102 = vmatpush1.msra.mxu0 0.0
    %103 = vmatprep.subr.mxu0 0.0
    %104 = vmatpush1.msra.mxu0 0.0
    %105 = vmatprep.subr.mxu0 0.0
    %106 = vmatpush1.msra.mxu0 0.0
    %107 = vmatprep.subr.mxu0 0.0
    %108 = vmatpush1.msra.mxu0 0.0
    %109 = vmatprep.subr.mxu0 0.0
    %110 = vmatpush1.msra.mxu0 0.0
    %111 = vmatprep.mubr.f32.mxu0 0.0
    %112 = vmatmul.mubr.f32.gmra.mrb[0].mxu0 %v30
    %v113 = vpop.f32.mrb[0].mxu0
    %v114 = vadd.f32 0.0, %v113
    %v115 = vpop.f32.mrb[0].mxu0
    %116 = vdwg.mxu0
    %117 = vst [vmem:[#allocation3] sm:$0xff] %v114
    %v118 = vtanh.pop %v114
    %119 = vst [vmem:[#allocation2] sm:$0xff] %v118
    %v120 = vld [vmem:[%s0] sm:$0xff]
    %v121 = vld [vmem:[%s1] sm:$0xff]
    %v122 = vld [vmem:[%s1 + $0x8] sm:$0xff]
    %v123 = vld [vmem:[%s1 + $0x10] sm:$0xff]
    %v124 = vld [vmem:[%s1 + $0x18] sm:$0xff]
    %v125 = vld [vmem:[%s1 + $0x20] sm:$0xff]
    %v126 = vld [vmem:[%s1 + $0x28] sm:$0xff]
    %v127 = vld [vmem:[%s1 + $0x30] sm:$0xff]
    %v128 = vld [vmem:[%s1 + $0x38] sm:$0xff]
    %v129 = vld [vmem:[%s1 + $0x40] sm:$0xff]
    %v130 = vld [vmem:[%s1 + $0x48] sm:$0xff]
    %v131 = vld [vmem:[%s1 + $0x50] sm:$0xff]
    %v132 = vld [vmem:[%s1 + $0x58] sm:$0xff]
    %v133 = vld [vmem:[%s1 + $0x60] sm:$0xff]
    %v134 = vld [vmem:[%s1 + $0x68] sm:$0xff]
    %v135 = vld [vmem:[%s1 + $0x70] sm:$0xff]
    %v136 = vld [vmem:[%s1 + $0x78] sm:$0xff]
    %v137 = vld [vmem:[%s1 + $0x80] sm:$0xff]
    %v138 = vld [vmem:[%s1 + $0x88] sm:$0xff]
    %v139 = vld [vmem:[%s1 + $0x90] sm:$0xff]
    %v140 = vld [vmem:[%s1 + $0x98] sm:$0xff]
    %v141 = vld [vmem:[%s1 + $0xa0] sm:$0xff]
    %v142 = vld [vmem:[%s1 + $0xa8] sm:$0xff]
    %v143 = vld [vmem:[%s1 + $0xb0] sm:$0xff]
    %v144 = vld [vmem:[%s1 + $0xb8] sm:$0xff]
    %v145 = vld [vmem:[%s1 + $0xc0] sm:$0xff]
    %v146 = vld [vmem:[%s1 + $0xc8] sm:$0xff]
    %v147 = vld [vmem:[%s1 + $0xd0] sm:$0xff]
    %v148 = vld [vmem:[%s1 + $0xd8] sm:$0xff]
    %v149 = vld [vmem:[%s1 + $0xe0] sm:$0xff]
    %v150 = vld [vmem:[%s1 + $0xe8] sm:$0xff]
    %v151 = vld [vmem:[%s1 + $0xf0] sm:$0xff]
    %v152 = vld [vmem:[%s1 + $0xf8] sm:$0xff]
    %v153 = vld [vmem:[%s1 + $0x100] sm:$0xff]
    %v154 = vld [vmem:[%s1 + $0x108] sm:$0xff]
    %v155 = vld [vmem:[%s1 + $0x110] sm:$0xff]
    %v156 = vld [vmem:[%s1 + $0x118] sm:$0xff]
    %v157 = vld [vmem:[%s1 + $0x120] sm:$0xff]
    %v158 = vld [vmem:[%s1 + $0x128] sm:$0xff]
    %v159 = vld [vmem:[%s1 + $0x130] sm:$0xff]
    %v160 = vld [vmem:[%s1 + $0x138] sm:$0xff]
    %v161 = vld [vmem:[%s1 + $0x140] sm:$0xff]
    %v162 = vld [vmem:[%s1 + $0x148] sm:$0xff]
    %v163 = vld [vmem:[%s1 + $0x150] sm:$0xff]
    %v164 = vld [vmem:[%s1 + $0x158] sm:$0xff]
    %v165 = vld [vmem:[%s1 + $0x160] sm:$0xff]
    %v166 = vld [vmem:[%s1 + $0x168] sm:$0xff]
    %v167 = vld [vmem:[%s1 + $0x170] sm:$0xff]
    %v168 = vld [vmem:[%s1 + $0x178] sm:$0xff]
    %v169 = vld [vmem:[%s1 + $0x180] sm:$0xff]
    %v170 = vld [vmem:[%s1 + $0x188] sm:$0xff]
    %v171 = vld [vmem:[%s1 + $0x190] sm:$0xff]
    %v172 = vld [vmem:[%s1 + $0x198] sm:$0xff]
    %v173 = vld [vmem:[%s1 + $0x1a0] sm:$0xff]
    %v174 = vld [vmem:[%s1 + $0x1a8] sm:$0xff]
    %v175 = vld [vmem:[%s1 + $0x1b0] sm:$0xff]
    %v176 = vld [vmem:[%s1 + $0x1b8] sm:$0xff]
    %v177 = vld [vmem:[%s1 + $0x1c0] sm:$0xff]
    %v178 = vld [vmem:[%s1 + $0x1c8] sm:$0xff]
    %v179 = vld [vmem:[%s1 + $0x1d0] sm:$0xff]
    %v180 = vld [vmem:[%s1 + $0x1d8] sm:$0xff]
    %v181 = vld [vmem:[%s1 + $0x1e0] sm:$0xff]
    %v182 = vld [vmem:[%s1 + $0x1e8] sm:$0xff]
    %v183 = vld [vmem:[%s1 + $0x1f0] sm:$0xff]
    %v184 = vld [vmem:[%s1 + $0x1f8] sm:$0xff]
    %v185 = vld [vmem:[%s3] sm:$0xf]
    %v187 = vlaneseq
    %v188 = vshrl.u32 %v187, 7
    %v189 = vsub.s32 0, %v188
    %v190 = vrot.slane %v185, %v189
    %v191 = vlaneseq
    %v192 = vshrl.u32 %v191, 7
    %v193 = vsub.s32 1, %v192
    %v194 = vrot.slane %v185, %v193
    %v195 = vlaneseq
    %v196 = vshrl.u32 %v195, 7
    %v197 = vsub.s32 2, %v196
    %v198 = vrot.slane %v185, %v197
    %v199 = vlaneseq
    %v200 = vshrl.u32 %v199, 7
    %v201 = vsub.s32 3, %v200
    %v202 = vrot.slane %v185, %v201
    %207 = vmatprep.subr.mxu0 %v122
    %208 = vmatpush1.msra.mxu0 %v121
    %209 = vmatprep.subr.mxu0 %v126
    %210 = vmatpush1.msra.mxu0 %v125
    %211 = vmatprep.subr.mxu0 %v130
    %212 = vmatpush1.msra.mxu0 %v129
    %213 = vmatprep.subr.mxu0 %v134
    %214 = vmatpush1.msra.mxu0 %v133
    %215 = vmatprep.subr.mxu0 %v138
    %216 = vmatpush1.msra.mxu0 %v137
    %217 = vmatprep.subr.mxu0 %v142
    %218 = vmatpush1.msra.mxu0 %v141
    %219 = vmatprep.subr.mxu0 %v146
    %220 = vmatpush1.msra.mxu0 %v145
    %221 = vmatprep.subr.mxu0 %v150
    %222 = vmatpush1.msra.mxu0 %v149
    %223 = vmatprep.subr.mxu0 %v154
    %224 = vmatpush1.msra.mxu0 %v153
    %225 = vmatprep.subr.mxu0 %v158
    %226 = vmatpush1.msra.mxu0 %v157
    %227 = vmatprep.subr.mxu0 %v162
    %228 = vmatpush1.msra.mxu0 %v161
    %229 = vmatprep.subr.mxu0 %v166
    %230 = vmatpush1.msra.mxu0 %v165
    %231 = vmatprep.subr.mxu0 %v170
    %232 = vmatpush1.msra.mxu0 %v169
    %233 = vmatprep.subr.mxu0 %v174
    %234 = vmatpush1.msra.mxu0 %v173
    %235 = vmatprep.subr.mxu0 %v178
    %236 = vmatpush1.msra.mxu0 %v177
    %237 = vmatprep.subr.mxu0 %v182
    %238 = vmatpush1.msra.mxu0 %v181
    %239 = vmatprep.subr.mxu0 0.0
    %240 = vmatpush1.msra.mxu0 0.0
    %241 = vmatprep.subr.mxu0 0.0
    %242 = vmatpush1.msra.mxu0 0.0
    %243 = vmatprep.subr.mxu0 0.0
    %244 = vmatpush1.msra.mxu0 0.0
    %245 = vmatprep.subr.mxu0 0.0
    %246 = vmatpush1.msra.mxu0 0.0
    %247 = vmatprep.subr.mxu0 0.0
    %248 = vmatpush1.msra.mxu0 0.0
    %249 = vmatprep.subr.mxu0 0.0
    %250 = vmatpush1.msra.mxu0 0.0
    %251 = vmatprep.subr.mxu0 0.0
    %252 = vmatpush1.msra.mxu0 0.0
    %253 = vmatprep.subr.mxu0 0.0
    %254 = vmatpush1.msra.mxu0 0.0
    %255 = vmatprep.subr.mxu0 0.0
    %256 = vmatpush1.msra.mxu0 0.0
    %257 = vmatprep.subr.mxu0 0.0
    %258 = vmatpush1.msra.mxu0 0.0
    %259 = vmatprep.subr.mxu0 0.0
    %260 = vmatpush1.msra.mxu0 0.0
    %261 = vmatprep.subr.mxu0 0.0
    %262 = vmatpush1.msra.mxu0 0.0
    %263 = vmatprep.subr.mxu0 0.0
    %264 = vmatpush1.msra.mxu0 0.0
    %265 = vmatprep.subr.mxu0 0.0
    %266 = vmatpush1.msra.mxu0 0.0
    %267 = vmatprep.subr.mxu0 0.0
    %268 = vmatpush1.msra.mxu0 0.0
    %269 = vmatprep.subr.mxu0 0.0
    %270 = vmatpush1.msra.mxu0 0.0
    %271 = vmatprep.mubr.f32.mxu0 0.0
    %272 = vmatmul.mubr.f32.gmra.mrb[0].mxu0 %v120
    %v273 = vpop.f32.mrb[0].mxu0
    %v274 = vadd.f32 %v190, %v273
    %v275 = vpop.f32.mrb[0].mxu0
    %v276 = vadd.f32 %v194, %v275
    %277 = vdwg.mxu0
    %278 = vmatprep.subr.mxu0 %v124
    %279 = vmatpush1.msra.mxu0 %v123
    %280 = vmatprep.subr.mxu0 %v128
    %281 = vmatpush1.msra.mxu0 %v127
    %282 = vmatprep.subr.mxu0 %v132
    %283 = vmatpush1.msra.mxu0 %v131
    %284 = vmatprep.subr.mxu0 %v136
    %285 = vmatpush1.msra.mxu0 %v135
    %286 = vmatprep.subr.mxu0 %v140
    %287 = vmatpush1.msra.mxu0 %v139
    %288 = vmatprep.subr.mxu0 %v144
    %289 = vmatpush1.msra.mxu0 %v143
    %290 = vmatprep.subr.mxu0 %v148
    %291 = vmatpush1.msra.mxu0 %v147
    %292 = vmatprep.subr.mxu0 %v152
    %293 = vmatpush1.msra.mxu0 %v151
    %294 = vmatprep.subr.mxu0 %v156
    %295 = vmatpush1.msra.mxu0 %v155
    %296 = vmatprep.subr.mxu0 %v160
    %297 = vmatpush1.msra.mxu0 %v159
    %298 = vmatprep.subr.mxu0 %v164
    %299 = vmatpush1.msra.mxu0 %v163
    %300 = vmatprep.subr.mxu0 %v168
    %301 = vmatpush1.msra.mxu0 %v167
    %302 = vmatprep.subr.mxu0 %v172
    %303 = vmatpush1.msra.mxu0 %v171
    %304 = vmatprep.subr.mxu0 %v176
    %305 = vmatpush1.msra.mxu0 %v175
    %306 = vmatprep.subr.mxu0 %v180
    %307 = vmatpush1.msra.mxu0 %v179
    %308 = vmatprep.subr.mxu0 %v184
    %309 = vmatpush1.msra.mxu0 %v183
    %310 = vmatprep.subr.mxu0 0.0
    %311 = vmatpush1.msra.mxu0 0.0
    %312 = vmatprep.subr.mxu0 0.0
    %313 = vmatpush1.msra.mxu0 0.0
    %314 = vmatprep.subr.mxu0 0.0
    %315 = vmatpush1.msra.mxu0 0.0
    %316 = vmatprep.subr.mxu0 0.0
    %317 = vmatpush1.msra.mxu0 0.0
    %318 = vmatprep.subr.mxu0 0.0
    %319 = vmatpush1.msra.mxu0 0.0
    %320 = vmatprep.subr.mxu0 0.0
    %321 = vmatpush1.msra.mxu0 0.0
    %322 = vmatprep.subr.mxu0 0.0
    %323 = vmatpush1.msra.mxu0 0.0
    %324 = vmatprep.subr.mxu0 0.0
    %325 = vmatpush1.msra.mxu0 0.0
    %326 = vmatprep.subr.mxu0 0.0
    %327 = vmatpush1.msra.mxu0 0.0
    %328 = vmatprep.subr.mxu0 0.0
    %329 = vmatpush1.msra.mxu0 0.0
    %330 = vmatprep.subr.mxu0 0.0
    %331 = vmatpush1.msra.mxu0 0.0
    %332 = vmatprep.subr.mxu0 0.0
    %333 = vmatpush1.msra.mxu0 0.0
    %334 = vmatprep.subr.mxu0 0.0
    %335 = vmatpush1.msra.mxu0 0.0
    %336 = vmatprep.subr.mxu0 0.0
    %337 = vmatpush1.msra.mxu0 0.0
    %338 = vmatprep.subr.mxu0 0.0
    %339 = vmatpush1.msra.mxu0 0.0
    %340 = vmatprep.subr.mxu0 0.0
    %341 = vmatpush1.msra.mxu0 0.0
    %342 = vmatprep.mubr.f32.mxu0 0.0
    %343 = vmatmul.mubr.f32.gmra.mrb[0].mxu0 %v120
    %v344 = vpop.f32.mrb[0].mxu0
    %v345 = vadd.f32 %v198, %v344
    %v346 = vpop.f32.mrb[0].mxu0
    %v347 = vadd.f32 %v202, %v346
    %348 = vdwg.mxu0
    %349 = vst [vmem:[#allocation4] sm:$0xff] %v274
    %350 = vst [vmem:[#allocation4 + $0x8] sm:$0xff] %v276
    %351 = vst [vmem:[#allocation4 + $0x10] sm:$0xff] %v345
    %352 = vst [vmem:[#allocation4 + $0x18] sm:$0xff] %v347
  $region33: #{vae_decoder_forward.2} parent=0 // pred_fallthru
    _
  %v353 = vld [vmem:[%s4] sm:$0xff]
  %v354 = vld [vmem:[%s4 + $0x8] sm:$0xff]
  %v355 = vld [vmem:[%s4 + $0x10] sm:$0xff]
  %v356 = vld [vmem:[%s4 + $0x18] sm:$0xff]
  %v357 = vld [vmem:[%s4 + $0x20] sm:$0xff]
  %v358 = vld [vmem:[%s4 + $0x28] sm:$0xff]
  %v359 = vld [vmem:[%s4 + $0x30] sm:$0xff]
  %v360 = vld [vmem:[%s4 + $0x38] sm:$0xff]
  %v361 = vld [vmem:[%s5] sm:$0xff]
  %v362 = vld [vmem:[%s5 + $0x8] sm:$0xff]
  %v363 = vld [vmem:[%s5 + $0x10] sm:$0xff]
  %v364 = vld [vmem:[%s5 + $0x18] sm:$0xff]
  %v365 = vld [vmem:[%s5 + $0x20] sm:$0xff]
  %v366 = vld [vmem:[%s5 + $0x28] sm:$0xff]
  %v367 = vld [vmem:[%s5 + $0x30] sm:$0xff]
  %v368 = vld [vmem:[%s5 + $0x38] sm:$0xff]
  %v369 = vld [vmem:[%s5 + $0x40] sm:$0xff]
  %v370 = vld [vmem:[%s5 + $0x48] sm:$0xff]
  %v371 = vld [vmem:[%s5 + $0x50] sm:$0xff]
  %v372 = vld [vmem:[%s5 + $0x58] sm:$0xff]
  %v373 = vld [vmem:[%s5 + $0x60] sm:$0xff]
  %v374 = vld [vmem:[%s5 + $0x68] sm:$0xff]
  %v375 = vld [vmem:[%s5 + $0x70] sm:$0xff]
  %v376 = vld [vmem:[%s5 + $0x78] sm:$0xff]
  %v377 = vld [vmem:[%s5 + $0x80] sm:$0xff]
  %v378 = vld [vmem:[%s5 + $0x88] sm:$0xff]
  %v379 = vld [vmem:[%s5 + $0x90] sm:$0xff]
  %v380 = vld [vmem:[%s5 + $0x98] sm:$0xff]
  %v381 = vld [vmem:[%s5 + $0xa0] sm:$0xff]
  %v382 = vld [vmem:[%s5 + $0xa8] sm:$0xff]
  %v383 = vld [vmem:[%s5 + $0xb0] sm:$0xff]
  %v384 = vld [vmem:[%s5 + $0xb8] sm:$0xff]
  %v385 = vld [vmem:[%s5 + $0xc0] sm:$0xff]
  %v386 = vld [vmem:[%s5 + $0xc8] sm:$0xff]
  %v387 = vld [vmem:[%s5 + $0xd0] sm:$0xff]
  %v388 = vld [vmem:[%s5 + $0xd8] sm:$0xff]
  %v389 = vld [vmem:[%s5 + $0xe0] sm:$0xff]
  %v390 = vld [vmem:[%s5 + $0xe8] sm:$0xff]
  %v391 = vld [vmem:[%s5 + $0xf0] sm:$0xff]
  %v392 = vld [vmem:[%s5 + $0xf8] sm:$0xff]
  %v393 = vld [vmem:[%s5 + $0x100] sm:$0xff]
  %v394 = vld [vmem:[%s5 + $0x108] sm:$0xff]
  %v395 = vld [vmem:[%s5 + $0x110] sm:$0xff]
  %v396 = vld [vmem:[%s5 + $0x118] sm:$0xff]
  %v397 = vld [vmem:[%s5 + $0x120] sm:$0xff]
  %v398 = vld [vmem:[%s5 + $0x128] sm:$0xff]
  %v399 = vld [vmem:[%s5 + $0x130] sm:$0xff]
  %v400 = vld [vmem:[%s5 + $0x138] sm:$0xff]
  %v401 = vld [vmem:[%s5 + $0x140] sm:$0xff]
  %v402 = vld [vmem:[%s5 + $0x148] sm:$0xff]
  %v403 = vld [vmem:[%s5 + $0x150] sm:$0xff]
  %v404 = vld [vmem:[%s5 + $0x158] sm:$0xff]
  %v405 = vld [vmem:[%s5 + $0x160] sm:$0xff]
  %v406 = vld [vmem:[%s5 + $0x168] sm:$0xff]
  %v407 = vld [vmem:[%s5 + $0x170] sm:$0xff]
  %v408 = vld [vmem:[%s5 + $0x178] sm:$0xff]
  %v409 = vld [vmem:[%s5 + $0x180] sm:$0xff]
  %v410 = vld [vmem:[%s5 + $0x188] sm:$0xff]
  %v411 = vld [vmem:[%s5 + $0x190] sm:$0xff]
  %v412 = vld [vmem:[%s5 + $0x198] sm:$0xff]
  %v413 = vld [vmem:[%s5 + $0x1a0] sm:$0xff]
  %v414 = vld [vmem:[%s5 + $0x1a8] sm:$0xff]
  %v415 = vld [vmem:[%s5 + $0x1b0] sm:$0xff]
  %v416 = vld [vmem:[%s5 + $0x1b8] sm:$0xff]
  %v417 = vld [vmem:[%s5 + $0x1c0] sm:$0xff]
  %v418 = vld [vmem:[%s5 + $0x1c8] sm:$0xff]
  %v419 = vld [vmem:[%s5 + $0x1d0] sm:$0xff]
  %v420 = vld [vmem:[%s5 + $0x1d8] sm:$0xff]
  %v421 = vld [vmem:[%s5 + $0x1e0] sm:$0xff]
  %v422 = vld [vmem:[%s5 + $0x1e8] sm:$0xff]
  %v423 = vld [vmem:[%s5 + $0x1f0] sm:$0xff]
  %v424 = vld [vmem:[%s5 + $0x1f8] sm:$0xff]
  %425 = vmatprep.subr.mxu0 %v362
  %426 = vmatpush1.msra.mxu0 %v361
  %427 = vmatprep.subr.mxu0 %v366
  %428 = vmatpush1.msra.mxu0 %v365
  %429 = vmatprep.subr.mxu0 %v370
  %430 = vmatpush1.msra.mxu0 %v369
  %431 = vmatprep.subr.mxu0 %v374
  %432 = vmatpush1.msra.mxu0 %v373
  %433 = vmatprep.subr.mxu0 %v378
  %434 = vmatpush1.msra.mxu0 %v377
  %435 = vmatprep.subr.mxu0 %v382
  %436 = vmatpush1.msra.mxu0 %v381
  %437 = vmatprep.subr.mxu0 %v386
  %438 = vmatpush1.msra.mxu0 %v385
  %439 = vmatprep.subr.mxu0 %v390
  %440 = vmatpush1.msra.mxu0 %v389
  %441 = vmatprep.subr.mxu0 %v394
  %442 = vmatpush1.msra.mxu0 %v393
  %443 = vmatprep.subr.mxu0 %v398
  %444 = vmatpush1.msra.mxu0 %v397
  %445 = vmatprep.subr.mxu0 %v402
  %446 = vmatpush1.msra.mxu0 %v401
  %447 = vmatprep.subr.mxu0 %v406
  %448 = vmatpush1.msra.mxu0 %v405
  %449 = vmatprep.subr.mxu0 %v410
  %450 = vmatpush1.msra.mxu0 %v409
  %451 = vmatprep.subr.mxu0 %v414
  %452 = vmatpush1.msra.mxu0 %v413
  %453 = vmatprep.subr.mxu0 %v418
  %454 = vmatpush1.msra.mxu0 %v417
  %455 = vmatprep.subr.mxu0 %v422
  %456 = vmatpush1.msra.mxu0 %v421
  %457 = vmatprep.subr.mxu0 0.0
  %458 = vmatpush1.msra.mxu0 0.0
  %459 = vmatprep.subr.mxu0 0.0
  %460 = vmatpush1.msra.mxu0 0.0
  %461 = vmatprep.subr.mxu0 0.0
  %462 = vmatpush1.msra.mxu0 0.0
  %463 = vmatprep.subr.mxu0 0.0
  %464 = vmatpush1.msra.mxu0 0.0
  %465 = vmatprep.subr.mxu0 0.0
  %466 = vmatpush1.msra.mxu0 0.0
  %467 = vmatprep.subr.mxu0 0.0
  %468 = vmatpush1.msra.mxu0 0.0
  %469 = vmatprep.subr.mxu0 0.0
  %470 = vmatpush1.msra.mxu0 0.0
  %471 = vmatprep.subr.mxu0 0.0
  %472 = vmatpush1.msra.mxu0 0.0
  %473 = vmatprep.subr.mxu0 0.0
  %474 = vmatpush1.msra.mxu0 0.0
  %475 = vmatprep.subr.mxu0 0.0
  %476 = vmatpush1.msra.mxu0 0.0
  %477 = vmatprep.subr.mxu0 0.0
  %478 = vmatpush1.msra.mxu0 0.0
  %479 = vmatprep.subr.mxu0 0.0
  %480 = vmatpush1.msra.mxu0 0.0
  %481 = vmatprep.subr.mxu0 0.0
  %482 = vmatpush1.msra.mxu0 0.0
  %483 = vmatprep.subr.mxu0 0.0
  %484 = vmatpush1.msra.mxu0 0.0
  %485 = vmatprep.subr.mxu0 0.0
  %486 = vmatpush1.msra.mxu0 0.0
  %487 = vmatprep.subr.mxu0 0.0
  %488 = vmatpush1.msra.mxu0 0.0
  %489 = vmatprep.mubr.f32.mxu0 0.0
  %490 = vmatmul.mubr.f32.gmra.mrb[0].mxu0 %v353
  %v491 = vpop.f32.mrb[0].mxu0
  %v492 = vadd.f32 0.0, %v491
  %v493 = vpop.f32.mrb[0].mxu0
  %v494 = vadd.f32 0.0, %v493
  %495 = vmatprep.mubr.f32.mxu0 0.0
  %496 = vmatmul.mubr.f32.gmra.mrb[0].mxu0 %v354
  %v497 = vpop.f32.mrb[0].mxu0
  %v498 = vadd.f32 0.0, %v497
  %v499 = vpop.f32.mrb[0].mxu0
  %v500 = vadd.f32 0.0, %v499
  %501 = vmatprep.mubr.f32.mxu0 0.0
  %502 = vmatmul.mubr.f32.gmra.mrb[0].mxu0 %v355
  %v503 = vpop.f32.mrb[0].mxu0
  %v504 = vadd.f32 0.0, %v503
  %v505 = vpop.f32.mrb[0].mxu0
  %v506 = vadd.f32 0.0, %v505
  %507 = vmatprep.mubr.f32.mxu0 0.0
  %508 = vmatmul.mubr.f32.gmra.mrb[0].mxu0 %v356
  %v509 = vpop.f32.mrb[0].mxu0
  %v510 = vadd.f32 0.0, %v509
  %v511 = vpop.f32.mrb[0].mxu0
  %v512 = vadd.f32 0.0, %v511
  %513 = vmatprep.mubr.f32.mxu0 0.0
  %514 = vmatmul.mubr.f32.gmra.mrb[0].mxu0 %v357
  %v515 = vpop.f32.mrb[0].mxu0
  %v516 = vadd.f32 0.0, %v515
  %v517 = vpop.f32.mrb[0].mxu0
  %v518 = vadd.f32 0.0, %v517
  %519 = vmatprep.mubr.f32.mxu0 0.0
  %520 = vmatmul.mubr.f32.gmra.mrb[0].mxu0 %v358
  %v521 = vpop.f32.mrb[0].mxu0
  %v522 = vadd.f32 0.0, %v521
  %v523 = vpop.f32.mrb[0].mxu0
  %v524 = vadd.f32 0.0, %v523
  %525 = vmatprep.mubr.f32.mxu0 0.0
  %526 = vmatmul.mubr.f32.gmra.mrb[0].mxu0 %v359
  %v527 = vpop.f32.mrb[0].mxu0
  %v528 = vadd.f32 0.0, %v527
  %v529 = vpop.f32.mrb[0].mxu0
  %v530 = vadd.f32 0.0, %v529
  %531 = vmatprep.mubr.f32.mxu0 0.0
  %532 = vmatmul.mubr.f32.gmra.mrb[0].mxu0 %v360
  %v533 = vpop.f32.mrb[0].mxu0
  %v534 = vadd.f32 0.0, %v533
  %v535 = vpop.f32.mrb[0].mxu0
  %v536 = vadd.f32 0.0, %v535
  %537 = vdwg.mxu0
  %538 = vmatprep.subr.mxu0 %v364
  %539 = vmatpush1.msra.mxu0 %v363
  %540 = vmatprep.subr.mxu0 %v368
  %541 = vmatpush1.msra.mxu0 %v367
  %542 = vmatprep.subr.mxu0 %v372
  %543 = vmatpush1.msra.mxu0 %v371
  %544 = vmatprep.subr.mxu0 %v376
  %545 = vmatpush1.msra.mxu0 %v375
  %546 = vmatprep.subr.mxu0 %v380
  %547 = vmatpush1.msra.mxu0 %v379
  %548 = vmatprep.subr.mxu0 %v384
  %549 = vmatpush1.msra.mxu0 %v383
  %550 = vmatprep.subr.mxu0 %v388
  %551 = vmatpush1.msra.mxu0 %v387
  %552 = vmatprep.subr.mxu0 %v392
  %553 = vmatpush1.msra.mxu0 %v391
  %554 = vmatprep.subr.mxu0 %v396
  %555 = vmatpush1.msra.mxu0 %v395
  %556 = vmatprep.subr.mxu0 %v400
  %557 = vmatpush1.msra.mxu0 %v399
  %558 = vmatprep.subr.mxu0 %v404
  %559 = vmatpush1.msra.mxu0 %v403
  %560 = vmatprep.subr.mxu0 %v408
  %561 = vmatpush1.msra.mxu0 %v407
  %562 = vmatprep.subr.mxu0 %v412
  %563 = vmatpush1.msra.mxu0 %v411
  %564 = vmatprep.subr.mxu0 %v416
  %565 = vmatpush1.msra.mxu0 %v415
  %566 = vmatprep.subr.mxu0 %v420
  %567 = vmatpush1.msra.mxu0 %v419
  %568 = vmatprep.subr.mxu0 %v424
  %569 = vmatpush1.msra.mxu0 %v423
  %570 = vmatprep.subr.mxu0 0.0
  %571 = vmatpush1.msra.mxu0 0.0
  %572 = vmatprep.subr.mxu0 0.0
  %573 = vmatpush1.msra.mxu0 0.0
  %574 = vmatprep.subr.mxu0 0.0
  %575 = vmatpush1.msra.mxu0 0.0
  %576 = vmatprep.subr.mxu0 0.0
  %577 = vmatpush1.msra.mxu0 0.0
  %578 = vmatprep.subr.mxu0 0.0
  %579 = vmatpush1.msra.mxu0 0.0
  %580 = vmatprep.subr.mxu0 0.0
  %581 = vmatpush1.msra.mxu0 0.0
  %582 = vmatprep.subr.mxu0 0.0
  %583 = vmatpush1.msra.mxu0 0.0
  %584 = vmatprep.subr.mxu0 0.0
  %585 = vmatpush1.msra.mxu0 0.0
  %586 = vmatprep.subr.mxu0 0.0
  %587 = vmatpush1.msra.mxu0 0.0
  %588 = vmatprep.subr.mxu0 0.0
  %589 = vmatpush1.msra.mxu0 0.0
  %590 = vmatprep.subr.mxu0 0.0
  %591 = vmatpush1.msra.mxu0 0.0
  %592 = vmatprep.subr.mxu0 0.0
  %593 = vmatpush1.msra.mxu0 0.0
  %594 = vmatprep.subr.mxu0 0.0
  %595 = vmatpush1.msra.mxu0 0.0
  %596 = vmatprep.subr.mxu0 0.0
  %597 = vmatpush1.msra.mxu0 0.0
  %598 = vmatprep.subr.mxu0 0.0
  %599 = vmatpush1.msra.mxu0 0.0
  %600 = vmatprep.subr.mxu0 0.0
  %601 = vmatpush1.msra.mxu0 0.0
  %602 = vmatprep.mubr.f32.mxu0 0.0
  %603 = vmatmul.mubr.f32.gmra.mrb[0].mxu0 %v353
  %v604 = vpop.f32.mrb[0].mxu0
  %v605 = vadd.f32 0.0, %v604
  %v606 = vpop.f32.mrb[0].mxu0
  %v607 = vadd.f32 0.0, %v606
  %608 = vmatprep.mubr.f32.mxu0 0.0
  %609 = vmatmul.mubr.f32.gmra.mrb[0].mxu0 %v354
  %v610 = vpop.f32.mrb[0].mxu0
  %v611 = vadd.f32 0.0, %v610
  %v612 = vpop.f32.mrb[0].mxu0
  %v613 = vadd.f32 0.0, %v612
  %614 = vmatprep.mubr.f32.mxu0 0.0
  %615 = vmatmul.mubr.f32.gmra.mrb[0].mxu0 %v355
  %v616 = vpop.f32.mrb[0].mxu0
  %v617 = vadd.f32 0.0, %v616
  %v618 = vpop.f32.mrb[0].mxu0
  %v619 = vadd.f32 0.0, %v618
  %620 = vmatprep.mubr.f32.mxu0 0.0
  %621 = vmatmul.mubr.f32.gmra.mrb[0].mxu0 %v356
  %v622 = vpop.f32.mrb[0].mxu0
  %v623 = vadd.f32 0.0, %v622
  %v624 = vpop.f32.mrb[0].mxu0
  %v625 = vadd.f32 0.0, %v624
  %626 = vmatprep.mubr.f32.mxu0 0.0
  %627 = vmatmul.mubr.f32.gmra.mrb[0].mxu0 %v357
  %v628 = vpop.f32.mrb[0].mxu0
  %v629 = vadd.f32 0.0, %v628
  %v630 = vpop.f32.mrb[0].mxu0
  %v631 = vadd.f32 0.0, %v630
  %632 = vmatprep.mubr.f32.mxu0 0.0
  %633 = vmatmul.mubr.f32.gmra.mrb[0].mxu0 %v358
  %v634 = vpop.f32.mrb[0].mxu0
  %v635 = vadd.f32 0.0, %v634
  %v636 = vpop.f32.mrb[0].mxu0
  %v637 = vadd.f32 0.0, %v636
  %638 = vmatprep.mubr.f32.mxu0 0.0
  %639 = vmatmul.mubr.f32.gmra.mrb[0].mxu0 %v359
  %v640 = vpop.f32.mrb[0].mxu0
  %v641 = vadd.f32 0.0, %v640
  %v642 = vpop.f32.mrb[0].mxu0
  %v643 = vadd.f32 0.0, %v642
  %644 = vmatprep.mubr.f32.mxu0 0.0
  %645 = vmatmul.mubr.f32.gmra.mrb[0].mxu0 %v360
  %v646 = vpop.f32.mrb[0].mxu0
  %v647 = vadd.f32 0.0, %v646
  %v648 = vpop.f32.mrb[0].mxu0
  %v649 = vadd.f32 0.0, %v648
  %650 = vdwg.mxu0
  %v651 = vld [vmem:[#allocation4] sm:$0xff]
  %v652 = vld [vmem:[#allocation4 + $0x8] sm:$0xff]
  %v653 = vld [vmem:[#allocation4 + $0x10] sm:$0xff]
  %v654 = vld [vmem:[#allocation4 + $0x18] sm:$0xff]
  %v655 = vadd.f32 %v492, %v651
  %v656 = vadd.f32 %v494, %v652
  %v657 = vadd.f32 %v605, %v653
  %v658 = vadd.f32 %v607, %v654
  %v659 = vadd.f32 %v498, %v651
  %v660 = vadd.f32 %v500, %v652
  %v661 = vadd.f32 %v611, %v653
  %v662 = vadd.f32 %v613, %v654
  %v663 = vadd.f32 %v504, %v651
  %v664 = vadd.f32 %v506, %v652
  %v665 = vadd.f32 %v617, %v653
  %v666 = vadd.f32 %v619, %v654
  %v667 = vadd.f32 %v510, %v651
  %v668 = vadd.f32 %v512, %v652
  %v669 = vadd.f32 %v623, %v653
  %v670 = vadd.f32 %v625, %v654
  %v671 = vadd.f32 %v516, %v651
  %v672 = vadd.f32 %v518, %v652
  %v673 = vadd.f32 %v629, %v653
  %v674 = vadd.f32 %v631, %v654
  %v675 = vadd.f32 %v522, %v651
  %v676 = vadd.f32 %v524, %v652
  %v677 = vadd.f32 %v635, %v653
  %v678 = vadd.f32 %v637, %v654
  %v679 = vadd.f32 %v528, %v651
  %v680 = vadd.f32 %v530, %v652
  %v681 = vadd.f32 %v641, %v653
  %v682 = vadd.f32 %v643, %v654
  %v683 = vadd.f32 %v534, %v651
  %v684 = vadd.f32 %v536, %v652
  %v685 = vadd.f32 %v647, %v653
  %v686 = vadd.f32 %v649, %v654
  %687 = vst [vmem:[#allocation5] sm:$0xff] %v655
  %688 = vst [vmem:[#allocation5 + $0x8] sm:$0xff] %v656
  %689 = vst [vmem:[#allocation5 + $0x10] sm:$0xff] %v657
  %690 = vst [vmem:[#allocation5 + $0x18] sm:$0xff] %v658
  %691 = vst [vmem:[#allocation5 + $0x20] sm:$0xff] %v659
  %692 = vst [vmem:[#allocation5 + $0x28] sm:$0xff] %v660
  %693 = vst [vmem:[#allocation5 + $0x30] sm:$0xff] %v661
  %694 = vst [vmem:[#allocation5 + $0x38] sm:$0xff] %v662
  %695 = vst [vmem:[#allocation5 + $0x40] sm:$0xff] %v663
  %696 = vst [vmem:[#allocation5 + $0x48] sm:$0xff] %v664
  %697 = vst [vmem:[#allocation5 + $0x50] sm:$0xff] %v665
  %698 = vst [vmem:[#allocation5 + $0x58] sm:$0xff] %v666
  %699 = vst [vmem:[#allocation5 + $0x60] sm:$0xff] %v667
  %700 = vst [vmem:[#allocation5 + $0x68] sm:$0xff] %v668
  %701 = vst [vmem:[#allocation5 + $0x70] sm:$0xff] %v669
  %702 = vst [vmem:[#allocation5 + $0x78] sm:$0xff] %v670
  %703 = vst [vmem:[#allocation5 + $0x80] sm:$0xff] %v671
  %704 = vst [vmem:[#allocation5 + $0x88] sm:$0xff] %v672
  %705 = vst [vmem:[#allocation5 + $0x90] sm:$0xff] %v673
  %706 = vst [vmem:[#allocation5 + $0x98] sm:$0xff] %v674
  %707 = vst [vmem:[#allocation5 + $0xa0] sm:$0xff] %v675
  %708 = vst [vmem:[#allocation5 + $0xa8] sm:$0xff] %v676
  %709 = vst [vmem:[#allocation5 + $0xb0] sm:$0xff] %v677
  %710 = vst [vmem:[#allocation5 + $0xb8] sm:$0xff] %v678
  %711 = vst [vmem:[#allocation5 + $0xc0] sm:$0xff] %v679
  %712 = vst [vmem:[#allocation5 + $0xc8] sm:$0xff] %v680
  %713 = vst [vmem:[#allocation5 + $0xd0] sm:$0xff] %v681
  %714 = vst [vmem:[#allocation5 + $0xd8] sm:$0xff] %v682
  %715 = vst [vmem:[#allocation5 + $0xe0] sm:$0xff] %v683
  %716 = vst [vmem:[#allocation5 + $0xe8] sm:$0xff] %v684
  %717 = vst [vmem:[#allocation5 + $0xf0] sm:$0xff] %v685
  %718 = vst [vmem:[#allocation5 + $0xf8] sm:$0xff] %v686
  %v719 = vld [vmem:[%s6] sm:$0xff]
  %v720 = vld [vmem:[%s6 + $0x8] sm:$0xff]
  %v721 = vld [vmem:[%s6 + $0x10] sm:$0xff]
  %v722 = vld [vmem:[%s6 + $0x18] sm:$0xff]
  %v723 = vld [vmem:[%s6 + $0x20] sm:$0xff]
  %v724 = vld [vmem:[%s6 + $0x28] sm:$0xff]
  %v725 = vld [vmem:[%s6 + $0x30] sm:$0xff]
  %v726 = vld [vmem:[%s6 + $0x38] sm:$0xff]
  %v727 = vld [vmem:[%s6 + $0x40] sm:$0xff]
  %v728 = vld [vmem:[%s6 + $0x48] sm:$0xff]
  %v729 = vld [vmem:[%s6 + $0x50] sm:$0xff]
  %v730 = vld [vmem:[%s6 + $0x58] sm:$0xff]
  %v731 = vld [vmem:[%s6 + $0x60] sm:$0xff]
  %v732 = vld [vmem:[%s6 + $0x68] sm:$0xff]
  %v733 = vld [vmem:[%s6 + $0x70] sm:$0xff]
  %v734 = vld [vmem:[%s6 + $0x78] sm:$0xff]
  %v735 = vld [vmem:[%s6 + $0x80] sm:$0xff]
  %v736 = vld [vmem:[%s6 + $0x88] sm:$0xff]
  %v737 = vld [vmem:[%s6 + $0x90] sm:$0xff]
  %v738 = vld [vmem:[%s6 + $0x98] sm:$0xff]
  %v739 = vld [vmem:[%s6 + $0xa0] sm:$0xff]
  %v740 = vld [vmem:[%s6 + $0xa8] sm:$0xff]
  %v741 = vld [vmem:[%s6 + $0xb0] sm:$0xff]
  %v742 = vld [vmem:[%s6 + $0xb8] sm:$0xff]
  %v743 = vld [vmem:[%s6 + $0xc0] sm:$0xff]
  %v744 = vld [vmem:[%s6 + $0xc8] sm:$0xff]
  %v745 = vld [vmem:[%s6 + $0xd0] sm:$0xff]
  %v746 = vld [vmem:[%s6 + $0xd8] sm:$0xff]
  %v747 = vld [vmem:[%s6 + $0xe0] sm:$0xff]
  %v748 = vld [vmem:[%s6 + $0xe8] sm:$0xff]
  %v749 = vld [vmem:[%s6 + $0xf0] sm:$0xff]
  %v750 = vld [vmem:[%s6 + $0xf8] sm:$0xff]
  %v751 = vld [vmem:[%s6 + $0x100] sm:$0xff]
  %v752 = vld [vmem:[%s6 + $0x108] sm:$0xff]
  %v753 = vld [vmem:[%s6 + $0x110] sm:$0xff]
  %v754 = vld [vmem:[%s6 + $0x118] sm:$0xff]
  %v755 = vld [vmem:[%s6 + $0x120] sm:$0xff]
  %v756 = vld [vmem:[%s6 + $0x128] sm:$0xff]
  %v757 = vld [vmem:[%s6 + $0x130] sm:$0xff]
  %v758 = vld [vmem:[%s6 + $0x138] sm:$0xff]
  %v759 = vld [vmem:[%s6 + $0x140] sm:$0xff]
  %v760 = vld [vmem:[%s6 + $0x148] sm:$0xff]
  %v761 = vld [vmem:[%s6 + $0x150] sm:$0xff]
  %v762 = vld [vmem:[%s6 + $0x158] sm:$0xff]
  %v763 = vld [vmem:[%s6 + $0x160] sm:$0xff]
  %v764 = vld [vmem:[%s6 + $0x168] sm:$0xff]
  %v765 = vld [vmem:[%s6 + $0x170] sm:$0xff]
  %v766 = vld [vmem:[%s6 + $0x178] sm:$0xff]
  %v767 = vld [vmem:[%s6 + $0x180] sm:$0xff]
  %v768 = vld [vmem:[%s6 + $0x188] sm:$0xff]
  %v769 = vld [vmem:[%s6 + $0x190] sm:$0xff]
  %v770 = vld [vmem:[%s6 + $0x198] sm:$0xff]
  %v771 = vld [vmem:[%s6 + $0x1a0] sm:$0xff]
  %v772 = vld [vmem:[%s6 + $0x1a8] sm:$0xff]
  %v773 = vld [vmem:[%s6 + $0x1b0] sm:$0xff]
  %v774 = vld [vmem:[%s6 + $0x1b8] sm:$0xff]
  %v775 = vld [vmem:[%s6 + $0x1c0] sm:$0xff]
  %v776 = vld [vmem:[%s6 + $0x1c8] sm:$0xff]
  %v777 = vld [vmem:[%s6 + $0x1d0] sm:$0xff]
  %v778 = vld [vmem:[%s6 + $0x1d8] sm:$0xff]
  %v779 = vld [vmem:[%s6 + $0x1e0] sm:$0xff]
  %v780 = vld [vmem:[%s6 + $0x1e8] sm:$0xff]
  %v781 = vld [vmem:[%s6 + $0x1f0] sm:$0xff]
  %v782 = vld [vmem:[%s6 + $0x1f8] sm:$0xff]
  %v783 = vld [vmem:[#allocation2] sm:$0xff]
  %v784 = vld [vmem:[#allocation3] sm:$0xff]
  %v785 = vld [vmem:[#allocation5] sm:$0xff]
  %v786 = vld [vmem:[#allocation5 + $0x8] sm:$0xff]
  %v787 = vld [vmem:[#allocation5 + $0x10] sm:$0xff]
  %v788 = vld [vmem:[#allocation5 + $0x18] sm:$0xff]
  %789 = vmatprep.subr.mxu0 %v720
  %790 = vmatpush1.msra.mxu0 %v719
  %791 = vmatprep.subr.mxu0 %v724
  %792 = vmatpush1.msra.mxu0 %v723
  %793 = vmatprep.subr.mxu0 %v728
  %794 = vmatpush1.msra.mxu0 %v727
  %795 = vmatprep.subr.mxu0 %v732
  %796 = vmatpush1.msra.mxu0 %v731
  %797 = vmatprep.subr.mxu0 %v736
  %798 = vmatpush1.msra.mxu0 %v735
  %799 = vmatprep.subr.mxu0 %v740
  %800 = vmatpush1.msra.mxu0 %v739
  %801 = vmatprep.subr.mxu0 %v744
  %802 = vmatpush1.msra.mxu0 %v743
  %803 = vmatprep.subr.mxu0 %v748
  %804 = vmatpush1.msra.mxu0 %v747
  %805 = vmatprep.subr.mxu0 %v752
  %806 = vmatpush1.msra.mxu0 %v751
  %807 = vmatprep.subr.mxu0 %v756
  %808 = vmatpush1.msra.mxu0 %v755
  %809 = vmatprep.subr.mxu0 %v760
  %810 = vmatpush1.msra.mxu0 %v759
  %811 = vmatprep.subr.mxu0 %v764
  %812 = vmatpush1.msra.mxu0 %v763
  %813 = vmatprep.subr.mxu0 %v768
  %814 = vmatpush1.msra.mxu0 %v767
  %815 = vmatprep.subr.mxu0 %v772
  %816 = vmatpush1.msra.mxu0 %v771
  %817 = vmatprep.subr.mxu0 %v776
  %818 = vmatpush1.msra.mxu0 %v775
  %819 = vmatprep.subr.mxu0 %v780
  %820 = vmatpush1.msra.mxu0 %v779
  %821 = vmatprep.subr.mxu0 0.0
  %822 = vmatpush1.msra.mxu0 0.0
  %823 = vmatprep.subr.mxu0 0.0
  %824 = vmatpush1.msra.mxu0 0.0
  %825 = vmatprep.subr.mxu0 0.0
  %826 = vmatpush1.msra.mxu0 0.0
  %827 = vmatprep.subr.mxu0 0.0
  %828 = vmatpush1.msra.mxu0 0.0
  %829 = vmatprep.subr.mxu0 0.0
  %830 = vmatpush1.msra.mxu0 0.0
  %831 = vmatprep.subr.mxu0 0.0
  %832 = vmatpush1.msra.mxu0 0.0
  %833 = vmatprep.subr.mxu0 0.0
  %834 = vmatpush1.msra.mxu0 0.0
  %835 = vmatprep.subr.mxu0 0.0
  %836 = vmatpush1.msra.mxu0 0.0
  %837 = vmatprep.subr.mxu0 0.0
  %838 = vmatpush1.msra.mxu0 0.0
  %839 = vmatprep.subr.mxu0 0.0
  %840 = vmatpush1.msra.mxu0 0.0
  %841 = vmatprep.subr.mxu0 0.0
  %842 = vmatpush1.msra.mxu0 0.0
  %843 = vmatprep.subr.mxu0 0.0
  %844 = vmatpush1.msra.mxu0 0.0
  %845 = vmatprep.subr.mxu0 0.0
  %846 = vmatpush1.msra.mxu0 0.0
  %847 = vmatprep.subr.mxu0 0.0
  %848 = vmatpush1.msra.mxu0 0.0
  %849 = vmatprep.subr.mxu0 0.0
  %850 = vmatpush1.msra.mxu0 0.0
  %851 = vmatprep.subr.mxu0 0.0
  %852 = vmatpush1.msra.mxu0 0.0
  %853 = vmatprep.mubr.f32.mxu0 0.0
  %854 = vmatmul.mubr.f32.gmra.mrb[0].mxu0 %v783
  %v855 = vpop.f32.mrb[0].mxu0
  %v856 = vadd.f32 0.0, %v855
  %v857 = vpop.f32.mrb[0].mxu0
  %v858 = vadd.f32 0.0, %v857
  %859 = vdwg.mxu0
  %860 = vmatprep.subr.mxu0 %v722
  %861 = vmatpush1.msra.mxu0 %v721
  %862 = vmatprep.subr.mxu0 %v726
  %863 = vmatpush1.msra.mxu0 %v725
  %864 = vmatprep.subr.mxu0 %v730
  %865 = vmatpush1.msra.mxu0 %v729
  %866 = vmatprep.subr.mxu0 %v734
  %867 = vmatpush1.msra.mxu0 %v733
  %868 = vmatprep.subr.mxu0 %v738
  %869 = vmatpush1.msra.mxu0 %v737
  %870 = vmatprep.subr.mxu0 %v742
  %871 = vmatpush1.msra.mxu0 %v741
  %872 = vmatprep.subr.mxu0 %v746
  %873 = vmatpush1.msra.mxu0 %v745
  %874 = vmatprep.subr.mxu0 %v750
  %875 = vmatpush1.msra.mxu0 %v749
  %876 = vmatprep.subr.mxu0 %v754
  %877 = vmatpush1.msra.mxu0 %v753
  %878 = vmatprep.subr.mxu0 %v758
  %879 = vmatpush1.msra.mxu0 %v757
  %880 = vmatprep.subr.mxu0 %v762
  %881 = vmatpush1.msra.mxu0 %v761
  %882 = vmatprep.subr.mxu0 %v766
  %883 = vmatpush1.msra.mxu0 %v765
  %884 = vmatprep.subr.mxu0 %v770
  %885 = vmatpush1.msra.mxu0 %v769
  %886 = vmatprep.subr.mxu0 %v774
  %887 = vmatpush1.msra.mxu0 %v773
  %888 = vmatprep.subr.mxu0 %v778
  %889 = vmatpush1.msra.mxu0 %v777
  %890 = vmatprep.subr.mxu0 %v782
  %891 = vmatpush1.msra.mxu0 %v781
  %892 = vmatprep.subr.mxu0 0.0
  %893 = vmatpush1.msra.mxu0 0.0
  %894 = vmatprep.subr.mxu0 0.0
  %895 = vmatpush1.msra.mxu0 0.0
  %896 = vmatprep.subr.mxu0 0.0
  %897 = vmatpush1.msra.mxu0 0.0
  %898 = vmatprep.subr.mxu0 0.0
  %899 = vmatpush1.msra.mxu0 0.0
  %900 = vmatprep.subr.mxu0 0.0
  %901 = vmatpush1.msra.mxu0 0.0
  %902 = vmatprep.subr.mxu0 0.0
  %903 = vmatpush1.msra.mxu0 0.0
  %904 = vmatprep.subr.mxu0 0.0
  %905 = vmatpush1.msra.mxu0 0.0
  %906 = vmatprep.subr.mxu0 0.0
  %907 = vmatpush1.msra.mxu0 0.0
  %908 = vmatprep.subr.mxu0 0.0
  %909 = vmatpush1.msra.mxu0 0.0
  %910 = vmatprep.subr.mxu0 0.0
  %911 = vmatpush1.msra.mxu0 0.0
  %912 = vmatprep.subr.mxu0 0.0
  %913 = vmatpush1.msra.mxu0 0.0
  %914 = vmatprep.subr.mxu0 0.0
  %915 = vmatpush1.msra.mxu0 0.0
  %916 = vmatprep.subr.mxu0 0.0
  %917 = vmatpush1.msra.mxu0 0.0
  %918 = vmatprep.subr.mxu0 0.0
  %919 = vmatpush1.msra.mxu0 0.0
  %920 = vmatprep.subr.mxu0 0.0
  %921 = vmatpush1.msra.mxu0 0.0
  %922 = vmatprep.subr.mxu0 0.0
  %923 = vmatpush1.msra.mxu0 0.0
  %924 = vmatprep.mubr.f32.mxu0 0.0
  %925 = vmatmul.mubr.f32.gmra.mrb[0].mxu0 %v783
  %v926 = vpop.f32.mrb[0].mxu0
  %v927 = vadd.f32 0.0, %v926
  %v928 = vpop.f32.mrb[0].mxu0
  %v929 = vadd.f32 0.0, %v928
  %930 = vdwg.mxu0
  %v931 = vadd.f32 %v785, %v856
  %v932 = vadd.f32 %v786, %v858
  %v933 = vadd.f32 %v787, %v927
  %v934 = vadd.f32 %v788, %v929
  %v935 = vmul.f32 %v931, 0.5
  %v936 = vtanh.pop %v935
  %v937 = vmul.f32 %v936, 0.5
  %v938 = vadd.f32 %v937, 0.5
  %v939 = vmul.f32 %v932, 0.5
  %v940 = vtanh.pop %v939
  %v941 = vmul.f32 %v940, 0.5
  %v942 = vadd.f32 %v941, 0.5
  %v943 = vtanh.pop %v933
  %v944 = vmul.f32 %v934, 0.5
  %v945 = vtanh.pop %v944
  %v946 = vmul.f32 %v945, 0.5
  %v947 = vadd.f32 %v946, 0.5
  %v948 = vmul.f32 %v942, %v784
  %v949 = vmul.f32 %v938, %v943
  %v950 = vadd.f32 %v948, %v949
  %v951 = vtanh.pop %v950
  %v952 = vmul.f32 %v947, %v951
  %953 = vst [vmem:[#allocation3] sm:$0xff] %v950
  %954 = vst [vmem:[#allocation2] sm:$0xff] %v952
  %955 = vst [vmem:[%s7] sm:$0xff] %v952
  %v956 = vld [vmem:[#allocation2] sm:$0xff]
  %v957 = vld [vmem:[#allocation3] sm:$0xff]
  %s958 = scalar_lea.vmem [#allocation5], 32
  %v959 = vld [vmem:[%s958] sm:$0xff]
  %v960 = vld [vmem:[%s958 + $0x8] sm:$0xff]
  %v961 = vld [vmem:[%s958 + $0x10] sm:$0xff]
  %v962 = vld [vmem:[%s958 + $0x18] sm:$0xff]
  %963 = vmatprep.subr.mxu0 %v720
  %964 = vmatpush1.msra.mxu0 %v719
  %965 = vmatprep.subr.mxu0 %v724
  %966 = vmatpush1.msra.mxu0 %v723
  %967 = vmatprep.subr.mxu0 %v728
  %968 = vmatpush1.msra.mxu0 %v727
  %969 = vmatprep.subr.mxu0 %v732
  %970 = vmatpush1.msra.mxu0 %v731
  %971 = vmatprep.subr.mxu0 %v736
  %972 = vmatpush1.msra.mxu0 %v735
  %973 = vmatprep.subr.mxu0 %v740
  %974 = vmatpush1.msra.mxu0 %v739
  %975 = vmatprep.subr.mxu0 %v744
  %976 = vmatpush1.msra.mxu0 %v743
  %977 = vmatprep.subr.mxu0 %v748
  %978 = vmatpush1.msra.mxu0 %v747
  %979 = vmatprep.subr.mxu0 %v752
  %980 = vmatpush1.msra.mxu0 %v751
  %981 = vmatprep.subr.mxu0 %v756
  %982 = vmatpush1.msra.mxu0 %v755
  %983 = vmatprep.subr.mxu0 %v760
  %984 = vmatpush1.msra.mxu0 %v759
  %985 = vmatprep.subr.mxu0 %v764
  %986 = vmatpush1.msra.mxu0 %v763
  %987 = vmatprep.subr.mxu0 %v768
  %988 = vmatpush1.msra.mxu0 %v767
  %989 = vmatprep.subr.mxu0 %v772
  %990 = vmatpush1.msra.mxu0 %v771
  %991 = vmatprep.subr.mxu0 %v776
  %992 = vmatpush1.msra.mxu0 %v775
  %993 = vmatprep.subr.mxu0 %v780
  %994 = vmatpush1.msra.mxu0 %v779
  %995 = vmatprep.subr.mxu0 0.0
  %996 = vmatpush1.msra.mxu0 0.0
  %997 = vmatprep.subr.mxu0 0.0
  %998 = vmatpush1.msra.mxu0 0.0
  %999 = vmatprep.subr.mxu0 0.0
  %1000 = vmatpush1.msra.mxu0 0.0
  %1001 = vmatprep.subr.mxu0 0.0
  %1002 = vmatpush1.msra.mxu0 0.0
  %1003 = vmatprep.subr.mxu0 0.0
  %1004 = vmatpush1.msra.mxu0 0.0
  %1005 = vmatprep.subr.mxu0 0.0
  %1006 = vmatpush1.msra.mxu0 0.0
  %1007 = vmatprep.subr.mxu0 0.0
  %1008 = vmatpush1.msra.mxu0 0.0
  %1009 = vmatprep.subr.mxu0 0.0
  %1010 = vmatpush1.msra.mxu0 0.0
  %1011 = vmatprep.subr.mxu0 0.0
  %1012 = vmatpush1.msra.mxu0 0.0
  %1013 = vmatprep.subr.mxu0 0.0
  %1014 = vmatpush1.msra.mxu0 0.0
  %1015 = vmatprep.subr.mxu0 0.0
  %1016 = vmatpush1.msra.mxu0 0.0
  %1017 = vmatprep.subr.mxu0 0.0
  %1018 = vmatpush1.msra.mxu0 0.0
  %1019 = vmatprep.subr.mxu0 0.0
  %1020 = vmatpush1.msra.mxu0 0.0
  %1021 = vmatprep.subr.mxu0 0.0
  %1022 = vmatpush1.msra.mxu0 0.0
  %1023 = vmatprep.subr.mxu0 0.0
  %1024 = vmatpush1.msra.mxu0 0.0
  %1025 = vmatprep.subr.mxu0 0.0
  %1026 = vmatpush1.msra.mxu0 0.0
  %1027 = vmatprep.mubr.f32.mxu0 0.0
  %1028 = vmatmul.mubr.f32.gmra.mrb[0].mxu0 %v956
  %v1029 = vpop.f32.mrb[0].mxu0
  %v1030 = vadd.f32 0.0, %v1029
  %v1031 = vpop.f32.mrb[0].mxu0
  %v1032 = vadd.f32 0.0, %v1031
  %1033 = vdwg.mxu0
  %1034 = vmatprep.subr.mxu0 %v722
  %1035 = vmatpush1.msra.mxu0 %v721
  %1036 = vmatprep.subr.mxu0 %v726
  %1037 = vmatpush1.msra.mxu0 %v725
  %1038 = vmatprep.subr.mxu0 %v730
  %1039 = vmatpush1.msra.mxu0 %v729
  %1040 = vmatprep.subr.mxu0 %v734
  %1041 = vmatpush1.msra.mxu0 %v733
  %1042 = vmatprep.subr.mxu0 %v738
  %1043 = vmatpush1.msra.mxu0 %v737
  %1044 = vmatprep.subr.mxu0 %v742
  %1045 = vmatpush1.msra.mxu0 %v741
  %1046 = vmatprep.subr.mxu0 %v746
  %1047 = vmatpush1.msra.mxu0 %v745
  %1048 = vmatprep.subr.mxu0 %v750
  %1049 = vmatpush1.msra.mxu0 %v749
  %1050 = vmatprep.subr.mxu0 %v754
  %1051 = vmatpush1.msra.mxu0 %v753
  %1052 = vmatprep.subr.mxu0 %v758
  %1053 = vmatpush1.msra.mxu0 %v757
  %1054 = vmatprep.subr.mxu0 %v762
  %1055 = vmatpush1.msra.mxu0 %v761
  %1056 = vmatprep.subr.mxu0 %v766
  %1057 = vmatpush1.msra.mxu0 %v765
  %1058 = vmatprep.subr.mxu0 %v770
  %1059 = vmatpush1.msra.mxu0 %v769
  %1060 = vmatprep.subr.mxu0 %v774
  %1061 = vmatpush1.msra.mxu0 %v773
  %1062 = vmatprep.subr.mxu0 %v778
  %1063 = vmatpush1.msra.mxu0 %v777
  %1064 = vmatprep.subr.mxu0 %v782
  %1065 = vmatpush1.msra.mxu0 %v781
  %1066 = vmatprep.subr.mxu0 0.0
  %1067 = vmatpush1.msra.mxu0 0.0
  %1068 = vmatprep.subr.mxu0 0.0
  %1069 = vmatpush1.msra.mxu0 0.0
  %1070 = vmatprep.subr.mxu0 0.0
  %1071 = vmatpush1.msra.mxu0 0.0
  %1072 = vmatprep.subr.mxu0 0.0
  %1073 = vmatpush1.msra.mxu0 0.0
  %1074 = vmatprep.subr.mxu0 0.0
  %1075 = vmatpush1.msra.mxu0 0.0
  %1076 = vmatprep.subr.mxu0 0.0
  %1077 = vmatpush1.msra.mxu0 0.0
  %1078 = vmatprep.subr.mxu0 0.0
  %1079 = vmatpush1.msra.mxu0 0.0
  %1080 = vmatprep.subr.mxu0 0.0
  %1081 = vmatpush1.msra.mxu0 0.0
  %1082 = vmatprep.subr.mxu0 0.0
  %1083 = vmatpush1.msra.mxu0 0.0
  %1084 = vmatprep.subr.mxu0 0.0
  %1085 = vmatpush1.msra.mxu0 0.0
  %1086 = vmatprep.subr.mxu0 0.0
  %1087 = vmatpush1.msra.mxu0 0.0
  %1088 = vmatprep.subr.mxu0 0.0
  %1089 = vmatpush1.msra.mxu0 0.0
  %1090 = vmatprep.subr.mxu0 0.0
  %1091 = vmatpush1.msra.mxu0 0.0
  %1092 = vmatprep.subr.mxu0 0.0
  %1093 = vmatpush1.msra.mxu0 0.0
  %1094 = vmatprep.subr.mxu0 0.0
  %1095 = vmatpush1.msra.mxu0 0.0
  %1096 = vmatprep.subr.mxu0 0.0
  %1097 = vmatpush1.msra.mxu0 0.0
  %1098 = vmatprep.mubr.f32.mxu0 0.0
  %1099 = vmatmul.mubr.f32.gmra.mrb[0].mxu0 %v956
  %v1100 = vpop.f32.mrb[0].mxu0
  %v1101 = vadd.f32 0.0, %v1100
  %v1102 = vpop.f32.mrb[0].mxu0
  %v1103 = vadd.f32 0.0, %v1102
  %1104 = vdwg.mxu0
  %v1105 = vadd.f32 %v959, %v1030
  %v1106 = vadd.f32 %v960, %v1032
  %v1107 = vadd.f32 %v961, %v1101
  %v1108 = vadd.f32 %v962, %v1103
  %v1109 = vmul.f32 %v1105, 0.5
  %v1110 = vtanh.pop %v1109
  %v1111 = vmul.f32 %v1110, 0.5
  %v1112 = vadd.f32 %v1111, 0.5
  %v1113 = vmul.f32 %v1106, 0.5
  %v1114 = vtanh.pop %v1113
  %v1115 = vmul.f32 %v1114, 0.5
  %v1116 = vadd.f32 %v1115, 0.5
  %v1117 = vtanh.pop %v1107
  %v1118 = vmul.f32 %v1108, 0.5
  %v1119 = vtanh.pop %v1118
  %v1120 = vmul.f32 %v1119, 0.5
  %v1121 = vadd.f32 %v1120, 0.5
  %v1122 = vmul.f32 %v1116, %v957
  %v1123 = vmul.f32 %v1112, %v1117
  %v1124 = vadd.f32 %v1122, %v1123
  %v1125 = vtanh.pop %v1124
  %v1126 = vmul.f32 %v1121, %v1125
  %1127 = vst [vmem:[#allocation3] sm:$0xff] %v1124
  %1128 = vst [vmem:[#allocation2] sm:$0xff] %v1126
  %s1129 = scalar_lea.vmem %s7, 8
  %1130 = vst [vmem:[%s1129] sm:$0xff] %v1126
  %v1131 = vld [vmem:[#allocation2] sm:$0xff]
  %v1132 = vld [vmem:[#allocation3] sm:$0xff]
  %s1133 = scalar_lea.vmem [#allocation5], 64
  %v1134 = vld [vmem:[%s1133] sm:$0xff]
  %v1135 = vld [vmem:[%s1133 + $0x8] sm:$0xff]
  %v1136 = vld [vmem:[%s1133 + $0x10] sm:$0xff]
  %v1137 = vld [vmem:[%s1133 + $0x18] sm:$0xff]
  %1138 = vmatprep.subr.mxu0 %v720
  %1139 = vmatpush1.msra.mxu0 %v719
  %1140 = vmatprep.subr.mxu0 %v724
  %1141 = vmatpush1.msra.mxu0 %v723
  %1142 = vmatprep.subr.mxu0 %v728
  %1143 = vmatpush1.msra.mxu0 %v727
  %1144 = vmatprep.subr.mxu0 %v732
  %1145 = vmatpush1.msra.mxu0 %v731
  %1146 = vmatprep.subr.mxu0 %v736
  %1147 = vmatpush1.msra.mxu0 %v735
  %1148 = vmatprep.subr.mxu0 %v740
  %1149 = vmatpush1.msra.mxu0 %v739
  %1150 = vmatprep.subr.mxu0 %v744
  %1151 = vmatpush1.msra.mxu0 %v743
  %1152 = vmatprep.subr.mxu0 %v748
  %1153 = vmatpush1.msra.mxu0 %v747
  %1154 = vmatprep.subr.mxu0 %v752
  %1155 = vmatpush1.msra.mxu0 %v751
  %1156 = vmatprep.subr.mxu0 %v756
  %1157 = vmatpush1.msra.mxu0 %v755
  %1158 = vmatprep.subr.mxu0 %v760
  %1159 = vmatpush1.msra.mxu0 %v759
  %1160 = vmatprep.subr.mxu0 %v764
  %1161 = vmatpush1.msra.mxu0 %v763
  %1162 = vmatprep.subr.mxu0 %v768
  %1163 = vmatpush1.msra.mxu0 %v767
  %1164 = vmatprep.subr.mxu0 %v772
  %1165 = vmatpush1.msra.mxu0 %v771
  %1166 = vmatprep.subr.mxu0 %v776
  %1167 = vmatpush1.msra.mxu0 %v775
  %1168 = vmatprep.subr.mxu0 %v780
  %1169 = vmatpush1.msra.mxu0 %v779
  %1170 = vmatprep.subr.mxu0 0.0
  %1171 = vmatpush1.msra.mxu0 0.0
  %1172 = vmatprep.subr.mxu0 0.0
  %1173 = vmatpush1.msra.mxu0 0.0
  %1174 = vmatprep.subr.mxu0 0.0
  %1175 = vmatpush1.msra.mxu0 0.0
  %1176 = vmatprep.subr.mxu0 0.0
  %1177 = vmatpush1.msra.mxu0 0.0
  %1178 = vmatprep.subr.mxu0 0.0
  %1179 = vmatpush1.msra.mxu0 0.0
  %1180 = vmatprep.subr.mxu0 0.0
  %1181 = vmatpush1.msra.mxu0 0.0
  %1182 = vmatprep.subr.mxu0 0.0
  %1183 = vmatpush1.msra.mxu0 0.0
  %1184 = vmatprep.subr.mxu0 0.0
  %1185 = vmatpush1.msra.mxu0 0.0
  %1186 = vmatprep.subr.mxu0 0.0
  %1187 = vmatpush1.msra.mxu0 0.0
  %1188 = vmatprep.subr.mxu0 0.0
  %1189 = vmatpush1.msra.mxu0 0.0
  %1190 = vmatprep.subr.mxu0 0.0
  %1191 = vmatpush1.msra.mxu0 0.0
  %1192 = vmatprep.subr.mxu0 0.0
  %1193 = vmatpush1.msra.mxu0 0.0
  %1194 = vmatprep.subr.mxu0 0.0
  %1195 = vmatpush1.msra.mxu0 0.0
  %1196 = vmatprep.subr.mxu0 0.0
  %1197 = vmatpush1.msra.mxu0 0.0
  %1198 = vmatprep.subr.mxu0 0.0
  %1199 = vmatpush1.msra.mxu0 0.0
  %1200 = vmatprep.subr.mxu0 0.0
  %1201 = vmatpush1.msra.mxu0 0.0
  %1202 = vmatprep.mubr.f32.mxu0 0.0
  %1203 = vmatmul.mubr.f32.gmra.mrb[0].mxu0 %v1131
  %v1204 = vpop.f32.mrb[0].mxu0
  %v1205 = vadd.f32 0.0, %v1204
  %v1206 = vpop.f32.mrb[0].mxu0
  %v1207 = vadd.f32 0.0, %v1206
  %1208 = vdwg.mxu0
  %1209 = vmatprep.subr.mxu0 %v722
  %1210 = vmatpush1.msra.mxu0 %v721
  %1211 = vmatprep.subr.mxu0 %v726
  %1212 = vmatpush1.msra.mxu0 %v725
  %1213 = vmatprep.subr.mxu0 %v730
  %1214 = vmatpush1.msra.mxu0 %v729
  %1215 = vmatprep.subr.mxu0 %v734
  %1216 = vmatpush1.msra.mxu0 %v733
  %1217 = vmatprep.subr.mxu0 %v738
  %1218 = vmatpush1.msra.mxu0 %v737
  %1219 = vmatprep.subr.mxu0 %v742
  %1220 = vmatpush1.msra.mxu0 %v741
  %1221 = vmatprep.subr.mxu0 %v746
  %1222 = vmatpush1.msra.mxu0 %v745
  %1223 = vmatprep.subr.mxu0 %v750
  %1224 = vmatpush1.msra.mxu0 %v749
  %1225 = vmatprep.subr.mxu0 %v754
  %1226 = vmatpush1.msra.mxu0 %v753
  %1227 = vmatprep.subr.mxu0 %v758
  %1228 = vmatpush1.msra.mxu0 %v757
  %1229 = vmatprep.subr.mxu0 %v762
  %1230 = vmatpush1.msra.mxu0 %v761
  %1231 = vmatprep.subr.mxu0 %v766
  %1232 = vmatpush1.msra.mxu0 %v765
  %1233 = vmatprep.subr.mxu0 %v770
  %1234 = vmatpush1.msra.mxu0 %v769
  %1235 = vmatprep.subr.mxu0 %v774
  %1236 = vmatpush1.msra.mxu0 %v773
  %1237 = vmatprep.subr.mxu0 %v778
  %1238 = vmatpush1.msra.mxu0 %v777
  %1239 = vmatprep.subr.mxu0 %v782
  %1240 = vmatpush1.msra.mxu0 %v781
  %1241 = vmatprep.subr.mxu0 0.0
  %1242 = vmatpush1.msra.mxu0 0.0
  %1243 = vmatprep.subr.mxu0 0.0
  %1244 = vmatpush1.msra.mxu0 0.0
  %1245 = vmatprep.subr.mxu0 0.0
  %1246 = vmatpush1.msra.mxu0 0.0
  %1247 = vmatprep.subr.mxu0 0.0
  %1248 = vmatpush1.msra.mxu0 0.0
  %1249 = vmatprep.subr.mxu0 0.0
  %1250 = vmatpush1.msra.mxu0 0.0
  %1251 = vmatprep.subr.mxu0 0.0
  %1252 = vmatpush1.msra.mxu0 0.0
  %1253 = vmatprep.subr.mxu0 0.0
  %1254 = vmatpush1.msra.mxu0 0.0
  %1255 = vmatprep.subr.mxu0 0.0
  %1256 = vmatpush1.msra.mxu0 0.0
  %1257 = vmatprep.subr.mxu0 0.0
  %1258 = vmatpush1.msra.mxu0 0.0
  %1259 = vmatprep.subr.mxu0 0.0
  %1260 = vmatpush1.msra.mxu0 0.0
  %1261 = vmatprep.subr.mxu0 0.0
  %1262 = vmatpush1.msra.mxu0 0.0
  %1263 = vmatprep.subr.mxu0 0.0
  %1264 = vmatpush1.msra.mxu0 0.0
  %1265 = vmatprep.subr.mxu0 0.0
  %1266 = vmatpush1.msra.mxu0 0.0
  %1267 = vmatprep.subr.mxu0 0.0
  %1268 = vmatpush1.msra.mxu0 0.0
  %1269 = vmatprep.subr.mxu0 0.0
  %1270 = vmatpush1.msra.mxu0 0.0
  %1271 = vmatprep.subr.mxu0 0.0
  %1272 = vmatpush1.msra.mxu0 0.0
  %1273 = vmatprep.mubr.f32.mxu0 0.0
  %1274 = vmatmul.mubr.f32.gmra.mrb[0].mxu0 %v1131
  %v1275 = vpop.f32.mrb[0].mxu0
  %v1276 = vadd.f32 0.0, %v1275
  %v1277 = vpop.f32.mrb[0].mxu0
  %v1278 = vadd.f32 0.0, %v1277
  %1279 = vdwg.mxu0
  %v1280 = vadd.f32 %v1134, %v1205
  %v1281 = vadd.f32 %v1135, %v1207
  %v1282 = vadd.f32 %v1136, %v1276
  %v1283 = vadd.f32 %v1137, %v1278
  %v1284 = vmul.f32 %v1280, 0.5
  %v1285 = vtanh.pop %v1284
  %v1286 = vmul.f32 %v1285, 0.5
  %v1287 = vadd.f32 %v1286, 0.5
  %v1288 = vmul.f32 %v1281, 0.5
  %v1289 = vtanh.pop %v1288
  %v1290 = vmul.f32 %v1289, 0.5
  %v1291 = vadd.f32 %v1290, 0.5
  %v1292 = vtanh.pop %v1282
  %v1293 = vmul.f32 %v1283, 0.5
  %v1294 = vtanh.pop %v1293
  %v1295 = vmul.f32 %v1294, 0.5
  %v1296 = vadd.f32 %v1295, 0.5
  %v1297 = vmul.f32 %v1291, %v1132
  %v1298 = vmul.f32 %v1287, %v1292
  %v1299 = vadd.f32 %v1297, %v1298
  %v1300 = vtanh.pop %v1299
  %v1301 = vmul.f32 %v1296, %v1300
  %1302 = vst [vmem:[#allocation3] sm:$0xff] %v1299
  %1303 = vst [vmem:[#allocation2] sm:$0xff] %v1301
  %s1304 = scalar_lea.vmem %s7, 16
  %1305 = vst [vmem:[%s1304] sm:$0xff] %v1301
  %v1306 = vld [vmem:[#allocation2] sm:$0xff]
  %v1307 = vld [vmem:[#allocation3] sm:$0xff]
  %s1308 = scalar_lea.vmem [#allocation5], 96
  %v1309 = vld [vmem:[%s1308] sm:$0xff]
  %v1310 = vld [vmem:[%s1308 + $0x8] sm:$0xff]
  %v1311 = vld [vmem:[%s1308 + $0x10] sm:$0xff]
  %v1312 = vld [vmem:[%s1308 + $0x18] sm:$0xff]
  %1313 = vmatprep.subr.mxu0 %v720
  %1314 = vmatpush1.msra.mxu0 %v719
  %1315 = vmatprep.subr.mxu0 %v724
  %1316 = vmatpush1.msra.mxu0 %v723
  %1317 = vmatprep.subr.mxu0 %v728
  %1318 = vmatpush1.msra.mxu0 %v727
  %1319 = vmatprep.subr.mxu0 %v732
  %1320 = vmatpush1.msra.mxu0 %v731
  %1321 = vmatprep.subr.mxu0 %v736
  %1322 = vmatpush1.msra.mxu0 %v735
  %1323 = vmatprep.subr.mxu0 %v740
  %1324 = vmatpush1.msra.mxu0 %v739
  %1325 = vmatprep.subr.mxu0 %v744
  %1326 = vmatpush1.msra.mxu0 %v743
  %1327 = vmatprep.subr.mxu0 %v748
  %1328 = vmatpush1.msra.mxu0 %v747
  %1329 = vmatprep.subr.mxu0 %v752
  %1330 = vmatpush1.msra.mxu0 %v751
  %1331 = vmatprep.subr.mxu0 %v756
  %1332 = vmatpush1.msra.mxu0 %v755
  %1333 = vmatprep.subr.mxu0 %v760
  %1334 = vmatpush1.msra.mxu0 %v759
  %1335 = vmatprep.subr.mxu0 %v764
  %1336 = vmatpush1.msra.mxu0 %v763
  %1337 = vmatprep.subr.mxu0 %v768
  %1338 = vmatpush1.msra.mxu0 %v767
  %1339 = vmatprep.subr.mxu0 %v772
  %1340 = vmatpush1.msra.mxu0 %v771
  %1341 = vmatprep.subr.mxu0 %v776
  %1342 = vmatpush1.msra.mxu0 %v775
  %1343 = vmatprep.subr.mxu0 %v780
  %1344 = vmatpush1.msra.mxu0 %v779
  %1345 = vmatprep.subr.mxu0 0.0
  %1346 = vmatpush1.msra.mxu0 0.0
  %1347 = vmatprep.subr.mxu0 0.0
  %1348 = vmatpush1.msra.mxu0 0.0
  %1349 = vmatprep.subr.mxu0 0.0
  %1350 = vmatpush1.msra.mxu0 0.0
  %1351 = vmatprep.subr.mxu0 0.0
  %1352 = vmatpush1.msra.mxu0 0.0
  %1353 = vmatprep.subr.mxu0 0.0
  %1354 = vmatpush1.msra.mxu0 0.0
  %1355 = vmatprep.subr.mxu0 0.0
  %1356 = vmatpush1.msra.mxu0 0.0
  %1357 = vmatprep.subr.mxu0 0.0
  %1358 = vmatpush1.msra.mxu0 0.0
  %1359 = vmatprep.subr.mxu0 0.0
  %1360 = vmatpush1.msra.mxu0 0.0
  %1361 = vmatprep.subr.mxu0 0.0
  %1362 = vmatpush1.msra.mxu0 0.0
  %1363 = vmatprep.subr.mxu0 0.0
  %1364 = vmatpush1.msra.mxu0 0.0
  %1365 = vmatprep.subr.mxu0 0.0
  %1366 = vmatpush1.msra.mxu0 0.0
  %1367 = vmatprep.subr.mxu0 0.0
  %1368 = vmatpush1.msra.mxu0 0.0
  %1369 = vmatprep.subr.mxu0 0.0
  %1370 = vmatpush1.msra.mxu0 0.0
  %1371 = vmatprep.subr.mxu0 0.0
  %1372 = vmatpush1.msra.mxu0 0.0
  %1373 = vmatprep.subr.mxu0 0.0
  %1374 = vmatpush1.msra.mxu0 0.0
  %1375 = vmatprep.subr.mxu0 0.0
  %1376 = vmatpush1.msra.mxu0 0.0
  %1377 = vmatprep.mubr.f32.mxu0 0.0
  %1378 = vmatmul.mubr.f32.gmra.mrb[0].mxu0 %v1306
  %v1379 = vpop.f32.mrb[0].mxu0
  %v1380 = vadd.f32 0.0, %v1379
  %v1381 = vpop.f32.mrb[0].mxu0
  %v1382 = vadd.f32 0.0, %v1381
  %1383 = vdwg.mxu0
  %1384 = vmatprep.subr.mxu0 %v722
  %1385 = vmatpush1.msra.mxu0 %v721
  %1386 = vmatprep.subr.mxu0 %v726
  %1387 = vmatpush1.msra.mxu0 %v725
  %1388 = vmatprep.subr.mxu0 %v730
  %1389 = vmatpush1.msra.mxu0 %v729
  %1390 = vmatprep.subr.mxu0 %v734
  %1391 = vmatpush1.msra.mxu0 %v733
  %1392 = vmatprep.subr.mxu0 %v738
  %1393 = vmatpush1.msra.mxu0 %v737
  %1394 = vmatprep.subr.mxu0 %v742
  %1395 = vmatpush1.msra.mxu0 %v741
  %1396 = vmatprep.subr.mxu0 %v746
  %1397 = vmatpush1.msra.mxu0 %v745
  %1398 = vmatprep.subr.mxu0 %v750
  %1399 = vmatpush1.msra.mxu0 %v749
  %1400 = vmatprep.subr.mxu0 %v754
  %1401 = vmatpush1.msra.mxu0 %v753
  %1402 = vmatprep.subr.mxu0 %v758
  %1403 = vmatpush1.msra.mxu0 %v757
  %1404 = vmatprep.subr.mxu0 %v762
  %1405 = vmatpush1.msra.mxu0 %v761
  %1406 = vmatprep.subr.mxu0 %v766
  %1407 = vmatpush1.msra.mxu0 %v765
  %1408 = vmatprep.subr.mxu0 %v770
  %1409 = vmatpush1.msra.mxu0 %v769
  %1410 = vmatprep.subr.mxu0 %v774
  %1411 = vmatpush1.msra.mxu0 %v773
  %1412 = vmatprep.subr.mxu0 %v778
  %1413 = vmatpush1.msra.mxu0 %v777
  %1414 = vmatprep.subr.mxu0 %v782
  %1415 = vmatpush1.msra.mxu0 %v781
  %1416 = vmatprep.subr.mxu0 0.0
  %1417 = vmatpush1.msra.mxu0 0.0
  %1418 = vmatprep.subr.mxu0 0.0
  %1419 = vmatpush1.msra.mxu0 0.0
  %1420 = vmatprep.subr.mxu0 0.0
  %1421 = vmatpush1.msra.mxu0 0.0
  %1422 = vmatprep.subr.mxu0 0.0
  %1423 = vmatpush1.msra.mxu0 0.0
  %1424 = vmatprep.subr.mxu0 0.0
  %1425 = vmatpush1.msra.mxu0 0.0
  %1426 = vmatprep.subr.mxu0 0.0
  %1427 = vmatpush1.msra.mxu0 0.0
  %1428 = vmatprep.subr.mxu0 0.0
  %1429 = vmatpush1.msra.mxu0 0.0
  %1430 = vmatprep.subr.mxu0 0.0
  %1431 = vmatpush1.msra.mxu0 0.0
  %1432 = vmatprep.subr.mxu0 0.0
  %1433 = vmatpush1.msra.mxu0 0.0
  %1434 = vmatprep.subr.mxu0 0.0
  %1435 = vmatpush1.msra.mxu0 0.0
  %1436 = vmatprep.subr.mxu0 0.0
  %1437 = vmatpush1.msra.mxu0 0.0
  %1438 = vmatprep.subr.mxu0 0.0
  %1439 = vmatpush1.msra.mxu0 0.0
  %1440 = vmatprep.subr.mxu0 0.0
  %1441 = vmatpush1.msra.mxu0 0.0
  %1442 = vmatprep.subr.mxu0 0.0
  %1443 = vmatpush1.msra.mxu0 0.0
  %1444 = vmatprep.subr.mxu0 0.0
  %1445 = vmatpush1.msra.mxu0 0.0
  %1446 = vmatprep.subr.mxu0 0.0
  %1447 = vmatpush1.msra.mxu0 0.0
  %1448 = vmatprep.mubr.f32.mxu0 0.0
  %1449 = vmatmul.mubr.f32.gmra.mrb[0].mxu0 %v1306
  %v1450 = vpop.f32.mrb[0].mxu0
  %v1451 = vadd.f32 0.0, %v1450
  %v1452 = vpop.f32.mrb[0].mxu0
  %v1453 = vadd.f32 0.0, %v1452
  %1454 = vdwg.mxu0
  %v1455 = vadd.f32 %v1309, %v1380
  %v1456 = vadd.f32 %v1310, %v1382
  %v1457 = vadd.f32 %v1311, %v1451
  %v1458 = vadd.f32 %v1312, %v1453
  %v1459 = vmul.f32 %v1455, 0.5
  %v1460 = vtanh.pop %v1459
  %v1461 = vmul.f32 %v1460, 0.5
  %v1462 = vadd.f32 %v1461, 0.5
  %v1463 = vmul.f32 %v1456, 0.5
  %v1464 = vtanh.pop %v1463
  %v1465 = vmul.f32 %v1464, 0.5
  %v1466 = vadd.f32 %v1465, 0.5
  %v1467 = vtanh.pop %v1457
  %v1468 = vmul.f32 %v1458, 0.5
  %v1469 = vtanh.pop %v1468
  %v1470 = vmul.f32 %v1469, 0.5
  %v1471 = vadd.f32 %v1470, 0.5
  %v1472 = vmul.f32 %v1466, %v1307
  %v1473 = vmul.f32 %v1462, %v1467
  %v1474 = vadd.f32 %v1472, %v1473
  %v1475 = vtanh.pop %v1474
  %v1476 = vmul.f32 %v1471, %v1475
  %1477 = vst [vmem:[#allocation3] sm:$0xff] %v1474
  %1478 = vst [vmem:[#allocation2] sm:$0xff] %v1476
  %s1479 = scalar_lea.vmem %s7, 24
  %1480 = vst [vmem:[%s1479] sm:$0xff] %v1476
  %v1481 = vld [vmem:[#allocation2] sm:$0xff]
  %v1482 = vld [vmem:[#allocation3] sm:$0xff]
  %s1483 = scalar_lea.vmem [#allocation5], 128
  %v1484 = vld [vmem:[%s1483] sm:$0xff]
  %v1485 = vld [vmem:[%s1483 + $0x8] sm:$0xff]
  %v1486 = vld [vmem:[%s1483 + $0x10] sm:$0xff]
  %v1487 = vld [vmem:[%s1483 + $0x18] sm:$0xff]
  %1488 = vmatprep.subr.mxu0 %v720
  %1489 = vmatpush1.msra.mxu0 %v719
  %1490 = vmatprep.subr.mxu0 %v724
  %1491 = vmatpush1.msra.mxu0 %v723
  %1492 = vmatprep.subr.mxu0 %v728
  %1493 = vmatpush1.msra.mxu0 %v727
  %1494 = vmatprep.subr.mxu0 %v732
  %1495 = vmatpush1.msra.mxu0 %v731
  %1496 = vmatprep.subr.mxu0 %v736
  %1497 = vmatpush1.msra.mxu0 %v735
  %1498 = vmatprep.subr.mxu0 %v740
  %1499 = vmatpush1.msra.mxu0 %v739
  %1500 = vmatprep.subr.mxu0 %v744
  %1501 = vmatpush1.msra.mxu0 %v743
  %1502 = vmatprep.subr.mxu0 %v748
  %1503 = vmatpush1.msra.mxu0 %v747
  %1504 = vmatprep.subr.mxu0 %v752
  %1505 = vmatpush1.msra.mxu0 %v751
  %1506 = vmatprep.subr.mxu0 %v756
  %1507 = vmatpush1.msra.mxu0 %v755
  %1508 = vmatprep.subr.mxu0 %v760
  %1509 = vmatpush1.msra.mxu0 %v759
  %1510 = vmatprep.subr.mxu0 %v764
  %1511 = vmatpush1.msra.mxu0 %v763
  %1512 = vmatprep.subr.mxu0 %v768
  %1513 = vmatpush1.msra.mxu0 %v767
  %1514 = vmatprep.subr.mxu0 %v772
  %1515 = vmatpush1.msra.mxu0 %v771
  %1516 = vmatprep.subr.mxu0 %v776
  %1517 = vmatpush1.msra.mxu0 %v775
  %1518 = vmatprep.subr.mxu0 %v780
  %1519 = vmatpush1.msra.mxu0 %v779
  %1520 = vmatprep.subr.mxu0 0.0
  %1521 = vmatpush1.msra.mxu0 0.0
  %1522 = vmatprep.subr.mxu0 0.0
  %1523 = vmatpush1.msra.mxu0 0.0
  %1524 = vmatprep.subr.mxu0 0.0
  %1525 = vmatpush1.msra.mxu0 0.0
  %1526 = vmatprep.subr.mxu0 0.0
  %1527 = vmatpush1.msra.mxu0 0.0
  %1528 = vmatprep.subr.mxu0 0.0
  %1529 = vmatpush1.msra.mxu0 0.0
  %1530 = vmatprep.subr.mxu0 0.0
  %1531 = vmatpush1.msra.mxu0 0.0
  %1532 = vmatprep.subr.mxu0 0.0
  %1533 = vmatpush1.msra.mxu0 0.0
  %1534 = vmatprep.subr.mxu0 0.0
  %1535 = vmatpush1.msra.mxu0 0.0
  %1536 = vmatprep.subr.mxu0 0.0
  %1537 = vmatpush1.msra.mxu0 0.0
  %1538 = vmatprep.subr.mxu0 0.0
  %1539 = vmatpush1.msra.mxu0 0.0
  %1540 = vmatprep.subr.mxu0 0.0
  %1541 = vmatpush1.msra.mxu0 0.0
  %1542 = vmatprep.subr.mxu0 0.0
  %1543 = vmatpush1.msra.mxu0 0.0
  %1544 = vmatprep.subr.mxu0 0.0
  %1545 = vmatpush1.msra.mxu0 0.0
  %1546 = vmatprep.subr.mxu0 0.0
  %1547 = vmatpush1.msra.mxu0 0.0
  %1548 = vmatprep.subr.mxu0 0.0
  %1549 = vmatpush1.msra.mxu0 0.0
  %1550 = vmatprep.subr.mxu0 0.0
  %1551 = vmatpush1.msra.mxu0 0.0
  %1552 = vmatprep.mubr.f32.mxu0 0.0
  %1553 = vmatmul.mubr.f32.gmra.mrb[0].mxu0 %v1481
  %v1554 = vpop.f32.mrb[0].mxu0
  %v1555 = vadd.f32 0.0, %v1554
  %v1556 = vpop.f32.mrb[0].mxu0
  %v1557 = vadd.f32 0.0, %v1556
  %1558 = vdwg.mxu0
  %1559 = vmatprep.subr.mxu0 %v722
  %1560 = vmatpush1.msra.mxu0 %v721
  %1561 = vmatprep.subr.mxu0 %v726
  %1562 = vmatpush1.msra.mxu0 %v725
  %1563 = vmatprep.subr.mxu0 %v730
  %1564 = vmatpush1.msra.mxu0 %v729
  %1565 = vmatprep.subr.mxu0 %v734
  %1566 = vmatpush1.msra.mxu0 %v733
  %1567 = vmatprep.subr.mxu0 %v738
  %1568 = vmatpush1.msra.mxu0 %v737
  %1569 = vmatprep.subr.mxu0 %v742
  %1570 = vmatpush1.msra.mxu0 %v741
  %1571 = vmatprep.subr.mxu0 %v746
  %1572 = vmatpush1.msra.mxu0 %v745
  %1573 = vmatprep.subr.mxu0 %v750
  %1574 = vmatpush1.msra.mxu0 %v749
  %1575 = vmatprep.subr.mxu0 %v754
  %1576 = vmatpush1.msra.mxu0 %v753
  %1577 = vmatprep.subr.mxu0 %v758
  %1578 = vmatpush1.msra.mxu0 %v757
  %1579 = vmatprep.subr.mxu0 %v762
  %1580 = vmatpush1.msra.mxu0 %v761
  %1581 = vmatprep.subr.mxu0 %v766
  %1582 = vmatpush1.msra.mxu0 %v765
  %1583 = vmatprep.subr.mxu0 %v770
  %1584 = vmatpush1.msra.mxu0 %v769
  %1585 = vmatprep.subr.mxu0 %v774
  %1586 = vmatpush1.msra.mxu0 %v773
  %1587 = vmatprep.subr.mxu0 %v778
  %1588 = vmatpush1.msra.mxu0 %v777
  %1589 = vmatprep.subr.mxu0 %v782
  %1590 = vmatpush1.msra.mxu0 %v781
  %1591 = vmatprep.subr.mxu0 0.0
  %1592 = vmatpush1.msra.mxu0 0.0
  %1593 = vmatprep.subr.mxu0 0.0
  %1594 = vmatpush1.msra.mxu0 0.0
  %1595 = vmatprep.subr.mxu0 0.0
  %1596 = vmatpush1.msra.mxu0 0.0
  %1597 = vmatprep.subr.mxu0 0.0
  %1598 = vmatpush1.msra.mxu0 0.0
  %1599 = vmatprep.subr.mxu0 0.0
  %1600 = vmatpush1.msra.mxu0 0.0
  %1601 = vmatprep.subr.mxu0 0.0
  %1602 = vmatpush1.msra.mxu0 0.0
  %1603 = vmatprep.subr.mxu0 0.0
  %1604 = vmatpush1.msra.mxu0 0.0
  %1605 = vmatprep.subr.mxu0 0.0
  %1606 = vmatpush1.msra.mxu0 0.0
  %1607 = vmatprep.subr.mxu0 0.0
  %1608 = vmatpush1.msra.mxu0 0.0
  %1609 = vmatprep.subr.mxu0 0.0
  %1610 = vmatpush1.msra.mxu0 0.0
  %1611 = vmatprep.subr.mxu0 0.0
  %1612 = vmatpush1.msra.mxu0 0.0
  %1613 = vmatprep.subr.mxu0 0.0
  %1614 = vmatpush1.msra.mxu0 0.0
  %1615 = vmatprep.subr.mxu0 0.0
  %1616 = vmatpush1.msra.mxu0 0.0
  %1617 = vmatprep.subr.mxu0 0.0
  %1618 = vmatpush1.msra.mxu0 0.0
  %1619 = vmatprep.subr.mxu0 0.0
  %1620 = vmatpush1.msra.mxu0 0.0
  %1621 = vmatprep.subr.mxu0 0.0
  %1622 = vmatpush1.msra.mxu0 0.0
  %1623 = vmatprep.mubr.f32.mxu0 0.0
  %1624 = vmatmul.mubr.f32.gmra.mrb[0].mxu0 %v1481
  %v1625 = vpop.f32.mrb[0].mxu0
  %v1626 = vadd.f32 0.0, %v1625
  %v1627 = vpop.f32.mrb[0].mxu0
  %v1628 = vadd.f32 0.0, %v1627
  %1629 = vdwg.mxu0
  %v1630 = vadd.f32 %v1484, %v1555
  %v1631 = vadd.f32 %v1485, %v1557
  %v1632 = vadd.f32 %v1486, %v1626
  %v1633 = vadd.f32 %v1487, %v1628
  %v1634 = vmul.f32 %v1630, 0.5
  %v1635 = vtanh.pop %v1634
  %v1636 = vmul.f32 %v1635, 0.5
  %v1637 = vadd.f32 %v1636, 0.5
  %v1638 = vmul.f32 %v1631, 0.5
  %v1639 = vtanh.pop %v1638
  %v1640 = vmul.f32 %v1639, 0.5
  %v1641 = vadd.f32 %v1640, 0.5
  %v1642 = vtanh.pop %v1632
  %v1643 = vmul.f32 %v1633, 0.5
  %v1644 = vtanh.pop %v1643
  %v1645 = vmul.f32 %v1644, 0.5
  %v1646 = vadd.f32 %v1645, 0.5
  %v1647 = vmul.f32 %v1641, %v1482
  %v1648 = vmul.f32 %v1637, %v1642
  %v1649 = vadd.f32 %v1647, %v1648
  %v1650 = vtanh.pop %v1649
  %v1651 = vmul.f32 %v1646, %v1650
  %1652 = vst [vmem:[#allocation3] sm:$0xff] %v1649
  %1653 = vst [vmem:[#allocation2] sm:$0xff] %v1651
  %s1654 = scalar_lea.vmem %s7, 32
  %1655 = vst [vmem:[%s1654] sm:$0xff] %v1651
  %v1656 = vld [vmem:[#allocation2] sm:$0xff]
  %v1657 = vld [vmem:[#allocation3] sm:$0xff]
  %s1658 = scalar_lea.vmem [#allocation5], 160
  %v1659 = vld [vmem:[%s1658] sm:$0xff]
  %v1660 = vld [vmem:[%s1658 + $0x8] sm:$0xff]
  %v1661 = vld [vmem:[%s1658 + $0x10] sm:$0xff]
  %v1662 = vld [vmem:[%s1658 + $0x18] sm:$0xff]
  %1663 = vmatprep.subr.mxu0 %v720
  %1664 = vmatpush1.msra.mxu0 %v719
  %1665 = vmatprep.subr.mxu0 %v724
  %1666 = vmatpush1.msra.mxu0 %v723
  %1667 = vmatprep.subr.mxu0 %v728
  %1668 = vmatpush1.msra.mxu0 %v727
  %1669 = vmatprep.subr.mxu0 %v732
  %1670 = vmatpush1.msra.mxu0 %v731
  %1671 = vmatprep.subr.mxu0 %v736
  %1672 = vmatpush1.msra.mxu0 %v735
  %1673 = vmatprep.subr.mxu0 %v740
  %1674 = vmatpush1.msra.mxu0 %v739
  %1675 = vmatprep.subr.mxu0 %v744
  %1676 = vmatpush1.msra.mxu0 %v743
  %1677 = vmatprep.subr.mxu0 %v748
  %1678 = vmatpush1.msra.mxu0 %v747
  %1679 = vmatprep.subr.mxu0 %v752
  %1680 = vmatpush1.msra.mxu0 %v751
  %1681 = vmatprep.subr.mxu0 %v756
  %1682 = vmatpush1.msra.mxu0 %v755
  %1683 = vmatprep.subr.mxu0 %v760
  %1684 = vmatpush1.msra.mxu0 %v759
  %1685 = vmatprep.subr.mxu0 %v764
  %1686 = vmatpush1.msra.mxu0 %v763
  %1687 = vmatprep.subr.mxu0 %v768
  %1688 = vmatpush1.msra.mxu0 %v767
  %1689 = vmatprep.subr.mxu0 %v772
  %1690 = vmatpush1.msra.mxu0 %v771
  %1691 = vmatprep.subr.mxu0 %v776
  %1692 = vmatpush1.msra.mxu0 %v775
  %1693 = vmatprep.subr.mxu0 %v780
  %1694 = vmatpush1.msra.mxu0 %v779
  %1695 = vmatprep.subr.mxu0 0.0
  %1696 = vmatpush1.msra.mxu0 0.0
  %1697 = vmatprep.subr.mxu0 0.0
  %1698 = vmatpush1.msra.mxu0 0.0
  %1699 = vmatprep.subr.mxu0 0.0
  %1700 = vmatpush1.msra.mxu0 0.0
  %1701 = vmatprep.subr.mxu0 0.0
  %1702 = vmatpush1.msra.mxu0 0.0
  %1703 = vmatprep.subr.mxu0 0.0
  %1704 = vmatpush1.msra.mxu0 0.0
  %1705 = vmatprep.subr.mxu0 0.0
  %1706 = vmatpush1.msra.mxu0 0.0
  %1707 = vmatprep.subr.mxu0 0.0
  %1708 = vmatpush1.msra.mxu0 0.0
  %1709 = vmatprep.subr.mxu0 0.0
  %1710 = vmatpush1.msra.mxu0 0.0
  %1711 = vmatprep.subr.mxu0 0.0
  %1712 = vmatpush1.msra.mxu0 0.0
  %1713 = vmatprep.subr.mxu0 0.0
  %1714 = vmatpush1.msra.mxu0 0.0
  %1715 = vmatprep.subr.mxu0 0.0
  %1716 = vmatpush1.msra.mxu0 0.0
  %1717 = vmatprep.subr.mxu0 0.0
  %1718 = vmatpush1.msra.mxu0 0.0
  %1719 = vmatprep.subr.mxu0 0.0
  %1720 = vmatpush1.msra.mxu0 0.0
  %1721 = vmatprep.subr.mxu0 0.0
  %1722 = vmatpush1.msra.mxu0 0.0
  %1723 = vmatprep.subr.mxu0 0.0
  %1724 = vmatpush1.msra.mxu0 0.0
  %1725 = vmatprep.subr.mxu0 0.0
  %1726 = vmatpush1.msra.mxu0 0.0
  %1727 = vmatprep.mubr.f32.mxu0 0.0
  %1728 = vmatmul.mubr.f32.gmra.mrb[0].mxu0 %v1656
  %v1729 = vpop.f32.mrb[0].mxu0
  %v1730 = vadd.f32 0.0, %v1729
  %v1731 = vpop.f32.mrb[0].mxu0
  %v1732 = vadd.f32 0.0, %v1731
  %1733 = vdwg.mxu0
  %1734 = vmatprep.subr.mxu0 %v722
  %1735 = vmatpush1.msra.mxu0 %v721
  %1736 = vmatprep.subr.mxu0 %v726
  %1737 = vmatpush1.msra.mxu0 %v725
  %1738 = vmatprep.subr.mxu0 %v730
  %1739 = vmatpush1.msra.mxu0 %v729
  %1740 = vmatprep.subr.mxu0 %v734
  %1741 = vmatpush1.msra.mxu0 %v733
  %1742 = vmatprep.subr.mxu0 %v738
  %1743 = vmatpush1.msra.mxu0 %v737
  %1744 = vmatprep.subr.mxu0 %v742
  %1745 = vmatpush1.msra.mxu0 %v741
  %1746 = vmatprep.subr.mxu0 %v746
  %1747 = vmatpush1.msra.mxu0 %v745
  %1748 = vmatprep.subr.mxu0 %v750
  %1749 = vmatpush1.msra.mxu0 %v749
  %1750 = vmatprep.subr.mxu0 %v754
  %1751 = vmatpush1.msra.mxu0 %v753
  %1752 = vmatprep.subr.mxu0 %v758
  %1753 = vmatpush1.msra.mxu0 %v757
  %1754 = vmatprep.subr.mxu0 %v762
  %1755 = vmatpush1.msra.mxu0 %v761
  %1756 = vmatprep.subr.mxu0 %v766
  %1757 = vmatpush1.msra.mxu0 %v765
  %1758 = vmatprep.subr.mxu0 %v770
  %1759 = vmatpush1.msra.mxu0 %v769
  %1760 = vmatprep.subr.mxu0 %v774
  %1761 = vmatpush1.msra.mxu0 %v773
  %1762 = vmatprep.subr.mxu0 %v778
  %1763 = vmatpush1.msra.mxu0 %v777
  %1764 = vmatprep.subr.mxu0 %v782
  %1765 = vmatpush1.msra.mxu0 %v781
  %1766 = vmatprep.subr.mxu0 0.0
  %1767 = vmatpush1.msra.mxu0 0.0
  %1768 = vmatprep.subr.mxu0 0.0
  %1769 = vmatpush1.msra.mxu0 0.0
  %1770 = vmatprep.subr.mxu0 0.0
  %1771 = vmatpush1.msra.mxu0 0.0
  %1772 = vmatprep.subr.mxu0 0.0
  %1773 = vmatpush1.msra.mxu0 0.0
  %1774 = vmatprep.subr.mxu0 0.0
  %1775 = vmatpush1.msra.mxu0 0.0
  %1776 = vmatprep.subr.mxu0 0.0
  %1777 = vmatpush1.msra.mxu0 0.0
  %1778 = vmatprep.subr.mxu0 0.0
  %1779 = vmatpush1.msra.mxu0 0.0
  %1780 = vmatprep.subr.mxu0 0.0
  %1781 = vmatpush1.msra.mxu0 0.0
  %1782 = vmatprep.subr.mxu0 0.0
  %1783 = vmatpush1.msra.mxu0 0.0
  %1784 = vmatprep.subr.mxu0 0.0
  %1785 = vmatpush1.msra.mxu0 0.0
  %1786 = vmatprep.subr.mxu0 0.0
  %1787 = vmatpush1.msra.mxu0 0.0
  %1788 = vmatprep.subr.mxu0 0.0
  %1789 = vmatpush1.msra.mxu0 0.0
  %1790 = vmatprep.subr.mxu0 0.0
  %1791 = vmatpush1.msra.mxu0 0.0
  %1792 = vmatprep.subr.mxu0 0.0
  %1793 = vmatpush1.msra.mxu0 0.0
  %1794 = vmatprep.subr.mxu0 0.0
  %1795 = vmatpush1.msra.mxu0 0.0
  %1796 = vmatprep.subr.mxu0 0.0
  %1797 = vmatpush1.msra.mxu0 0.0
  %1798 = vmatprep.mubr.f32.mxu0 0.0
  %1799 = vmatmul.mubr.f32.gmra.mrb[0].mxu0 %v1656
  %v1800 = vpop.f32.mrb[0].mxu0
  %v1801 = vadd.f32 0.0, %v1800
  %v1802 = vpop.f32.mrb[0].mxu0
  %v1803 = vadd.f32 0.0, %v1802
  %1804 = vdwg.mxu0
  %v1805 = vadd.f32 %v1659, %v1730
  %v1806 = vadd.f32 %v1660, %v1732
  %v1807 = vadd.f32 %v1661, %v1801
  %v1808 = vadd.f32 %v1662, %v1803
  %v1809 = vmul.f32 %v1805, 0.5
  %v1810 = vtanh.pop %v1809
  %v1811 = vmul.f32 %v1810, 0.5
  %v1812 = vadd.f32 %v1811, 0.5
  %v1813 = vmul.f32 %v1806, 0.5
  %v1814 = vtanh.pop %v1813
  %v1815 = vmul.f32 %v1814, 0.5
  %v1816 = vadd.f32 %v1815, 0.5
  %v1817 = vtanh.pop %v1807
  %v1818 = vmul.f32 %v1808, 0.5
  %v1819 = vtanh.pop %v1818
  %v1820 = vmul.f32 %v1819, 0.5
  %v1821 = vadd.f32 %v1820, 0.5
  %v1822 = vmul.f32 %v1816, %v1657
  %v1823 = vmul.f32 %v1812, %v1817
  %v1824 = vadd.f32 %v1822, %v1823
  %v1825 = vtanh.pop %v1824
  %v1826 = vmul.f32 %v1821, %v1825
  %1827 = vst [vmem:[#allocation3] sm:$0xff] %v1824
  %1828 = vst [vmem:[#allocation2] sm:$0xff] %v1826
  %s1829 = scalar_lea.vmem %s7, 40
  %1830 = vst [vmem:[%s1829] sm:$0xff] %v1826
  %v1831 = vld [vmem:[#allocation2] sm:$0xff]
  %v1832 = vld [vmem:[#allocation3] sm:$0xff]
  %s1833 = scalar_lea.vmem [#allocation5], 192
  %v1834 = vld [vmem:[%s1833] sm:$0xff]
  %v1835 = vld [vmem:[%s1833 + $0x8] sm:$0xff]
  %v1836 = vld [vmem:[%s1833 + $0x10] sm:$0xff]
  %v1837 = vld [vmem:[%s1833 + $0x18] sm:$0xff]
  %1838 = vmatprep.subr.mxu0 %v720
  %1839 = vmatpush1.msra.mxu0 %v719
  %1840 = vmatprep.subr.mxu0 %v724
  %1841 = vmatpush1.msra.mxu0 %v723
  %1842 = vmatprep.subr.mxu0 %v728
  %1843 = vmatpush1.msra.mxu0 %v727
  %1844 = vmatprep.subr.mxu0 %v732
  %1845 = vmatpush1.msra.mxu0 %v731
  %1846 = vmatprep.subr.mxu0 %v736
  %1847 = vmatpush1.msra.mxu0 %v735
  %1848 = vmatprep.subr.mxu0 %v740
  %1849 = vmatpush1.msra.mxu0 %v739
  %1850 = vmatprep.subr.mxu0 %v744
  %1851 = vmatpush1.msra.mxu0 %v743
  %1852 = vmatprep.subr.mxu0 %v748
  %1853 = vmatpush1.msra.mxu0 %v747
  %1854 = vmatprep.subr.mxu0 %v752
  %1855 = vmatpush1.msra.mxu0 %v751
  %1856 = vmatprep.subr.mxu0 %v756
  %1857 = vmatpush1.msra.mxu0 %v755
  %1858 = vmatprep.subr.mxu0 %v760
  %1859 = vmatpush1.msra.mxu0 %v759
  %1860 = vmatprep.subr.mxu0 %v764
  %1861 = vmatpush1.msra.mxu0 %v763
  %1862 = vmatprep.subr.mxu0 %v768
  %1863 = vmatpush1.msra.mxu0 %v767
  %1864 = vmatprep.subr.mxu0 %v772
  %1865 = vmatpush1.msra.mxu0 %v771
  %1866 = vmatprep.subr.mxu0 %v776
  %1867 = vmatpush1.msra.mxu0 %v775
  %1868 = vmatprep.subr.mxu0 %v780
  %1869 = vmatpush1.msra.mxu0 %v779
  %1870 = vmatprep.subr.mxu0 0.0
  %1871 = vmatpush1.msra.mxu0 0.0
  %1872 = vmatprep.subr.mxu0 0.0
  %1873 = vmatpush1.msra.mxu0 0.0
  %1874 = vmatprep.subr.mxu0 0.0
  %1875 = vmatpush1.msra.mxu0 0.0
  %1876 = vmatprep.subr.mxu0 0.0
  %1877 = vmatpush1.msra.mxu0 0.0
  %1878 = vmatprep.subr.mxu0 0.0
  %1879 = vmatpush1.msra.mxu0 0.0
  %1880 = vmatprep.subr.mxu0 0.0
  %1881 = vmatpush1.msra.mxu0 0.0
  %1882 = vmatprep.subr.mxu0 0.0
  %1883 = vmatpush1.msra.mxu0 0.0
  %1884 = vmatprep.subr.mxu0 0.0
  %1885 = vmatpush1.msra.mxu0 0.0
  %1886 = vmatprep.subr.mxu0 0.0
  %1887 = vmatpush1.msra.mxu0 0.0
  %1888 = vmatprep.subr.mxu0 0.0
  %1889 = vmatpush1.msra.mxu0 0.0
  %1890 = vmatprep.subr.mxu0 0.0
  %1891 = vmatpush1.msra.mxu0 0.0
  %1892 = vmatprep.subr.mxu0 0.0
  %1893 = vmatpush1.msra.mxu0 0.0
  %1894 = vmatprep.subr.mxu0 0.0
  %1895 = vmatpush1.msra.mxu0 0.0
  %1896 = vmatprep.subr.mxu0 0.0
  %1897 = vmatpush1.msra.mxu0 0.0
  %1898 = vmatprep.subr.mxu0 0.0
  %1899 = vmatpush1.msra.mxu0 0.0
  %1900 = vmatprep.subr.mxu0 0.0
  %1901 = vmatpush1.msra.mxu0 0.0
  %1902 = vmatprep.mubr.f32.mxu0 0.0
  %1903 = vmatmul.mubr.f32.gmra.mrb[0].mxu0 %v1831
  %v1904 = vpop.f32.mrb[0].mxu0
  %v1905 = vadd.f32 0.0, %v1904
  %v1906 = vpop.f32.mrb[0].mxu0
  %v1907 = vadd.f32 0.0, %v1906
  %1908 = vdwg.mxu0
  %1909 = vmatprep.subr.mxu0 %v722
  %1910 = vmatpush1.msra.mxu0 %v721
  %1911 = vmatprep.subr.mxu0 %v726
  %1912 = vmatpush1.msra.mxu0 %v725
  %1913 = vmatprep.subr.mxu0 %v730
  %1914 = vmatpush1.msra.mxu0 %v729
  %1915 = vmatprep.subr.mxu0 %v734
  %1916 = vmatpush1.msra.mxu0 %v733
  %1917 = vmatprep.subr.mxu0 %v738
  %1918 = vmatpush1.msra.mxu0 %v737
  %1919 = vmatprep.subr.mxu0 %v742
  %1920 = vmatpush1.msra.mxu0 %v741
  %1921 = vmatprep.subr.mxu0 %v746
  %1922 = vmatpush1.msra.mxu0 %v745
  %1923 = vmatprep.subr.mxu0 %v750
  %1924 = vmatpush1.msra.mxu0 %v749
  %1925 = vmatprep.subr.mxu0 %v754
  %1926 = vmatpush1.msra.mxu0 %v753
  %1927 = vmatprep.subr.mxu0 %v758
  %1928 = vmatpush1.msra.mxu0 %v757
  %1929 = vmatprep.subr.mxu0 %v762
  %1930 = vmatpush1.msra.mxu0 %v761
  %1931 = vmatprep.subr.mxu0 %v766
  %1932 = vmatpush1.msra.mxu0 %v765
  %1933 = vmatprep.subr.mxu0 %v770
  %1934 = vmatpush1.msra.mxu0 %v769
  %1935 = vmatprep.subr.mxu0 %v774
  %1936 = vmatpush1.msra.mxu0 %v773
  %1937 = vmatprep.subr.mxu0 %v778
  %1938 = vmatpush1.msra.mxu0 %v777
  %1939 = vmatprep.subr.mxu0 %v782
  %1940 = vmatpush1.msra.mxu0 %v781
  %1941 = vmatprep.subr.mxu0 0.0
  %1942 = vmatpush1.msra.mxu0 0.0
  %1943 = vmatprep.subr.mxu0 0.0
  %1944 = vmatpush1.msra.mxu0 0.0
  %1945 = vmatprep.subr.mxu0 0.0
  %1946 = vmatpush1.msra.mxu0 0.0
  %1947 = vmatprep.subr.mxu0 0.0
  %1948 = vmatpush1.msra.mxu0 0.0
  %1949 = vmatprep.subr.mxu0 0.0
  %1950 = vmatpush1.msra.mxu0 0.0
  %1951 = vmatprep.subr.mxu0 0.0
  %1952 = vmatpush1.msra.mxu0 0.0
  %1953 = vmatprep.subr.mxu0 0.0
  %1954 = vmatpush1.msra.mxu0 0.0
  %1955 = vmatprep.subr.mxu0 0.0
  %1956 = vmatpush1.msra.mxu0 0.0
  %1957 = vmatprep.subr.mxu0 0.0
  %1958 = vmatpush1.msra.mxu0 0.0
  %1959 = vmatprep.subr.mxu0 0.0
  %1960 = vmatpush1.msra.mxu0 0.0
  %1961 = vmatprep.subr.mxu0 0.0
  %1962 = vmatpush1.msra.mxu0 0.0
  %1963 = vmatprep.subr.mxu0 0.0
  %1964 = vmatpush1.msra.mxu0 0.0
  %1965 = vmatprep.subr.mxu0 0.0
  %1966 = vmatpush1.msra.mxu0 0.0
  %1967 = vmatprep.subr.mxu0 0.0
  %1968 = vmatpush1.msra.mxu0 0.0
  %1969 = vmatprep.subr.mxu0 0.0
  %1970 = vmatpush1.msra.mxu0 0.0
  %1971 = vmatprep.subr.mxu0 0.0
  %1972 = vmatpush1.msra.mxu0 0.0
  %1973 = vmatprep.mubr.f32.mxu0 0.0
  %1974 = vmatmul.mubr.f32.gmra.mrb[0].mxu0 %v1831
  %v1975 = vpop.f32.mrb[0].mxu0
  %v1976 = vadd.f32 0.0, %v1975
  %v1977 = vpop.f32.mrb[0].mxu0
  %v1978 = vadd.f32 0.0, %v1977
  %1979 = vdwg.mxu0
  %v1980 = vadd.f32 %v1834, %v1905
  %v1981 = vadd.f32 %v1835, %v1907
  %v1982 = vadd.f32 %v1836, %v1976
  %v1983 = vadd.f32 %v1837, %v1978
  %v1984 = vmul.f32 %v1980, 0.5
  %v1985 = vtanh.pop %v1984
  %v1986 = vmul.f32 %v1985, 0.5
  %v1987 = vadd.f32 %v1986, 0.5
  %v1988 = vmul.f32 %v1981, 0.5
  %v1989 = vtanh.pop %v1988
  %v1990 = vmul.f32 %v1989, 0.5
  %v1991 = vadd.f32 %v1990, 0.5
  %v1992 = vtanh.pop %v1982
  %v1993 = vmul.f32 %v1983, 0.5
  %v1994 = vtanh.pop %v1993
  %v1995 = vmul.f32 %v1994, 0.5
  %v1996 = vadd.f32 %v1995, 0.5
  %v1997 = vmul.f32 %v1991, %v1832
  %v1998 = vmul.f32 %v1987, %v1992
  %v1999 = vadd.f32 %v1997, %v1998
  %v2000 = vtanh.pop %v1999
  %v2001 = vmul.f32 %v1996, %v2000
  %2002 = vst [vmem:[#allocation3] sm:$0xff] %v1999
  %2003 = vst [vmem:[#allocation2] sm:$0xff] %v2001
  %s2004 = scalar_lea.vmem %s7, 48
  %2005 = vst [vmem:[%s2004] sm:$0xff] %v2001
  %v2006 = vld [vmem:[#allocation2] sm:$0xff]
  %v2007 = vld [vmem:[#allocation3] sm:$0xff]
  %s2008 = scalar_lea.vmem [#allocation5], 224
  %v2009 = vld [vmem:[%s2008] sm:$0xff]
  %v2010 = vld [vmem:[%s2008 + $0x8] sm:$0xff]
  %v2011 = vld [vmem:[%s2008 + $0x10] sm:$0xff]
  %v2012 = vld [vmem:[%s2008 + $0x18] sm:$0xff]
  %2013 = vmatprep.subr.mxu0 %v720
  %2014 = vmatpush1.msra.mxu0 %v719
  %2015 = vmatprep.subr.mxu0 %v724
  %2016 = vmatpush1.msra.mxu0 %v723
  %2017 = vmatprep.subr.mxu0 %v728
  %2018 = vmatpush1.msra.mxu0 %v727
  %2019 = vmatprep.subr.mxu0 %v732
  %2020 = vmatpush1.msra.mxu0 %v731
  %2021 = vmatprep.subr.mxu0 %v736
  %2022 = vmatpush1.msra.mxu0 %v735
  %2023 = vmatprep.subr.mxu0 %v740
  %2024 = vmatpush1.msra.mxu0 %v739
  %2025 = vmatprep.subr.mxu0 %v744
  %2026 = vmatpush1.msra.mxu0 %v743
  %2027 = vmatprep.subr.mxu0 %v748
  %2028 = vmatpush1.msra.mxu0 %v747
  %2029 = vmatprep.subr.mxu0 %v752
  %2030 = vmatpush1.msra.mxu0 %v751
  %2031 = vmatprep.subr.mxu0 %v756
  %2032 = vmatpush1.msra.mxu0 %v755
  %2033 = vmatprep.subr.mxu0 %v760
  %2034 = vmatpush1.msra.mxu0 %v759
  %2035 = vmatprep.subr.mxu0 %v764
  %2036 = vmatpush1.msra.mxu0 %v763
  %2037 = vmatprep.subr.mxu0 %v768
  %2038 = vmatpush1.msra.mxu0 %v767
  %2039 = vmatprep.subr.mxu0 %v772
  %2040 = vmatpush1.msra.mxu0 %v771
  %2041 = vmatprep.subr.mxu0 %v776
  %2042 = vmatpush1.msra.mxu0 %v775
  %2043 = vmatprep.subr.mxu0 %v780
  %2044 = vmatpush1.msra.mxu0 %v779
  %2045 = vmatprep.subr.mxu0 0.0
  %2046 = vmatpush1.msra.mxu0 0.0
  %2047 = vmatprep.subr.mxu0 0.0
  %2048 = vmatpush1.msra.mxu0 0.0
  %2049 = vmatprep.subr.mxu0 0.0
  %2050 = vmatpush1.msra.mxu0 0.0
  %2051 = vmatprep.subr.mxu0 0.0
  %2052 = vmatpush1.msra.mxu0 0.0
  %2053 = vmatprep.subr.mxu0 0.0
  %2054 = vmatpush1.msra.mxu0 0.0
  %2055 = vmatprep.subr.mxu0 0.0
  %2056 = vmatpush1.msra.mxu0 0.0
  %2057 = vmatprep.subr.mxu0 0.0
  %2058 = vmatpush1.msra.mxu0 0.0
  %2059 = vmatprep.subr.mxu0 0.0
  %2060 = vmatpush1.msra.mxu0 0.0
  %2061 = vmatprep.subr.mxu0 0.0
  %2062 = vmatpush1.msra.mxu0 0.0
  %2063 = vmatprep.subr.mxu0 0.0
  %2064 = vmatpush1.msra.mxu0 0.0
  %2065 = vmatprep.subr.mxu0 0.0
  %2066 = vmatpush1.msra.mxu0 0.0
  %2067 = vmatprep.subr.mxu0 0.0
  %2068 = vmatpush1.msra.mxu0 0.0
  %2069 = vmatprep.subr.mxu0 0.0
  %2070 = vmatpush1.msra.mxu0 0.0
  %2071 = vmatprep.subr.mxu0 0.0
  %2072 = vmatpush1.msra.mxu0 0.0
  %2073 = vmatprep.subr.mxu0 0.0
  %2074 = vmatpush1.msra.mxu0 0.0
  %2075 = vmatprep.subr.mxu0 0.0
  %2076 = vmatpush1.msra.mxu0 0.0
  %2077 = vmatprep.mubr.f32.mxu0 0.0
  %2078 = vmatmul.mubr.f32.gmra.mrb[0].mxu0 %v2006
  %v2079 = vpop.f32.mrb[0].mxu0
  %v2080 = vadd.f32 0.0, %v2079
  %v2081 = vpop.f32.mrb[0].mxu0
  %v2082 = vadd.f32 0.0, %v2081
  %2083 = vdwg.mxu0
  %2084 = vmatprep.subr.mxu0 %v722
  %2085 = vmatpush1.msra.mxu0 %v721
  %2086 = vmatprep.subr.mxu0 %v726
  %2087 = vmatpush1.msra.mxu0 %v725
  %2088 = vmatprep.subr.mxu0 %v730
  %2089 = vmatpush1.msra.mxu0 %v729
  %2090 = vmatprep.subr.mxu0 %v734
  %2091 = vmatpush1.msra.mxu0 %v733
  %2092 = vmatprep.subr.mxu0 %v738
  %2093 = vmatpush1.msra.mxu0 %v737
  %2094 = vmatprep.subr.mxu0 %v742
  %2095 = vmatpush1.msra.mxu0 %v741
  %2096 = vmatprep.subr.mxu0 %v746
  %2097 = vmatpush1.msra.mxu0 %v745
  %2098 = vmatprep.subr.mxu0 %v750
  %2099 = vmatpush1.msra.mxu0 %v749
  %2100 = vmatprep.subr.mxu0 %v754
  %2101 = vmatpush1.msra.mxu0 %v753
  %2102 = vmatprep.subr.mxu0 %v758
  %2103 = vmatpush1.msra.mxu0 %v757
  %2104 = vmatprep.subr.mxu0 %v762
  %2105 = vmatpush1.msra.mxu0 %v761
  %2106 = vmatprep.subr.mxu0 %v766
  %2107 = vmatpush1.msra.mxu0 %v765
  %2108 = vmatprep.subr.mxu0 %v770
  %2109 = vmatpush1.msra.mxu0 %v769
  %2110 = vmatprep.subr.mxu0 %v774
  %2111 = vmatpush1.msra.mxu0 %v773
  %2112 = vmatprep.subr.mxu0 %v778
  %2113 = vmatpush1.msra.mxu0 %v777
  %2114 = vmatprep.subr.mxu0 %v782
  %2115 = vmatpush1.msra.mxu0 %v781
  %2116 = vmatprep.subr.mxu0 0.0
  %2117 = vmatpush1.msra.mxu0 0.0
  %2118 = vmatprep.subr.mxu0 0.0
  %2119 = vmatpush1.msra.mxu0 0.0
  %2120 = vmatprep.subr.mxu0 0.0
  %2121 = vmatpush1.msra.mxu0 0.0
  %2122 = vmatprep.subr.mxu0 0.0
  %2123 = vmatpush1.msra.mxu0 0.0
  %2124 = vmatprep.subr.mxu0 0.0
  %2125 = vmatpush1.msra.mxu0 0.0
  %2126 = vmatprep.subr.mxu0 0.0
  %2127 = vmatpush1.msra.mxu0 0.0
  %2128 = vmatprep.subr.mxu0 0.0
  %2129 = vmatpush1.msra.mxu0 0.0
  %2130 = vmatprep.subr.mxu0 0.0
  %2131 = vmatpush1.msra.mxu0 0.0
  %2132 = vmatprep.subr.mxu0 0.0
  %2133 = vmatpush1.msra.mxu0 0.0
  %2134 = vmatprep.subr.mxu0 0.0
  %2135 = vmatpush1.msra.mxu0 0.0
  %2136 = vmatprep.subr.mxu0 0.0
  %2137 = vmatpush1.msra.mxu0 0.0
  %2138 = vmatprep.subr.mxu0 0.0
  %2139 = vmatpush1.msra.mxu0 0.0
  %2140 = vmatprep.subr.mxu0 0.0
  %2141 = vmatpush1.msra.mxu0 0.0
  %2142 = vmatprep.subr.mxu0 0.0
  %2143 = vmatpush1.msra.mxu0 0.0
  %2144 = vmatprep.subr.mxu0 0.0
  %2145 = vmatpush1.msra.mxu0 0.0
  %2146 = vmatprep.subr.mxu0 0.0
  %2147 = vmatpush1.msra.mxu0 0.0
  %2148 = vmatprep.mubr.f32.mxu0 0.0
  %2149 = vmatmul.mubr.f32.gmra.mrb[0].mxu0 %v2006
  %v2150 = vpop.f32.mrb[0].mxu0
  %v2151 = vadd.f32 0.0, %v2150
  %v2152 = vpop.f32.mrb[0].mxu0
  %v2153 = vadd.f32 0.0, %v2152
  %2154 = vdwg.mxu0
  %v2155 = vadd.f32 %v2009, %v2080
  %v2156 = vadd.f32 %v2010, %v2082
  %v2157 = vadd.f32 %v2011, %v2151
  %v2158 = vadd.f32 %v2012, %v2153
  %v2159 = vmul.f32 %v2155, 0.5
  %v2160 = vtanh.pop %v2159
  %v2161 = vmul.f32 %v2160, 0.5
  %v2162 = vadd.f32 %v2161, 0.5
  %v2163 = vmul.f32 %v2156, 0.5
  %v2164 = vtanh.pop %v2163
  %v2165 = vmul.f32 %v2164, 0.5
  %v2166 = vadd.f32 %v2165, 0.5
  %v2167 = vtanh.pop %v2157
  %v2168 = vmul.f32 %v2158, 0.5
  %v2169 = vtanh.pop %v2168
  %v2170 = vmul.f32 %v2169, 0.5
  %v2171 = vadd.f32 %v2170, 0.5
  %v2172 = vmul.f32 %v2166, %v2007
  %v2173 = vmul.f32 %v2162, %v2167
  %v2174 = vadd.f32 %v2172, %v2173
  %v2175 = vtanh.pop %v2174
  %v2176 = vmul.f32 %v2171, %v2175
  %2177 = vst [vmem:[#allocation3] sm:$0xff] %v2174
  %2178 = vst [vmem:[#allocation2] sm:$0xff] %v2176
  %s2179 = scalar_lea.vmem %s7, 56
  %2180 = vst [vmem:[%s2179] sm:$0xff] %v2176
  // Predicated region
  $region34: #{vae_decoder_forward.2} parent=0 // pred_check
    _
  $region35: #{vae_decoder_forward.2} parent=0 // pred_check_branch
    %2182 = sbr.rel (0) target = $region37
  $region36: #{vae_decoder_forward.2} parent=0 // pred_region
    _
  $region37: #{vae_decoder_forward.2} parent=0 // pred_fallthru
    _
  // Predicated region
  $region38: #{vae_decoder_forward.2} parent=0 // pred_check
    _
  $region39: #{vae_decoder_forward.2} parent=0 // pred_check_branch
    %2184 = sbr.rel (0) target = $region41
  $region40: #{vae_decoder_forward.2} parent=0 // pred_region
    _
  $region41: #{vae_decoder_forward.2} parent=0 // pred_fallthru
    _

</llo_original>
